<compile_context>
chip_gen: v7x
topology: tpu7x:2x2x1
jax: 0.10.0
libtpu: 0.0.40
codegen_flags: <defaults>
</compile_context>

<pallas_src>
import functools

import numpy as np

import jax
import jax.numpy as jnp
from jax.experimental import pallas as pl
from jax.experimental.pallas import tpu as pltpu


# ------------------------------ fused kernel --------------------------------

def _upconv_kernel(x_ref, cmask_ref, w1_ref, b1_ref, w2_ref, b2_ref,
                   wt_ref, bt_ref, o_ref, h1_scr, *, TR, Wp, Cin, C, R):
    """One (image, row-tile) step of conv3x3+ReLU -> conv3x3+ReLU -> deconv2x2.

    Flat layout: every activation is (pixels, channels) where pixels enumerate a
    (rows, Wp) grid row-major.  A 3x3 tap then is a contiguous row-slice at
    offset kh*Wp + (kw-1); column/row zero-padding is enforced with a mask /
    conditional zero rows so the wrap-around pixels only land in don't-care
    columns that the wrapper drops.
    """
    M1 = (TR + 2) * Wp      # conv1 rows kept (1-row halo each side for conv2)
    M2 = TR * Wp            # conv2 / deconv rows (the tile's real output rows)
    BASE = Wp               # flat offset of real data inside padded buffers

    r = pl.program_id(0) % R          # row-tile index within the image

    x = x_ref[0]                      # ((TR+6)*Wp, Cin)
    w1 = w1_ref[...]                  # (9*Cin, C)
    w2 = w2_ref[...]                  # (9*C,  C)
    wt = wt_ref[...]                  # (C,  4*C)
    b1 = b1_ref[...]                  # (1, C)
    b2 = b2_ref[...]                  # (1, C)
    bt = bt_ref[...]                  # (1, 4*C)
    cmask = cmask_ref[...]            # (M1, 1) column-validity mask (0/1)

    # ---------------- conv1 (3x3, pad 1) + bias + ReLU -----------------------
    acc1 = None
    for kh in range(3):
        for kw in range(3):
            start = BASE + kh * Wp + (kw - 1)
            xs = x[start:start + M1, :]                                # (M1, Cin)
            wtap = w1[(kh * 3 + kw) * Cin:(kh * 3 + kw + 1) * Cin, :]  # (Cin, C)
            if Cin <= 4:
                # Tiny Cin (default Cin=1): VPU broadcast-FMA instead of a
                # degenerate K=Cin matmul on the MXU.
                for ci in range(Cin):
                    term = xs[:, ci:ci + 1] * wtap[ci:ci + 1, :]
                    acc1 = term if acc1 is None else acc1 + term
            else:
                term = jnp.dot(xs, wtap, preferred_element_type=jnp.float32)
                acc1 = term if acc1 is None else acc1 + term
    h1 = jnp.maximum(acc1 + b1, 0.0) * cmask     # zero conv2's column padding

    # Stash conv1 activations (+ zero slack rows) in VMEM scratch so conv2 can
    # read its 9 shifted, contiguous row-slices from it.
    zrow = jnp.zeros((Wp, C), jnp.float32)
    h1_scr[pl.ds(0, Wp), :] = zrow
    h1_scr[pl.ds((TR + 3) * Wp, Wp), :] = zrow
    h1_scr[pl.ds(Wp, M1), :] = h1

    # conv2's zero row-padding at the image's first / last row tile.
    @pl.when(r == 0)
    def _():
        h1_scr[pl.ds(Wp, Wp), :] = zrow

    @pl.when(r == R - 1)
    def _():
        h1_scr[pl.ds(Wp + (TR + 1) * Wp, Wp), :] = zrow

    # ---------------- conv2 (3x3, pad 1) + bias + ReLU ------------------------
    acc2 = None
    for kh in range(3):
        for kw in range(3):
            start = Wp + kh * Wp + (kw - 1)
            hs = h1_scr[pl.ds(start, M2), :]                           # (M2, C)
            wtap = w2[(kh * 3 + kw) * C:(kh * 3 + kw + 1) * C, :]      # (C, C)
            term = jnp.dot(hs, wtap, preferred_element_type=jnp.float32)
            acc2 = term if acc2 is None else acc2 + term
    h2 = jnp.maximum(acc2 + b2, 0.0)                                   # (M2, C)

    # -------- ConvTranspose2d(k=2, s=2): per-pixel (C -> 4*C) matmul ----------
    # Packed so the stored minor dim is 4*C (= 128 for C=32): lane-dense store.
    y = jnp.dot(h2, wt, preferred_element_type=jnp.float32) + bt       # (M2, 4C)
    o_ref[0] = y.astype(o_ref.dtype)


# ------------------------------ wrapper --------------------------------------

def _pick_row_tile(H, W):
    """Largest divisor of H that keeps a row tile modest (VMEM-friendly)."""
    cap = max(8, H // 8)
    while cap > 1 and cap * (W + 8) > 16384:
        cap -= 1
    tr = 1
    for t in range(1, H + 1):
        if H % t == 0 and t <= cap:
            tr = t
    return tr


def upconv_forward(x_nchw, params):
    """Matches UpConv.forward (n_filters_per_depth=2 default). Input/output NCHW."""
    N, Cin, H, W = x_nchw.shape
    C = params["w1"].shape[0]                # out_channels
    TR = _pick_row_tile(H, W)                # output rows per tile
    R = H // TR                              # row tiles per image
    Wp = ((W + 4 + 7) // 8) * 8              # padded width (sublane-aligned)
    M1 = (TR + 2) * Wp
    M2 = TR * Wp
    L0 = (TR + 6) * Wp

    # -------- host-side layout prep (pure JAX glue, tiny tensors) ------------
    x_nhwc = jnp.transpose(x_nchw, (0, 2, 3, 1)).astype(jnp.float32)
    xp = jnp.pad(x_nhwc, ((0, 0), (2, 2), (2, Wp - W - 2), (0, 0)))  # (N,H+4,Wp,Cin)
    tiles = jnp.stack([xp[:, r * TR:r * TR + TR + 4] for r in range(R)], axis=1)
    x_flat = tiles.reshape(N, R, (TR + 4) * Wp, Cin)
    x_flat = jnp.pad(x_flat, ((0, 0), (0, 0), (Wp, Wp), (0, 0)))     # flat slack rows
    x_flat = x_flat.reshape(N * R, L0, Cin)

    col = np.arange(M1) % Wp
    cmask = jnp.asarray(((col >= 2) & (col < W + 2)).astype(np.float32).reshape(M1, 1))

    # Weights in matmul layout (same orderings as the validated reference math).
    w1m = jnp.transpose(params["w1"], (2, 3, 1, 0)).reshape(9 * Cin, C)
    w2m = jnp.transpose(params["w2"], (2, 3, 1, 0)).reshape(9 * C, C)
    wtm = jnp.transpose(params["wt"], (0, 2, 3, 1)).reshape(C, 4 * C)
    b1m = params["b1"].reshape(1, C).astype(jnp.float32)
    b2m = params["b2"].reshape(1, C).astype(jnp.float32)
    btm = jnp.tile(params["bt"], 4).reshape(1, 4 * C).astype(jnp.float32)

    kernel = functools.partial(_upconv_kernel, TR=TR, Wp=Wp, Cin=Cin, C=C, R=R)

    out = pl.pallas_call(
        kernel,
        out_shape=jax.ShapeDtypeStruct((N * R, M2, 4 * C), jnp.float32),
        grid=(N * R,),
        in_specs=[
            pl.BlockSpec((1, L0, Cin), lambda i: (i, 0, 0)),    # per-tile input patch
            pl.BlockSpec((M1, 1), lambda i: (0, 0)),            # column mask (resident)
            pl.BlockSpec((9 * Cin, C), lambda i: (0, 0)),       # w1
            pl.BlockSpec((1, C), lambda i: (0, 0)),             # b1
            pl.BlockSpec((9 * C, C), lambda i: (0, 0)),         # w2
            pl.BlockSpec((1, C), lambda i: (0, 0)),             # b2
            pl.BlockSpec((C, 4 * C), lambda i: (0, 0)),         # wt (deconv)
            pl.BlockSpec((1, 4 * C), lambda i: (0, 0)),         # bt (deconv)
        ],
        out_specs=pl.BlockSpec((1, M2, 4 * C), lambda i: (i, 0, 0)),
        scratch_shapes=[pltpu.VMEM(((TR + 4) * Wp, C), jnp.float32)],
        compiler_params=pltpu.CompilerParams(
            dimension_semantics=("parallel",),
            vmem_limit_bytes=32 * 1024 * 1024),
    )(x_flat, cmask, w1m, b1m, w2m, b2m, wtm, btm)

    # -------- unpack: (N*R, TR*Wp, 4C) -> (N, C, 2H, 2W) ----------------------
    y = out.reshape(N, R, TR, Wp, 2, 2, C)[:, :, :, 2:W + 2]   # drop padded cols
    y = jnp.transpose(y, (0, 1, 2, 4, 3, 5, 6)).reshape(N, 2 * H, 2 * W, C)
    return jnp.transpose(y, (0, 3, 1, 2))


upconv_forward_jit = jax.jit(upconv_forward)


# --------------------------- pure-JAX reference -------------------------------

def upconv_reference(x, params):
    def conv(x, w, b):
        y = jax.lax.conv_general_dilated(
            x, w, window_strides=(1, 1), padding=((1, 1), (1, 1)),
            dimension_numbers=("NCHW", "OIHW", "NCHW"))
        return jax.nn.relu(y + b[None, :, None, None])

    x = conv(x, params["w1"], params["b1"])
    x = conv(x, params["w2"], params["b2"])
    wt, bt = params["wt"], params["bt"]
    N, C, H, W = x.shape
    Cout = wt.shape[1]
    # PyTorch ConvTranspose2d(k=2, s=2): out[n,o,2h+k,2w+l] = sum_c x[n,c,h,w]*wt[c,o,k,l]
    y = jnp.einsum("nchw,cokl->nohkwl", x, wt).reshape(N, Cout, 2 * H, 2 * W)
    return y + bt[None, :, None, None]


# ----------------------------------- main -------------------------------------

if __name__ == "__main__":
    # UpConv defaults: in_channels=1, out_channels=32, kernel_size=3, padding=1
    N, Cin, H, W = 2, 1, 16, 16
    Cout = 32

    key = jax.random.PRNGKey(0)
    k1, k2, k3, k4, k5, k6, k7 = jax.random.split(key, 7)
    params = {
        "w1": jax.random.normal(k1, (Cout, Cin, 3, 3), jnp.float32) * 0.1,
        "b1": jax.random.normal(k2, (Cout,), jnp.float32) * 0.1,
        "w2": jax.random.normal(k3, (Cout, Cout, 3, 3), jnp.float32) * 0.1,
        "b2": jax.random.normal(k4, (Cout,), jnp.float32) * 0.1,
        "wt": jax.random.normal(k5, (Cout, Cout, 2, 2), jnp.float32) * 0.1,  # (Cin,Cout,kH,kW)
        "bt": jax.random.normal(k6, (Cout,), jnp.float32) * 0.1,
    }
    x = jax.random.normal(k7, (N, Cin, H, W), jnp.float32)

    out = jax.block_until_ready(upconv_forward_jit(x, params))
    ref = jax.block_until_ready(upconv_reference(x, params))

    assert out.shape == (N, Cout, 2 * H, 2 * W), out.shape
    err = float(jnp.max(jnp.abs(out - ref)))
    assert jnp.allclose(out, ref, atol=1e-3, rtol=1e-3), err

    print("KERNEL_OK")
</pallas_src>

<mosaic_0001>
module attributes {stable_mosaic.version = 11 : i64} {
  func.func @_upconv_kernel(%arg0: i32, %arg1: memref<1x336x1xf32, #tpu.memory_space<vmem>>, %arg2: memref<240x1xf32, #tpu.memory_space<vmem>>, %arg3: memref<9x32xf32, #tpu.memory_space<vmem>>, %arg4: memref<1x32xf32, #tpu.memory_space<vmem>>, %arg5: memref<288x32xf32, #tpu.memory_space<vmem>>, %arg6: memref<1x32xf32, #tpu.memory_space<vmem>>, %arg7: memref<32x128xf32, #tpu.memory_space<vmem>>, %arg8: memref<1x128xf32, #tpu.memory_space<vmem>>, %arg9: memref<1x192x128xf32, #tpu.memory_space<vmem>>, %arg10: memref<288x32xf32, #tpu.memory_space<vmem>>) attributes {dimension_semantics = [#tpu.dimension_semantics<parallel>], iteration_bounds = array<i64: 4>, scalar_prefetch = 0 : i64, scratch_operands = 1 : i64, tpu.core_type = #tpu.core_type<tc>, window_params = [{transform_indices = @transform_0, window_bounds = array<i64: 1, 336, 1>}, {pipeline_mode = #tpu.pipeline_mode<synchronous>, transform_indices = @transform_1, window_bounds = array<i64: 240, 1>}, {pipeline_mode = #tpu.pipeline_mode<synchronous>, transform_indices = @transform_2, window_bounds = array<i64: 9, 32>}, {pipeline_mode = #tpu.pipeline_mode<synchronous>, transform_indices = @transform_3, window_bounds = array<i64: 1, 32>}, {pipeline_mode = #tpu.pipeline_mode<synchronous>, transform_indices = @transform_4, window_bounds = array<i64: 288, 32>}, {pipeline_mode = #tpu.pipeline_mode<synchronous>, transform_indices = @transform_5, window_bounds = array<i64: 1, 32>}, {pipeline_mode = #tpu.pipeline_mode<synchronous>, transform_indices = @transform_6, window_bounds = array<i64: 32, 128>}, {pipeline_mode = #tpu.pipeline_mode<synchronous>, transform_indices = @transform_7, window_bounds = array<i64: 1, 128>}, {transform_indices = @transform_8, window_bounds = array<i64: 1, 192, 128>}]} {
    %c2_i32 = arith.constant 2 : i32
    %c0_i32 = arith.constant 0 : i32
    %0 = arith.cmpi eq, %c2_i32, %c0_i32 : i32
    %c1_i32 = arith.constant 1 : i32
    %1 = arith.select %0, %c1_i32, %c2_i32 : i32
    %2 = arith.remsi %arg0, %1 : i32
    %c0_i32_0 = arith.constant 0 : i32
    %3 = arith.cmpi ne, %2, %c0_i32_0 : i32
    %c0_i32_1 = arith.constant 0 : i32
    %4 = arith.cmpi slt, %2, %c0_i32_1 : i32
    %c0_i32_2 = arith.constant 0 : i32
    %5 = arith.cmpi slt, %1, %c0_i32_2 : i32
    %6 = arith.xori %4, %5 : i1
    %7 = arith.andi %6, %3 : i1
    %8 = arith.addi %2, %1 : i32
    %9 = arith.select %7, %8, %2 : i32
    %c0 = arith.constant 0 : index
    %c0_3 = arith.constant 0 : index
    %c0_4 = arith.constant 0 : index
    %10 = vector.load %arg1[%c0, %c0_3, %c0_4] : memref<1x336x1xf32, #tpu.memory_space<vmem>>, vector<1x336x1xf32>
    %11 = vector.shape_cast %10 : vector<1x336x1xf32> to vector<336x1xf32>
    %c0_5 = arith.constant 0 : index
    %c0_6 = arith.constant 0 : index
    %12 = vector.load %arg3[%c0_5, %c0_6] : memref<9x32xf32, #tpu.memory_space<vmem>>, vector<9x32xf32>
    %c0_7 = arith.constant 0 : index
    %c0_8 = arith.constant 0 : index
    %13 = vector.load %arg5[%c0_7, %c0_8] : memref<288x32xf32, #tpu.memory_space<vmem>>, vector<288x32xf32>
    %c0_9 = arith.constant 0 : index
    %c0_10 = arith.constant 0 : index
    %14 = vector.load %arg7[%c0_9, %c0_10] : memref<32x128xf32, #tpu.memory_space<vmem>>, vector<32x128xf32>
    %c0_11 = arith.constant 0 : index
    %c0_12 = arith.constant 0 : index
    %15 = vector.load %arg4[%c0_11, %c0_12] : memref<1x32xf32, #tpu.memory_space<vmem>>, vector<1x32xf32>
    %c0_13 = arith.constant 0 : index
    %c0_14 = arith.constant 0 : index
    %16 = vector.load %arg6[%c0_13, %c0_14] : memref<1x32xf32, #tpu.memory_space<vmem>>, vector<1x32xf32>
    %c0_15 = arith.constant 0 : index
    %c0_16 = arith.constant 0 : index
    %17 = vector.load %arg8[%c0_15, %c0_16] : memref<1x128xf32, #tpu.memory_space<vmem>>, vector<1x128xf32>
    %c0_17 = arith.constant 0 : index
    %c0_18 = arith.constant 0 : index
    %18 = vector.load %arg2[%c0_17, %c0_18] : memref<240x1xf32, #tpu.memory_space<vmem>>, vector<240x1xf32>
    %19 = vector.extract_strided_slice %11 {offsets = [23, 0], sizes = [240, 1], strides = [1, 1]} : vector<336x1xf32> to vector<240x1xf32>
    %20 = vector.extract_strided_slice %12 {offsets = [0, 0], sizes = [1, 32], strides = [1, 1]} : vector<9x32xf32> to vector<1x32xf32>
    %21 = vector.broadcast %19 : vector<240x1xf32> to vector<240x32xf32>
    %22 = vector.broadcast %20 : vector<1x32xf32> to vector<240x32xf32>
    %23 = arith.mulf %21, %22 : vector<240x32xf32>
    %24 = vector.extract_strided_slice %11 {offsets = [24, 0], sizes = [240, 1], strides = [1, 1]} : vector<336x1xf32> to vector<240x1xf32>
    %25 = vector.extract_strided_slice %12 {offsets = [1, 0], sizes = [1, 32], strides = [1, 1]} : vector<9x32xf32> to vector<1x32xf32>
    %26 = vector.broadcast %24 : vector<240x1xf32> to vector<240x32xf32>
    %27 = vector.broadcast %25 : vector<1x32xf32> to vector<240x32xf32>
    %28 = arith.mulf %26, %27 : vector<240x32xf32>
    %29 = arith.addf %23, %28 : vector<240x32xf32>
    %30 = vector.extract_strided_slice %11 {offsets = [25, 0], sizes = [240, 1], strides = [1, 1]} : vector<336x1xf32> to vector<240x1xf32>
    %31 = vector.extract_strided_slice %12 {offsets = [2, 0], sizes = [1, 32], strides = [1, 1]} : vector<9x32xf32> to vector<1x32xf32>
    %32 = vector.broadcast %30 : vector<240x1xf32> to vector<240x32xf32>
    %33 = vector.broadcast %31 : vector<1x32xf32> to vector<240x32xf32>
    %34 = arith.mulf %32, %33 : vector<240x32xf32>
    %35 = arith.addf %29, %34 : vector<240x32xf32>
    %36 = vector.extract_strided_slice %11 {offsets = [47, 0], sizes = [240, 1], strides = [1, 1]} : vector<336x1xf32> to vector<240x1xf32>
    %37 = vector.extract_strided_slice %12 {offsets = [3, 0], sizes = [1, 32], strides = [1, 1]} : vector<9x32xf32> to vector<1x32xf32>
    %38 = vector.broadcast %36 : vector<240x1xf32> to vector<240x32xf32>
    %39 = vector.broadcast %37 : vector<1x32xf32> to vector<240x32xf32>
    %40 = arith.mulf %38, %39 : vector<240x32xf32>
    %41 = arith.addf %35, %40 : vector<240x32xf32>
    %42 = vector.extract_strided_slice %11 {offsets = [48, 0], sizes = [240, 1], strides = [1, 1]} : vector<336x1xf32> to vector<240x1xf32>
    %43 = vector.extract_strided_slice %12 {offsets = [4, 0], sizes = [1, 32], strides = [1, 1]} : vector<9x32xf32> to vector<1x32xf32>
    %44 = vector.broadcast %42 : vector<240x1xf32> to vector<240x32xf32>
    %45 = vector.broadcast %43 : vector<1x32xf32> to vector<240x32xf32>
    %46 = arith.mulf %44, %45 : vector<240x32xf32>
    %47 = arith.addf %41, %46 : vector<240x32xf32>
    %48 = vector.extract_strided_slice %11 {offsets = [49, 0], sizes = [240, 1], strides = [1, 1]} : vector<336x1xf32> to vector<240x1xf32>
    %49 = vector.extract_strided_slice %12 {offsets = [5, 0], sizes = [1, 32], strides = [1, 1]} : vector<9x32xf32> to vector<1x32xf32>
    %50 = vector.broadcast %48 : vector<240x1xf32> to vector<240x32xf32>
    %51 = vector.broadcast %49 : vector<1x32xf32> to vector<240x32xf32>
    %52 = arith.mulf %50, %51 : vector<240x32xf32>
    %53 = arith.addf %47, %52 : vector<240x32xf32>
    %54 = vector.extract_strided_slice %11 {offsets = [71, 0], sizes = [240, 1], strides = [1, 1]} : vector<336x1xf32> to vector<240x1xf32>
    %55 = vector.extract_strided_slice %12 {offsets = [6, 0], sizes = [1, 32], strides = [1, 1]} : vector<9x32xf32> to vector<1x32xf32>
    %56 = vector.broadcast %54 : vector<240x1xf32> to vector<240x32xf32>
    %57 = vector.broadcast %55 : vector<1x32xf32> to vector<240x32xf32>
    %58 = arith.mulf %56, %57 : vector<240x32xf32>
    %59 = arith.addf %53, %58 : vector<240x32xf32>
    %60 = vector.extract_strided_slice %11 {offsets = [72, 0], sizes = [240, 1], strides = [1, 1]} : vector<336x1xf32> to vector<240x1xf32>
    %61 = vector.extract_strided_slice %12 {offsets = [7, 0], sizes = [1, 32], strides = [1, 1]} : vector<9x32xf32> to vector<1x32xf32>
    %62 = vector.broadcast %60 : vector<240x1xf32> to vector<240x32xf32>
    %63 = vector.broadcast %61 : vector<1x32xf32> to vector<240x32xf32>
    %64 = arith.mulf %62, %63 : vector<240x32xf32>
    %65 = arith.addf %59, %64 : vector<240x32xf32>
    %66 = vector.extract_strided_slice %11 {offsets = [73, 0], sizes = [240, 1], strides = [1, 1]} : vector<336x1xf32> to vector<240x1xf32>
    %67 = vector.extract_strided_slice %12 {offsets = [8, 0], sizes = [1, 32], strides = [1, 1]} : vector<9x32xf32> to vector<1x32xf32>
    %68 = vector.broadcast %66 : vector<240x1xf32> to vector<240x32xf32>
    %69 = vector.broadcast %67 : vector<1x32xf32> to vector<240x32xf32>
    %70 = arith.mulf %68, %69 : vector<240x32xf32>
    %71 = arith.addf %65, %70 : vector<240x32xf32>
    %72 = vector.broadcast %15 : vector<1x32xf32> to vector<240x32xf32>
    %73 = arith.addf %71, %72 : vector<240x32xf32>
    %cst = arith.constant 0.000000e+00 : f32
    %74 = vector.broadcast %cst : f32 to vector<240x32xf32>
    %75 = arith.maximumf %73, %74 : vector<240x32xf32>
    %76 = vector.broadcast %18 : vector<240x1xf32> to vector<240x32xf32>
    %77 = arith.mulf %75, %76 : vector<240x32xf32>
    %cst_19 = arith.constant 0.000000e+00 : f32
    %78 = vector.broadcast %cst_19 : f32 to vector<24x32xf32>
    %c0_20 = arith.constant 0 : index
    %c0_21 = arith.constant 0 : index
    %79 = vector.load %arg10[%c0_20, %c0_21] : memref<288x32xf32, #tpu.memory_space<vmem>>, vector<24x32xf32>
    tpu.vector_store %arg10[%c0_20, %c0_21], %78 {strides = array<i32>} : memref<288x32xf32, #tpu.memory_space<vmem>>, vector<24x32xf32>,
    %c264 = arith.constant 264 : index
    %c0_22 = arith.constant 0 : index
    %80 = vector.load %arg10[%c264, %c0_22] : memref<288x32xf32, #tpu.memory_space<vmem>>, vector<24x32xf32>
    tpu.vector_store %arg10[%c264, %c0_22], %78 {strides = array<i32>} : memref<288x32xf32, #tpu.memory_space<vmem>>, vector<24x32xf32>,
    %c24 = arith.constant 24 : index
    %c0_23 = arith.constant 0 : index
    %81 = vector.load %arg10[%c24, %c0_23] : memref<288x32xf32, #tpu.memory_space<vmem>>, vector<240x32xf32>
    tpu.vector_store %arg10[%c24, %c0_23], %77 {strides = array<i32>} : memref<288x32xf32, #tpu.memory_space<vmem>>, vector<240x32xf32>,
    %c0_i32_24 = arith.constant 0 : i32
    %82 = arith.cmpi eq, %9, %c0_i32_24 : i32
    %83 = arith.extui %82 : i1 to i32
    %c0_i32_25 = arith.constant 0 : i32
    %84 = arith.cmpi ne, %83, %c0_i32_25 : i32
    scf.if %84 {
      %c24_52 = arith.constant 24 : index
      %c0_53 = arith.constant 0 : index
      %133 = vector.load %arg10[%c24_52, %c0_53] : memref<288x32xf32, #tpu.memory_space<vmem>>, vector<24x32xf32>
      tpu.vector_store %arg10[%c24_52, %c0_53], %78 {strides = array<i32>} : memref<288x32xf32, #tpu.memory_space<vmem>>, vector<24x32xf32>,
    } else {
    }
    %c1_i32_26 = arith.constant 1 : i32
    %85 = arith.cmpi eq, %9, %c1_i32_26 : i32
    %86 = arith.extui %85 : i1 to i32
    %c0_i32_27 = arith.constant 0 : i32
    %87 = arith.cmpi ne, %86, %c0_i32_27 : i32
    scf.if %87 {
      %c240 = arith.constant 240 : index
      %c0_52 = arith.constant 0 : index
      %133 = vector.load %arg10[%c240, %c0_52] : memref<288x32xf32, #tpu.memory_space<vmem>>, vector<24x32xf32>
      tpu.vector_store %arg10[%c240, %c0_52], %78 {strides = array<i32>} : memref<288x32xf32, #tpu.memory_space<vmem>>, vector<24x32xf32>,
    } else {
    }
    %c23 = arith.constant 23 : index
    %c0_28 = arith.constant 0 : index
    %88 = vector.load %arg10[%c23, %c0_28] : memref<288x32xf32, #tpu.memory_space<vmem>>, vector<192x32xf32>
    %89 = vector.extract_strided_slice %13 {offsets = [0, 0], sizes = [32, 32], strides = [1, 1]} : vector<288x32xf32> to vector<32x32xf32>
    %cst_29 = arith.constant dense<0.000000e+00> : vector<192x32xf32>
    %90 = tpu.matmul %88, %89, %cst_29 {dimension_numbers = #tpu.dot_dimension_numbers<[1], [0], [0], [1], [0, 0, 1, 1], [], []>} : vector<192x32xf32>, vector<32x32xf32>, vector<192x32xf32> -> vector<192x32xf32>
    %c24_30 = arith.constant 24 : index
    %c0_31 = arith.constant 0 : index
    %91 = vector.load %arg10[%c24_30, %c0_31] : memref<288x32xf32, #tpu.memory_space<vmem>>, vector<192x32xf32>
    %92 = vector.extract_strided_slice %13 {offsets = [32, 0], sizes = [32, 32], strides = [1, 1]} : vector<288x32xf32> to vector<32x32xf32>
    %cst_32 = arith.constant dense<0.000000e+00> : vector<192x32xf32>
    %93 = tpu.matmul %91, %92, %cst_32 {dimension_numbers = #tpu.dot_dimension_numbers<[1], [0], [0], [1], [0, 0, 1, 1], [], []>} : vector<192x32xf32>, vector<32x32xf32>, vector<192x32xf32> -> vector<192x32xf32>
    %94 = arith.addf %90, %93 : vector<192x32xf32>
    %c25 = arith.constant 25 : index
    %c0_33 = arith.constant 0 : index
    %95 = vector.load %arg10[%c25, %c0_33] : memref<288x32xf32, #tpu.memory_space<vmem>>, vector<192x32xf32>
    %96 = vector.extract_strided_slice %13 {offsets = [64, 0], sizes = [32, 32], strides = [1, 1]} : vector<288x32xf32> to vector<32x32xf32>
    %cst_34 = arith.constant dense<0.000000e+00> : vector<192x32xf32>
    %97 = tpu.matmul %95, %96, %cst_34 {dimension_numbers = #tpu.dot_dimension_numbers<[1], [0], [0], [1], [0, 0, 1, 1], [], []>} : vector<192x32xf32>, vector<32x32xf32>, vector<192x32xf32> -> vector<192x32xf32>
    %98 = arith.addf %94, %97 : vector<192x32xf32>
    %c47 = arith.constant 47 : index
    %c0_35 = arith.constant 0 : index
    %99 = vector.load %arg10[%c47, %c0_35] : memref<288x32xf32, #tpu.memory_space<vmem>>, vector<192x32xf32>
    %100 = vector.extract_strided_slice %13 {offsets = [96, 0], sizes = [32, 32], strides = [1, 1]} : vector<288x32xf32> to vector<32x32xf32>
    %cst_36 = arith.constant dense<0.000000e+00> : vector<192x32xf32>
    %101 = tpu.matmul %99, %100, %cst_36 {dimension_numbers = #tpu.dot_dimension_numbers<[1], [0], [0], [1], [0, 0, 1, 1], [], []>} : vector<192x32xf32>, vector<32x32xf32>, vector<192x32xf32> -> vector<192x32xf32>
    %102 = arith.addf %98, %101 : vector<192x32xf32>
    %c48 = arith.constant 48 : index
    %c0_37 = arith.constant 0 : index
    %103 = vector.load %arg10[%c48, %c0_37] : memref<288x32xf32, #tpu.memory_space<vmem>>, vector<192x32xf32>
    %104 = vector.extract_strided_slice %13 {offsets = [128, 0], sizes = [32, 32], strides = [1, 1]} : vector<288x32xf32> to vector<32x32xf32>
    %cst_38 = arith.constant dense<0.000000e+00> : vector<192x32xf32>
    %105 = tpu.matmul %103, %104, %cst_38 {dimension_numbers = #tpu.dot_dimension_numbers<[1], [0], [0], [1], [0, 0, 1, 1], [], []>} : vector<192x32xf32>, vector<32x32xf32>, vector<192x32xf32> -> vector<192x32xf32>
    %106 = arith.addf %102, %105 : vector<192x32xf32>
    %c49 = arith.constant 49 : index
    %c0_39 = arith.constant 0 : index
    %107 = vector.load %arg10[%c49, %c0_39] : memref<288x32xf32, #tpu.memory_space<vmem>>, vector<192x32xf32>
    %108 = vector.extract_strided_slice %13 {offsets = [160, 0], sizes = [32, 32], strides = [1, 1]} : vector<288x32xf32> to vector<32x32xf32>
    %cst_40 = arith.constant dense<0.000000e+00> : vector<192x32xf32>
    %109 = tpu.matmul %107, %108, %cst_40 {dimension_numbers = #tpu.dot_dimension_numbers<[1], [0], [0], [1], [0, 0, 1, 1], [], []>} : vector<192x32xf32>, vector<32x32xf32>, vector<192x32xf32> -> vector<192x32xf32>
    %110 = arith.addf %106, %109 : vector<192x32xf32>
    %c71 = arith.constant 71 : index
    %c0_41 = arith.constant 0 : index
    %111 = vector.load %arg10[%c71, %c0_41] : memref<288x32xf32, #tpu.memory_space<vmem>>, vector<192x32xf32>
    %112 = vector.extract_strided_slice %13 {offsets = [192, 0], sizes = [32, 32], strides = [1, 1]} : vector<288x32xf32> to vector<32x32xf32>
    %cst_42 = arith.constant dense<0.000000e+00> : vector<192x32xf32>
    %113 = tpu.matmul %111, %112, %cst_42 {dimension_numbers = #tpu.dot_dimension_numbers<[1], [0], [0], [1], [0, 0, 1, 1], [], []>} : vector<192x32xf32>, vector<32x32xf32>, vector<192x32xf32> -> vector<192x32xf32>
    %114 = arith.addf %110, %113 : vector<192x32xf32>
    %c72 = arith.constant 72 : index
    %c0_43 = arith.constant 0 : index
    %115 = vector.load %arg10[%c72, %c0_43] : memref<288x32xf32, #tpu.memory_space<vmem>>, vector<192x32xf32>
    %116 = vector.extract_strided_slice %13 {offsets = [224, 0], sizes = [32, 32], strides = [1, 1]} : vector<288x32xf32> to vector<32x32xf32>
    %cst_44 = arith.constant dense<0.000000e+00> : vector<192x32xf32>
    %117 = tpu.matmul %115, %116, %cst_44 {dimension_numbers = #tpu.dot_dimension_numbers<[1], [0], [0], [1], [0, 0, 1, 1], [], []>} : vector<192x32xf32>, vector<32x32xf32>, vector<192x32xf32> -> vector<192x32xf32>
    %118 = arith.addf %114, %117 : vector<192x32xf32>
    %c73 = arith.constant 73 : index
    %c0_45 = arith.constant 0 : index
    %119 = vector.load %arg10[%c73, %c0_45] : memref<288x32xf32, #tpu.memory_space<vmem>>, vector<192x32xf32>
    %120 = vector.extract_strided_slice %13 {offsets = [256, 0], sizes = [32, 32], strides = [1, 1]} : vector<288x32xf32> to vector<32x32xf32>
    %cst_46 = arith.constant dense<0.000000e+00> : vector<192x32xf32>
    %121 = tpu.matmul %119, %120, %cst_46 {dimension_numbers = #tpu.dot_dimension_numbers<[1], [0], [0], [1], [0, 0, 1, 1], [], []>} : vector<192x32xf32>, vector<32x32xf32>, vector<192x32xf32> -> vector<192x32xf32>
    %122 = arith.addf %118, %121 : vector<192x32xf32>
    %123 = vector.broadcast %16 : vector<1x32xf32> to vector<192x32xf32>
    %124 = arith.addf %122, %123 : vector<192x32xf32>
    %cst_47 = arith.constant 0.000000e+00 : f32
    %125 = vector.broadcast %cst_47 : f32 to vector<192x32xf32>
    %126 = arith.maximumf %124, %125 : vector<192x32xf32>
    %cst_48 = arith.constant dense<0.000000e+00> : vector<192x128xf32>
    %127 = tpu.matmul %126, %14, %cst_48 {dimension_numbers = #tpu.dot_dimension_numbers<[1], [0], [0], [1], [0, 0, 1, 1], [], []>} : vector<192x32xf32>, vector<32x128xf32>, vector<192x128xf32> -> vector<192x128xf32>
    %128 = vector.broadcast %17 : vector<1x128xf32> to vector<192x128xf32>
    %129 = arith.addf %127, %128 : vector<192x128xf32>
    %c0_49 = arith.constant 0 : index
    %c0_50 = arith.constant 0 : index
    %c0_51 = arith.constant 0 : index
    %130 = vector.load %arg9[%c0_49, %c0_50, %c0_51] : memref<1x192x128xf32, #tpu.memory_space<vmem>>, vector<1x192x128xf32>
    %131 = vector.shape_cast %130 : vector<1x192x128xf32> to vector<192x128xf32>
    %132 = vector.shape_cast %129 : vector<192x128xf32> to vector<1x192x128xf32>
    tpu.vector_store %arg9[%c0_49, %c0_50, %c0_51], %132 {strides = array<i32>} : memref<1x192x128xf32, #tpu.memory_space<vmem>>, vector<1x192x128xf32>,
    return
  }
  func.func @transform_0(%arg0: i32) -> (i32, i32, i32) {
    %c0_i32 = arith.constant 0 : i32
    %c0_i32_0 = arith.constant 0 : i32
    %c0_i32_1 = arith.constant 0 : i32
    return %arg0, %c0_i32, %c0_i32_0 : i32, i32, i32
  }
  func.func @transform_1(%arg0: i32) -> (i32, i32) {
    %c0_i32 = arith.constant 0 : i32
    %c0_i32_0 = arith.constant 0 : i32
    %c0_i32_1 = arith.constant 0 : i32
    return %c0_i32, %c0_i32_0 : i32, i32
  }
  func.func @transform_2(%arg0: i32) -> (i32, i32) {
    %c0_i32 = arith.constant 0 : i32
    %c0_i32_0 = arith.constant 0 : i32
    %c0_i32_1 = arith.constant 0 : i32
    return %c0_i32, %c0_i32_0 : i32, i32
  }
  func.func @transform_3(%arg0: i32) -> (i32, i32) {
    %c0_i32 = arith.constant 0 : i32
    %c0_i32_0 = arith.constant 0 : i32
    %c0_i32_1 = arith.constant 0 : i32
    return %c0_i32, %c0_i32_0 : i32, i32
  }
  func.func @transform_4(%arg0: i32) -> (i32, i32) {
    %c0_i32 = arith.constant 0 : i32
    %c0_i32_0 = arith.constant 0 : i32
    %c0_i32_1 = arith.constant 0 : i32
    return %c0_i32, %c0_i32_0 : i32, i32
  }
  func.func @transform_5(%arg0: i32) -> (i32, i32) {
    %c0_i32 = arith.constant 0 : i32
    %c0_i32_0 = arith.constant 0 : i32
    %c0_i32_1 = arith.constant 0 : i32
    return %c0_i32, %c0_i32_0 : i32, i32
  }
  func.func @transform_6(%arg0: i32) -> (i32, i32) {
    %c0_i32 = arith.constant 0 : i32
    %c0_i32_0 = arith.constant 0 : i32
    %c0_i32_1 = arith.constant 0 : i32
    return %c0_i32, %c0_i32_0 : i32, i32
  }
  func.func @transform_7(%arg0: i32) -> (i32, i32) {
    %c0_i32 = arith.constant 0 : i32
    %c0_i32_0 = arith.constant 0 : i32
    %c0_i32_1 = arith.constant 0 : i32
    return %c0_i32, %c0_i32_0 : i32, i32
  }
  func.func @transform_8(%arg0: i32) -> (i32, i32, i32) {
    %c0_i32 = arith.constant 0 : i32
    %c0_i32_0 = arith.constant 0 : i32
    %c0_i32_1 = arith.constant 0 : i32
    return %arg0, %c0_i32, %c0_i32_0 : i32, i32, i32
  }
}

</mosaic_0001>

<llo_original>
// kernel: tile.9
$region0: #{tile.9}
  %s0 = inlined_call_operand.vmem [shape: f32[4,32], index: 0, kind: input, shape index: {}]
  %s1 = inlined_call_operand.vmem [shape: f32[1,128], index: 1, kind: output, shape index: {}]
  $region1: #{tile.9} parent=0
    #allocation0 [shape = 'u8[4096]{0}', space=vmem, size = 0x1000, scoped, tag = 'scoped mem for output reshape']
    #allocation1 [shape = 'u8[4096]{0}', space=vmem, size = 0x1000, scoped, tag = 'scoped mem for input reshape']
    %s3 = sshllo.u32 0, 4
    %v4 = vld [vmem:[%s0] sm:%s3]
    %5 = vst [vmem:[#allocation1] sm:%s3] %v4
    %v6 = vld [vmem:[#allocation1] sm:$0x1]
    %vm7 = vcmask 261120
    %8 = vst.msk [vmem:[#allocation0] sm:$0x1] %vm7, %v6
    %s9 = scalar_lea.vmem [#allocation1], 3
    %v10 = vld [vmem:[%s9] sm:$0x1]
    %11 = vrot.lane.b32.xlu0 %v10, 96
    %v12 = vpop.permute.xlu0 %11
    %vm13 = vcmask 1048320
    %14 = vst.msk [vmem:[#allocation0] sm:$0x1] %vm13, %v12
    %s15 = scalar_lea.vmem [#allocation1], 2
    %v16 = vld [vmem:[%s15] sm:$0x1]
    %17 = vrot.lane.b32.xlu0 %v16, 64
    %v18 = vpop.permute.xlu0 %17
    %vm19 = vcmask 785920
    %20 = vst.msk [vmem:[#allocation0] sm:$0x1] %vm19, %v18
    %s21 = scalar_lea.vmem [#allocation1], 1
    %v22 = vld [vmem:[%s21] sm:$0x1]
    %23 = vrot.lane.b32.xlu0 %v22, 32
    %v24 = vpop.permute.xlu0 %23
    %vm25 = vcmask 523520
    %26 = vst.msk [vmem:[#allocation0] sm:$0x1] %vm25, %v24
    %s28 = sshllo.u32 0, 1
    %v30 = vld [vmem:[#allocation0] sm:%s28]
    %s31 = sshllo.u32 0, 1
    %32 = vst [vmem:[%s1] sm:%s31] %v30

// kernel: tile.8
$region0: #{tile.8}
  #allocation2 [shape = 's32[1]{0}', space=sflag, size = 0x4, scoped, tag = 'scoped memory for tile.8']
  %s0 = inlined_call_operand.hbm [shape: f32[32], index: 0, kind: input, shape index: {}]
  %s1 = inlined_call_operand.vmem [shape: f32[4,32], index: 1, kind: output, shape index: {}]
  $region1: #{tile.8} parent=0
    #allocation0 [shape = 'u8[512]{0}', space=vmem, size = 0x400, scoped, tag = 'operand span for operand 0']
    #allocation1 [shape = 's32[1]{0}', space=sflag, size = 0x4, scoped, tag = 'scoped memory for tile.8']
    %2 = vsyncpa [#allocation1], 0
    // Predicated region
    $region2: #{tile.8} parent=1 // pred_check
      _
    $region3: #{tile.8} parent=1 // pred_check_branch
      %4 = sbr.rel (0) target = $region5
    $region4: #{tile.8} parent=1 // pred_region
      %s6 = ssub.s32 16, 16
      %7 = vsyncadd [#allocation1], %s6
      %s9 = sshll.u32 [#allocation0], 4
      %s10 = int_to_ptr.vmem [resolvable:$true] %s9
      %12 = dma.hbm_to_vmem [thread:$0]  %s0, 16, %s10, [#allocation1]
    $region5: #{tile.8} parent=1 // pred_fallthru
      _
    // Predicated region
    $region6: #{tile.8} parent=1 // pred_check
      _
    $region7: #{tile.8} parent=1 // pred_check_branch
      %14 = sbr.rel (0) target = $region9
    $region8: #{tile.8} parent=1 // pred_region
      %15 = dma.done [#allocation1], 16
    $region9: #{tile.8} parent=1 // pred_fallthru
      _
    %v16 = vld [vmem:[#allocation0] ss:$0 sm:$0xff]
    %17 = vst [vmem:[%s1] sm:$0xf] %v16
    %18 = vsyncpa [#allocation1], 1

// kernel: upconv_forward.1
$region0: #{upconv_forward.1}
  #allocation0 [shape = 'u32[]', space=smem, size = 0x4, offset = 0x4, fixed_abs, tag = 'smem constant byte address 0x4 - core index']
  #allocation1 [shape = 'u32[144,128]{1,0:T(1,128)}', space=vmem, size = 0x12000, scoped, tag = 'internal scratch']
  #allocation2 [shape = 'f32[288,32]{1,0:T(8,128)}', space=vmem, size = 0x24000, scoped, tag = 'scratch operand']
  %s0 = inlined_call_operand.vmem [shape: f32[4,336,1], index: 0, kind: input, shape index: {}]
  %s1 = inlined_call_operand.hbm [shape: f32[240,1], index: 1, kind: input, shape index: {}]
  %s2 = inlined_call_operand.vmem [shape: f32[9,32], index: 2, kind: input, shape index: {}]
  %s3 = inlined_call_operand.hbm [shape: f32[1,32], index: 3, kind: input, shape index: {}]
  %s4 = inlined_call_operand.vmem [shape: f32[288,32], index: 4, kind: input, shape index: {}]
  %s5 = inlined_call_operand.hbm [shape: f32[1,32], index: 5, kind: input, shape index: {}]
  %s6 = inlined_call_operand.vmem [shape: f32[32,128], index: 6, kind: input, shape index: {}]
  %s7 = inlined_call_operand.vmem [shape: f32[1,128], index: 7, kind: input, shape index: {}]
  %s8 = inlined_call_operand.vmem [shape: f32[4,192,128], index: 8, kind: output, shape index: {}]
  %s9 = sld [smem:[#allocation0]]
  $region85: #{upconv_forward.1} parent=0
    _
  %s11 = ssub.s32 1, %s9
  %s12 = scalar_select 0, %s11, %s9
  $region1: #{upconv_forward.1} parent=0
    #allocation3 [shape = 'u8[122880]{0}', space=vmem, size = 0x1e000, scoped, tag = 'input window, operand 1, single buffered']
    #allocation4 [shape = 's32[2]{0}', space=sflag, size = 0x8, scoped, tag = 'scoped memory for upconv_forward.1']
    #allocation5 [shape = 'u8[512]{0}', space=vmem, size = 0x400, scoped, tag = 'input window, operand 3, single buffered']
    #allocation6 [shape = 's32[1]{0}', space=sflag, size = 0x4, scoped, tag = 'scoped memory for upconv_forward.1']
    #allocation7 [shape = 'u8[512]{0}', space=vmem, size = 0x400, scoped, tag = 'input window, operand 5, single buffered']
    %13 = vsyncpa [#allocation4], 0
    %14 = vsyncpa [#allocation6], 0
    loop: start=0, step=1, limit=6
    $region2: #{upconv_forward.1} parent=1 // loop_pre_header
      _
    $region3: #{upconv_forward.1} parent=1 // loop_header
      %s16 = sphi 0, %s20
      %p17 = scmp.ge.s32.totalorder %s16, 6
      %s26 = sphi 0, %s28
      %s29 = sphi 0, %s26
      %s30 = sphi 0, %s29
      %s46 = sphi 0, %s30
      %s50 = sphi 0, %s50
      %s52 = sphi 0, %s50
      %s53 = sphi 0, %s52
      %s67 = sphi 0, %s53
      %s71 = sphi 0, %s71
      %s73 = sphi 0, %s71
      %s74 = sphi 0, %s73
      %s88 = sphi 0, %s74
      %s92 = sphi 0, %s92
      %s94 = sphi 0, %s92
      %s95 = sphi 0, %s94
      %s109 = sphi 0, %s95
      %s113 = sphi 0, %s113
      %s115 = sphi 0, %s113
      %s116 = sphi 0, %s115
      %s130 = sphi 0, %s116
      %s134 = sphi 0, %s134
      %s136 = sphi 0, %s134
      %s137 = sphi 0, %s136
      %s151 = sphi 0, %s137
      %s155 = sphi 0, %s155
      %s157 = sphi 0, %s155
      %s158 = sphi 0, %s157
      %s172 = sphi 0, %s158
      %s176 = sphi 0, %s176
      %s178 = sphi 0, %s176
      %s179 = sphi 0, %s178
      %s193 = sphi 0, %s179
      %s199 = sphi 0, %s201
      %s202 = sphi 0, %s199
      %s203 = sphi 0, %s202
      %s219 = sphi 0, %s203
    $region4: #{upconv_forward.1} parent=1 // loop_header_branch
      %19 = sbr.rel (%p17) target = $region8
    $region5: #{upconv_forward.1} parent=1 // loop_body
      %s21 = ssub.s32 %s16, 1
      %s22 = ssub.s32 %s16, 2
      %s23 = sadd.s32 %s16, 1
      %s24 = ssub.s32 %s16, %s23
      %p25 = scmp.eq.s32.totalorder %s24, 0
      %s27 = sadd.s32 %s26, 1
      %s28 = scalar_select %p25, %s26, %s27
      %p31 = pneg %p25
      %p32 = scmp.eq.s32.totalorder %s16, 3
      %p33 = por %p31, %p32
      %p34 = scmp.ne.s32.totalorder %s26, %s29
      %p35 = scmp.eq.s32.totalorder %s16, 0
      %p36 = por %p34, %p35
      %p37 = scmp.ne.s32.totalorder %s26, %s29
      %p38 = scmp.eq.s32.totalorder %s21, 3
      %p39 = por %p37, %p38
      %p40 = scmp.ne.s32.totalorder %s29, %s30
      %p41 = scmp.eq.s32.totalorder %s21, 0
      %p42 = por %p40, %p41
      %p43 = scmp.ne.s32.totalorder %s29, %s30
      %p44 = scmp.eq.s32.totalorder %s22, 3
      %p45 = por %p43, %p44
      %p47 = scmp.ne.s32.totalorder %s30, %s46
      %p48 = scmp.eq.s32.totalorder %s22, 0
      %p49 = por %p47, %p48
      %s51 = sadd.s32 %s50, 1
      %p54 = scmp.eq.s32.totalorder %s16, 3
      %p55 = scmp.ne.s32.totalorder %s50, %s52
      %p56 = scmp.eq.s32.totalorder %s16, 0
      %p57 = por %p55, %p56
      %p58 = scmp.ne.s32.totalorder %s50, %s52
      %p59 = scmp.eq.s32.totalorder %s21, 3
      %p60 = por %p58, %p59
      %p61 = scmp.ne.s32.totalorder %s52, %s53
      %p62 = scmp.eq.s32.totalorder %s21, 0
      %p63 = por %p61, %p62
      %p64 = scmp.ne.s32.totalorder %s52, %s53
      %p65 = scmp.eq.s32.totalorder %s22, 3
      %p66 = por %p64, %p65
      %p68 = scmp.ne.s32.totalorder %s53, %s67
      %p69 = scmp.eq.s32.totalorder %s22, 0
      %p70 = por %p68, %p69
      %s72 = sadd.s32 %s71, 1
      %p75 = scmp.eq.s32.totalorder %s16, 3
      %p76 = scmp.ne.s32.totalorder %s71, %s73
      %p77 = scmp.eq.s32.totalorder %s16, 0
      %p78 = por %p76, %p77
      %p79 = scmp.ne.s32.totalorder %s71, %s73
      %p80 = scmp.eq.s32.totalorder %s21, 3
      %p81 = por %p79, %p80
      %p82 = scmp.ne.s32.totalorder %s73, %s74
      %p83 = scmp.eq.s32.totalorder %s21, 0
      %p84 = por %p82, %p83
      %p85 = scmp.ne.s32.totalorder %s73, %s74
      %p86 = scmp.eq.s32.totalorder %s22, 3
      %p87 = por %p85, %p86
      %p89 = scmp.ne.s32.totalorder %s74, %s88
      %p90 = scmp.eq.s32.totalorder %s22, 0
      %p91 = por %p89, %p90
      %s93 = sadd.s32 %s92, 1
      %p96 = scmp.eq.s32.totalorder %s16, 3
      %p97 = scmp.ne.s32.totalorder %s92, %s94
      %p98 = scmp.eq.s32.totalorder %s16, 0
      %p99 = por %p97, %p98
      %p100 = scmp.ne.s32.totalorder %s92, %s94
      %p101 = scmp.eq.s32.totalorder %s21, 3
      %p102 = por %p100, %p101
      %p103 = scmp.ne.s32.totalorder %s94, %s95
      %p104 = scmp.eq.s32.totalorder %s21, 0
      %p105 = por %p103, %p104
      %p106 = scmp.ne.s32.totalorder %s94, %s95
      %p107 = scmp.eq.s32.totalorder %s22, 3
      %p108 = por %p106, %p107
      %p110 = scmp.ne.s32.totalorder %s95, %s109
      %p111 = scmp.eq.s32.totalorder %s22, 0
      %p112 = por %p110, %p111
      %s114 = sadd.s32 %s113, 1
      %p117 = scmp.eq.s32.totalorder %s16, 3
      %p118 = scmp.ne.s32.totalorder %s113, %s115
      %p119 = scmp.eq.s32.totalorder %s16, 0
      %p120 = por %p118, %p119
      %p121 = scmp.ne.s32.totalorder %s113, %s115
      %p122 = scmp.eq.s32.totalorder %s21, 3
      %p123 = por %p121, %p122
      %p124 = scmp.ne.s32.totalorder %s115, %s116
      %p125 = scmp.eq.s32.totalorder %s21, 0
      %p126 = por %p124, %p125
      %p127 = scmp.ne.s32.totalorder %s115, %s116
      %p128 = scmp.eq.s32.totalorder %s22, 3
      %p129 = por %p127, %p128
      %p131 = scmp.ne.s32.totalorder %s116, %s130
      %p132 = scmp.eq.s32.totalorder %s22, 0
      %p133 = por %p131, %p132
      %s135 = sadd.s32 %s134, 1
      %p138 = scmp.eq.s32.totalorder %s16, 3
      %p139 = scmp.ne.s32.totalorder %s134, %s136
      %p140 = scmp.eq.s32.totalorder %s16, 0
      %p141 = por %p139, %p140
      %p142 = scmp.ne.s32.totalorder %s134, %s136
      %p143 = scmp.eq.s32.totalorder %s21, 3
      %p144 = por %p142, %p143
      %p145 = scmp.ne.s32.totalorder %s136, %s137
      %p146 = scmp.eq.s32.totalorder %s21, 0
      %p147 = por %p145, %p146
      %p148 = scmp.ne.s32.totalorder %s136, %s137
      %p149 = scmp.eq.s32.totalorder %s22, 3
      %p150 = por %p148, %p149
      %p152 = scmp.ne.s32.totalorder %s137, %s151
      %p153 = scmp.eq.s32.totalorder %s22, 0
      %p154 = por %p152, %p153
      %s156 = sadd.s32 %s155, 1
      %p159 = scmp.eq.s32.totalorder %s16, 3
      %p160 = scmp.ne.s32.totalorder %s155, %s157
      %p161 = scmp.eq.s32.totalorder %s16, 0
      %p162 = por %p160, %p161
      %p163 = scmp.ne.s32.totalorder %s155, %s157
      %p164 = scmp.eq.s32.totalorder %s21, 3
      %p165 = por %p163, %p164
      %p166 = scmp.ne.s32.totalorder %s157, %s158
      %p167 = scmp.eq.s32.totalorder %s21, 0
      %p168 = por %p166, %p167
      %p169 = scmp.ne.s32.totalorder %s157, %s158
      %p170 = scmp.eq.s32.totalorder %s22, 3
      %p171 = por %p169, %p170
      %p173 = scmp.ne.s32.totalorder %s158, %s172
      %p174 = scmp.eq.s32.totalorder %s22, 0
      %p175 = por %p173, %p174
      %s177 = sadd.s32 %s176, 1
      %p180 = scmp.eq.s32.totalorder %s16, 3
      %p181 = scmp.ne.s32.totalorder %s176, %s178
      %p182 = scmp.eq.s32.totalorder %s16, 0
      %p183 = por %p181, %p182
      %p184 = scmp.ne.s32.totalorder %s176, %s178
      %p185 = scmp.eq.s32.totalorder %s21, 3
      %p186 = por %p184, %p185
      %p187 = scmp.ne.s32.totalorder %s178, %s179
      %p188 = scmp.eq.s32.totalorder %s21, 0
      %p189 = por %p187, %p188
      %p190 = scmp.ne.s32.totalorder %s178, %s179
      %p191 = scmp.eq.s32.totalorder %s22, 3
      %p192 = por %p190, %p191
      %p194 = scmp.ne.s32.totalorder %s179, %s193
      %p195 = scmp.eq.s32.totalorder %s22, 0
      %p196 = por %p194, %p195
      %s197 = ssub.s32 %s16, %s23
      %p198 = scmp.eq.s32.totalorder %s197, 0
      %s200 = sadd.s32 %s199, 1
      %s201 = scalar_select %p198, %s199, %s200
      %p204 = pneg %p198
      %p205 = scmp.eq.s32.totalorder %s16, 3
      %p206 = por %p204, %p205
      %p207 = scmp.ne.s32.totalorder %s199, %s202
      %p208 = scmp.eq.s32.totalorder %s16, 0
      %p209 = por %p207, %p208
      %p210 = scmp.ne.s32.totalorder %s199, %s202
      %p211 = scmp.eq.s32.totalorder %s21, 3
      %p212 = por %p210, %p211
      %p213 = scmp.ne.s32.totalorder %s202, %s203
      %p214 = scmp.eq.s32.totalorder %s21, 0
      %p215 = por %p213, %p214
      %p216 = scmp.ne.s32.totalorder %s202, %s203
      %p217 = scmp.eq.s32.totalorder %s22, 3
      %p218 = por %p216, %p217
      %p220 = scmp.ne.s32.totalorder %s203, %s219
      %p221 = scmp.eq.s32.totalorder %s22, 0
      %p222 = por %p220, %p221
      %p223 = scmp.le.s32.totalorder 1, %s16
      %p224 = scmp.lt.s32.totalorder %s16, 5
      %p225 = pnand %p223, %p224
      %p226 = pneg %p225
      // Predicated region
      $region9: #{upconv_forward.1} parent=5 // pred_check
        _
      $region10: #{upconv_forward.1} parent=5 // pred_check_branch
        %228 = sbr.rel (%p225) target = $region12
      $region11: #{upconv_forward.1} parent=5 // pred_region
        %s229 = ssub.s32 %s16, 1
        // Predicated region
        $region13: #{upconv_forward.1} parent=11 // pred_check
          %p230 = pneg %p63
        $region14: #{upconv_forward.1} parent=11 // pred_check_branch
          %232 = sbr.rel (%p230) target = $region16
        $region15: #{upconv_forward.1} parent=11 // pred_region
          %s234 = ssub.s32 3840, 3840
          %235 = vsyncadd [#allocation4], %s234
          %s236 = sshll.u32 [#allocation3], 4
          %s237 = int_to_ptr.vmem [resolvable:$true] %s236
          %242 = dma.hbm_to_vmem [thread:$0]  %s1, 3840, %s237, [#allocation4], 128, 128, 8
        $region16: #{upconv_forward.1} parent=11 // pred_fallthru
          _
        // Predicated region
        $region17: #{upconv_forward.1} parent=11 // pred_check
          %p243 = pneg %p84
        $region18: #{upconv_forward.1} parent=11 // pred_check_branch
          %245 = sbr.rel (%p243) target = $region20
        $region19: #{upconv_forward.1} parent=11 // pred_region
          _
        $region20: #{upconv_forward.1} parent=11 // pred_fallthru
          _
        // Predicated region
        $region21: #{upconv_forward.1} parent=11 // pred_check
          %p246 = pneg %p105
        $region22: #{upconv_forward.1} parent=11 // pred_check_branch
          %248 = sbr.rel (%p246) target = $region24
        $region23: #{upconv_forward.1} parent=11 // pred_region
          %s250 = ssub.s32 16, 16
          %251 = vsyncadd [#allocation6], %s250
          %s253 = sshll.u32 [#allocation5], 4
          %s254 = int_to_ptr.vmem [resolvable:$true] %s253
          %256 = dma.hbm_to_vmem [thread:$0]  %s3, 16, %s254, [#allocation6]
        $region24: #{upconv_forward.1} parent=11 // pred_fallthru
          _
        // Predicated region
        $region25: #{upconv_forward.1} parent=11 // pred_check
          %p257 = pneg %p126
        $region26: #{upconv_forward.1} parent=11 // pred_check_branch
          %259 = sbr.rel (%p257) target = $region28
        $region27: #{upconv_forward.1} parent=11 // pred_region
          _
        $region28: #{upconv_forward.1} parent=11 // pred_fallthru
          _
        // Predicated region
        $region29: #{upconv_forward.1} parent=11 // pred_check
          %p260 = pneg %p147
        $region30: #{upconv_forward.1} parent=11 // pred_check_branch
          %262 = sbr.rel (%p260) target = $region32
        $region31: #{upconv_forward.1} parent=11 // pred_region
          %s264 = ssub.s32 16, 16
          %265 = vsyncadd [#allocation6], %s264
          %s267 = sshll.u32 [#allocation7], 4
          %s268 = int_to_ptr.vmem [resolvable:$true] %s267
          %270 = dma.hbm_to_vmem [thread:$0]  %s5, 16, %s268, [#allocation6]
        $region32: #{upconv_forward.1} parent=11 // pred_fallthru
          _
        // Predicated region
        $region33: #{upconv_forward.1} parent=11 // pred_check
          %p271 = pneg %p168
        $region34: #{upconv_forward.1} parent=11 // pred_check_branch
          %273 = sbr.rel (%p271) target = $region36
        $region35: #{upconv_forward.1} parent=11 // pred_region
          _
        $region36: #{upconv_forward.1} parent=11 // pred_fallthru
          _
        // Predicated region
        $region37: #{upconv_forward.1} parent=11 // pred_check
          %p274 = pneg %p189
        $region38: #{upconv_forward.1} parent=11 // pred_check_branch
          %276 = sbr.rel (%p274) target = $region40
        $region39: #{upconv_forward.1} parent=11 // pred_region
          _
        $region40: #{upconv_forward.1} parent=11 // pred_fallthru
          _
      $region12: #{upconv_forward.1} parent=5 // pred_fallthru
        _
      %p277 = scmp.lt.s32.totalorder %s16, 4
      // Predicated region
      $region41: #{upconv_forward.1} parent=5 // pred_check
        %p278 = pneg %p277
      $region42: #{upconv_forward.1} parent=5 // pred_check_branch
        %280 = sbr.rel (%p278) target = $region44
      $region43: #{upconv_forward.1} parent=5 // pred_region
        // Predicated region
        $region45: #{upconv_forward.1} parent=43 // pred_check
          %p281 = pneg %p36
        $region46: #{upconv_forward.1} parent=43 // pred_check_branch
          %283 = sbr.rel (%p281) target = $region48
        $region47: #{upconv_forward.1} parent=43 // pred_region
          %p284 = scmp.lt.s32.totalorder %s16, 3
          %s285 = scalar_select %p284, %s16, 3
          %s286 = smul.addr %s285, 42
          %s287 = smul.addr %s286, 8
          %s288 = scalar_lea.vmem %s0, %s287
        $region48: #{upconv_forward.1} parent=43 // pred_fallthru
          _
      $region44: #{upconv_forward.1} parent=5 // pred_fallthru
        _
      %p289 = scmp.le.s32.totalorder 1, %s16
      %p290 = scmp.lt.s32.totalorder %s16, 5
      %p291 = pnand %p289, %p290
      %p292 = pneg %p291
      // Predicated region
      $region49: #{upconv_forward.1} parent=5 // pred_check
        _
      $region50: #{upconv_forward.1} parent=5 // pred_check_branch
        %294 = sbr.rel (%p291) target = $region52
      $region51: #{upconv_forward.1} parent=5 // pred_region
        %s295 = ssub.s32 %s16, 1
        // Predicated region
        $region53: #{upconv_forward.1} parent=51 // pred_check
          %p296 = pneg %p63
        $region54: #{upconv_forward.1} parent=51 // pred_check_branch
          %298 = sbr.rel (%p296) target = $region56
        $region55: #{upconv_forward.1} parent=51 // pred_region
          %299 = dma.done [#allocation4], 3840
        $region56: #{upconv_forward.1} parent=51 // pred_fallthru
          _
        // Predicated region
        $region57: #{upconv_forward.1} parent=51 // pred_check
          %p300 = pneg %p105
        $region58: #{upconv_forward.1} parent=51 // pred_check_branch
          %302 = sbr.rel (%p300) target = $region60
        $region59: #{upconv_forward.1} parent=51 // pred_region
          %303 = dma.done [#allocation6], 16
        $region60: #{upconv_forward.1} parent=51 // pred_fallthru
          _
        // Predicated region
        $region61: #{upconv_forward.1} parent=51 // pred_check
          %p304 = pneg %p147
        $region62: #{upconv_forward.1} parent=51 // pred_check_branch
          %306 = sbr.rel (%p304) target = $region64
        $region63: #{upconv_forward.1} parent=51 // pred_region
          %307 = dma.done [#allocation6], 16
        $region64: #{upconv_forward.1} parent=51 // pred_fallthru
          _
        %p308 = scmp.lt.s32.totalorder %s21, 3
        %s309 = scalar_select %p308, %s21, 3
        %s310 = smul.addr %s309, 42
        %s311 = smul.addr %s310, 8
        %s312 = scalar_lea.vmem %s0, %s311
        %p313 = pneg %p42
        %p314 = pneg %p39
        %p315 = pneg %p63
        %p316 = pneg %p60
        %p317 = pneg %p84
        %p318 = pneg %p81
        %p319 = pneg %p105
        %p320 = pneg %p102
        %p321 = pneg %p126
        %p322 = pneg %p123
        %p323 = pneg %p147
        %p324 = pneg %p144
        %p325 = pneg %p168
        %p326 = pneg %p165
        %p327 = pneg %p189
        %p328 = pneg %p186
        %p329 = pneg %p215
        %p330 = pneg %p212
        %p331 = scmp.lt.s32.totalorder %s21, 3
        %s332 = scalar_select %p331, %s21, 3
        %s333 = smul.addr %s332, 24
        %s334 = smul.addr %s333, 8
        %s335 = scalar_lea.vmem %s8, %s334
        %p336 = scmp.lt.s32.totalorder %s21, 3
        %s337 = scalar_select %p336, %s21, 3
        %s338 = smul.addr %s337, 42
        %s339 = smul.addr %s338, 8
        %s340 = scalar_lea.vmem %s0, %s339
        %p341 = scmp.lt.s32.totalorder %s21, 3
        %s342 = scalar_select %p341, %s21, 3
        %s343 = smul.addr %s342, 24
        %s344 = smul.addr %s343, 8
        %s345 = scalar_lea.vmem %s8, %s344
        %p346 = scmp.lt.s32.totalorder %s21, 0
        %s347 = ssub.s32 0, %s21
        %s348 = scalar_select %p346, %s347, %s21
        %s349 = sand.u32 %s348, 1
        %s350 = ssub.s32 0, %s349
        %s351 = scalar_select %p346, %s350, %s349
        %p352 = scmp.ne.s32.totalorder %s351, 0
        %p353 = scmp.lt.s32.totalorder %s351, 0
        %p354 = pnand %p353, %p352
        %p355 = pneg %p354
        %s356 = sadd.s32 %s351, 2
        %s357 = scalar_select %p355, %s356, %s351
        %v358 = vld [vmem:[%s340 + $0x10] sm:$0xff]
        %v359 = vld [vmem:[%s340 + $0x18] sm:$0xff]
        %v360 = vld [vmem:[%s340 + $0x20] sm:$0xff]
        %v361 = vld [vmem:[%s340 + $0x28] sm:$0xff]
        %v362 = vld [vmem:[%s340 + $0x30] sm:$0xff]
        %v363 = vld [vmem:[%s340 + $0x38] sm:$0xff]
        %v364 = vld [vmem:[%s340 + $0x40] sm:$0xff]
        %v365 = vld [vmem:[%s340 + $0x48] sm:$0xff]
        %v366 = vld [vmem:[%s340 + $0x50] sm:$0xff]
        %v367 = vld [vmem:[%s340 + $0x58] sm:$0xff]
        %v368 = vld [vmem:[%s340 + $0x60] sm:$0xff]
        %v369 = vld [vmem:[%s340 + $0x68] sm:$0xff]
        %v370 = vld [vmem:[%s340 + $0x70] sm:$0xff]
        %v371 = vld [vmem:[%s340 + $0x78] sm:$0xff]
        %v372 = vld [vmem:[%s340 + $0x80] sm:$0xff]
        %v373 = vld [vmem:[%s340 + $0x88] sm:$0xff]
        %v374 = vld [vmem:[%s340 + $0x90] sm:$0xff]
        %v375 = vld [vmem:[%s340 + $0x98] sm:$0xff]
        %v376 = vld [vmem:[%s340 + $0xa0] sm:$0xff]
        %v377 = vld [vmem:[%s340 + $0xa8] sm:$0xff]
        %v378 = vld [vmem:[%s340 + $0xb0] sm:$0xff]
        %v379 = vld [vmem:[%s340 + $0xb8] sm:$0xff]
        %v380 = vld [vmem:[%s340 + $0xc0] sm:$0xff]
        %v381 = vld [vmem:[%s340 + $0xc8] sm:$0xff]
        %v382 = vld [vmem:[%s340 + $0xd0] sm:$0xff]
        %v383 = vld [vmem:[%s340 + $0xd8] sm:$0xff]
        %v384 = vld [vmem:[%s340 + $0xe0] sm:$0xff]
        %v385 = vld [vmem:[%s340 + $0xe8] sm:$0xff]
        %v386 = vld [vmem:[%s340 + $0xf0] sm:$0xff]
        %v387 = vld [vmem:[%s340 + $0xf8] sm:$0xff]
        %v388 = vld [vmem:[%s340 + $0x100] sm:$0xff]
        %v389 = vld [vmem:[%s340 + $0x108] sm:$0xff]
        %v390 = vld [vmem:[%s340 + $0x110] sm:$0xff]
        %v391 = vld [vmem:[%s340 + $0x118] sm:$0xff]
        %v392 = vld [vmem:[%s340 + $0x120] sm:$0xff]
        %v393 = vld [vmem:[%s340 + $0x128] sm:$0xff]
        %v394 = vld [vmem:[%s340 + $0x130] sm:$0xff]
        %v395 = vld [vmem:[%s340 + $0x138] sm:$0xff]
        %v396 = vld [vmem:[%s2] sm:$0xff]
        %v397 = vld [vmem:[%s2 + $0x8] sm:$0x1]
        %v398 = vld [vmem:[%s4] sm:$0xff]
        %v399 = vld [vmem:[%s4 + $0x8] sm:$0xff]
        %v400 = vld [vmem:[%s4 + $0x10] sm:$0xff]
        %v401 = vld [vmem:[%s4 + $0x18] sm:$0xff]
        %v402 = vld [vmem:[%s4 + $0x20] sm:$0xff]
        %v403 = vld [vmem:[%s4 + $0x28] sm:$0xff]
        %v404 = vld [vmem:[%s4 + $0x30] sm:$0xff]
        %v405 = vld [vmem:[%s4 + $0x38] sm:$0xff]
        %v406 = vld [vmem:[%s4 + $0x40] sm:$0xff]
        %v407 = vld [vmem:[%s4 + $0x48] sm:$0xff]
        %v408 = vld [vmem:[%s4 + $0x50] sm:$0xff]
        %v409 = vld [vmem:[%s4 + $0x58] sm:$0xff]
        %v410 = vld [vmem:[%s4 + $0x60] sm:$0xff]
        %v411 = vld [vmem:[%s4 + $0x68] sm:$0xff]
        %v412 = vld [vmem:[%s4 + $0x70] sm:$0xff]
        %v413 = vld [vmem:[%s4 + $0x78] sm:$0xff]
        %v414 = vld [vmem:[%s4 + $0x80] sm:$0xff]
        %v415 = vld [vmem:[%s4 + $0x88] sm:$0xff]
        %v416 = vld [vmem:[%s4 + $0x90] sm:$0xff]
        %v417 = vld [vmem:[%s4 + $0x98] sm:$0xff]
        %v418 = vld [vmem:[%s4 + $0xa0] sm:$0xff]
        %v419 = vld [vmem:[%s4 + $0xa8] sm:$0xff]
        %v420 = vld [vmem:[%s4 + $0xb0] sm:$0xff]
        %v421 = vld [vmem:[%s4 + $0xb8] sm:$0xff]
        %v422 = vld [vmem:[%s4 + $0xc0] sm:$0xff]
        %v423 = vld [vmem:[%s4 + $0xc8] sm:$0xff]
        %v424 = vld [vmem:[%s4 + $0xd0] sm:$0xff]
        %v425 = vld [vmem:[%s4 + $0xd8] sm:$0xff]
        %v426 = vld [vmem:[%s4 + $0xe0] sm:$0xff]
        %v427 = vld [vmem:[%s4 + $0xe8] sm:$0xff]
        %v428 = vld [vmem:[%s4 + $0xf0] sm:$0xff]
        %v429 = vld [vmem:[%s4 + $0xf8] sm:$0xff]
        %v430 = vld [vmem:[%s4 + $0x100] sm:$0xff]
        %v431 = vld [vmem:[%s4 + $0x108] sm:$0xff]
        %v432 = vld [vmem:[%s4 + $0x110] sm:$0xff]
        %v433 = vld [vmem:[%s4 + $0x118] sm:$0xff]
        %v434 = vld [vmem:[%s6] sm:$0xff]
        %v435 = vld [vmem:[%s6 + $0x8] sm:$0xff]
        %v436 = vld [vmem:[%s6 + $0x10] sm:$0xff]
        %v437 = vld [vmem:[%s6 + $0x18] sm:$0xff]
        %v438 = vld [vmem:[#allocation5] sm:$0x1]
        %v439 = vld [vmem:[#allocation7] sm:$0x1]
        %v440 = vld [vmem:[%s7] sm:$0x1]
        %v441 = vld [vmem:[#allocation3] sm:$0xff]
        %v442 = vld [vmem:[#allocation3 + $0x8] sm:$0xff]
        %v443 = vld [vmem:[#allocation3 + $0x10] sm:$0xff]
        %v444 = vld [vmem:[#allocation3 + $0x18] sm:$0xff]
        %v445 = vld [vmem:[#allocation3 + $0x20] sm:$0xff]
        %v446 = vld [vmem:[#allocation3 + $0x28] sm:$0xff]
        %v447 = vld [vmem:[#allocation3 + $0x30] sm:$0xff]
        %v448 = vld [vmem:[#allocation3 + $0x38] sm:$0xff]
        %v449 = vld [vmem:[#allocation3 + $0x40] sm:$0xff]
        %v450 = vld [vmem:[#allocation3 + $0x48] sm:$0xff]
        %v451 = vld [vmem:[#allocation3 + $0x50] sm:$0xff]
        %v452 = vld [vmem:[#allocation3 + $0x58] sm:$0xff]
        %v453 = vld [vmem:[#allocation3 + $0x60] sm:$0xff]
        %v454 = vld [vmem:[#allocation3 + $0x68] sm:$0xff]
        %v455 = vld [vmem:[#allocation3 + $0x70] sm:$0xff]
        %v456 = vld [vmem:[#allocation3 + $0x78] sm:$0xff]
        %v457 = vld [vmem:[#allocation3 + $0x80] sm:$0xff]
        %v458 = vld [vmem:[#allocation3 + $0x88] sm:$0xff]
        %v459 = vld [vmem:[#allocation3 + $0x90] sm:$0xff]
        %v460 = vld [vmem:[#allocation3 + $0x98] sm:$0xff]
        %v461 = vld [vmem:[#allocation3 + $0xa0] sm:$0xff]
        %v462 = vld [vmem:[#allocation3 + $0xa8] sm:$0xff]
        %v463 = vld [vmem:[#allocation3 + $0xb0] sm:$0xff]
        %v464 = vld [vmem:[#allocation3 + $0xb8] sm:$0xff]
        %v465 = vld [vmem:[#allocation3 + $0xc0] sm:$0xff]
        %v466 = vld [vmem:[#allocation3 + $0xc8] sm:$0xff]
        %v467 = vld [vmem:[#allocation3 + $0xd0] sm:$0xff]
        %v468 = vld [vmem:[#allocation3 + $0xd8] sm:$0xff]
        %v469 = vld [vmem:[#allocation3 + $0xe0] sm:$0xff]
        %v470 = vld [vmem:[#allocation3 + $0xe8] sm:$0xff]
        %472 = vset.pattern.permute.xlu0 0
        %473 = vperm.xlu0 %472, %v358
        %v474 = vpop.permute.xlu0 %473
        %477 = vset.pattern.permute.xlu0 0
        %478 = vperm.xlu0 %477, %v359
        %v479 = vpop.permute.xlu0 %478
        %482 = vset.pattern.permute.xlu0 0
        %483 = vperm.xlu0 %482, %v360
        %v484 = vpop.permute.xlu0 %483
        %487 = vset.pattern.permute.xlu0 0
        %488 = vperm.xlu0 %487, %v361
        %v489 = vpop.permute.xlu0 %488
        %492 = vset.pattern.permute.xlu0 0
        %493 = vperm.xlu0 %492, %v362
        %v494 = vpop.permute.xlu0 %493
        %497 = vset.pattern.permute.xlu0 0
        %498 = vperm.xlu0 %497, %v363
        %v499 = vpop.permute.xlu0 %498
        %502 = vset.pattern.permute.xlu0 0
        %503 = vperm.xlu0 %502, %v364
        %v504 = vpop.permute.xlu0 %503
        %507 = vset.pattern.permute.xlu0 0
        %508 = vperm.xlu0 %507, %v365
        %v509 = vpop.permute.xlu0 %508
        %512 = vset.pattern.permute.xlu0 0
        %513 = vperm.xlu0 %512, %v366
        %v514 = vpop.permute.xlu0 %513
        %517 = vset.pattern.permute.xlu0 0
        %518 = vperm.xlu0 %517, %v367
        %v519 = vpop.permute.xlu0 %518
        %522 = vset.pattern.permute.xlu0 0
        %523 = vperm.xlu0 %522, %v368
        %v524 = vpop.permute.xlu0 %523
        %527 = vset.pattern.permute.xlu0 0
        %528 = vperm.xlu0 %527, %v369
        %v529 = vpop.permute.xlu0 %528
        %532 = vset.pattern.permute.xlu0 0
        %533 = vperm.xlu0 %532, %v370
        %v534 = vpop.permute.xlu0 %533
        %537 = vset.pattern.permute.xlu0 0
        %538 = vperm.xlu0 %537, %v371
        %v539 = vpop.permute.xlu0 %538
        %542 = vset.pattern.permute.xlu0 0
        %543 = vperm.xlu0 %542, %v372
        %v544 = vpop.permute.xlu0 %543
        %547 = vset.pattern.permute.xlu0 0
        %548 = vperm.xlu0 %547, %v373
        %v549 = vpop.permute.xlu0 %548
        %552 = vset.pattern.permute.xlu0 0
        %553 = vperm.xlu0 %552, %v374
        %v554 = vpop.permute.xlu0 %553
        %557 = vset.pattern.permute.xlu0 0
        %558 = vperm.xlu0 %557, %v375
        %v559 = vpop.permute.xlu0 %558
        %562 = vset.pattern.permute.xlu0 0
        %563 = vperm.xlu0 %562, %v376
        %v564 = vpop.permute.xlu0 %563
        %567 = vset.pattern.permute.xlu0 0
        %568 = vperm.xlu0 %567, %v377
        %v569 = vpop.permute.xlu0 %568
        %572 = vset.pattern.permute.xlu0 0
        %573 = vperm.xlu0 %572, %v378
        %v574 = vpop.permute.xlu0 %573
        %577 = vset.pattern.permute.xlu0 0
        %578 = vperm.xlu0 %577, %v379
        %v579 = vpop.permute.xlu0 %578
        %582 = vset.pattern.permute.xlu0 0
        %583 = vperm.xlu0 %582, %v380
        %v584 = vpop.permute.xlu0 %583
        %587 = vset.pattern.permute.xlu0 0
        %588 = vperm.xlu0 %587, %v381
        %v589 = vpop.permute.xlu0 %588
        %592 = vset.pattern.permute.xlu0 0
        %593 = vperm.xlu0 %592, %v382
        %v594 = vpop.permute.xlu0 %593
        %597 = vset.pattern.permute.xlu0 0
        %598 = vperm.xlu0 %597, %v383
        %v599 = vpop.permute.xlu0 %598
        %602 = vset.pattern.permute.xlu0 0
        %603 = vperm.xlu0 %602, %v384
        %v604 = vpop.permute.xlu0 %603
        %607 = vset.pattern.permute.xlu0 0
        %608 = vperm.xlu0 %607, %v385
        %v609 = vpop.permute.xlu0 %608
        %612 = vset.pattern.permute.xlu0 0
        %613 = vperm.xlu0 %612, %v386
        %v614 = vpop.permute.xlu0 %613
        %617 = vset.pattern.permute.xlu0 0
        %618 = vperm.xlu0 %617, %v387
        %v619 = vpop.permute.xlu0 %618
        %622 = vset.pattern.permute.xlu0 0
        %623 = vperm.xlu0 %622, %v388
        %v624 = vpop.permute.xlu0 %623
        %v626 = vlaneseq
        %v627 = vshrl.u32 %v626, 7
        %v628 = vsub.s32 0, %v627
        %v629 = vrot.slane %v396, %v628
        %v630 = vmul.f32 %v474, %v629
        %v631 = vmul.f32 %v479, %v629
        %v632 = vmul.f32 %v484, %v629
        %v633 = vmul.f32 %v489, %v629
        %v634 = vmul.f32 %v494, %v629
        %v635 = vmul.f32 %v499, %v629
        %v636 = vmul.f32 %v504, %v629
        %v637 = vmul.f32 %v509, %v629
        %v638 = vmul.f32 %v514, %v629
        %v639 = vmul.f32 %v519, %v629
        %v640 = vmul.f32 %v524, %v629
        %v641 = vmul.f32 %v529, %v629
        %v642 = vmul.f32 %v534, %v629
        %v643 = vmul.f32 %v539, %v629
        %v644 = vmul.f32 %v544, %v629
        %v645 = vmul.f32 %v549, %v629
        %v646 = vmul.f32 %v554, %v629
        %v647 = vmul.f32 %v559, %v629
        %v648 = vmul.f32 %v564, %v629
        %v649 = vmul.f32 %v569, %v629
        %v650 = vmul.f32 %v574, %v629
        %v651 = vmul.f32 %v579, %v629
        %v652 = vmul.f32 %v584, %v629
        %v653 = vmul.f32 %v589, %v629
        %v654 = vmul.f32 %v594, %v629
        %v655 = vmul.f32 %v599, %v629
        %v656 = vmul.f32 %v604, %v629
        %v657 = vmul.f32 %v609, %v629
        %v658 = vmul.f32 %v614, %v629
        %v659 = vmul.f32 %v619, %v629
        %v660 = vmul.f32 %v624, %v629
        %v661 = vlaneseq
        %v662 = vshrl.u32 %v661, 7
        %v663 = vsub.s32 1, %v662
        %v664 = vrot.slane %v396, %v663
        %v665 = vmul.f32 %v479, %v664
        %v666 = vmul.f32 %v484, %v664
        %v667 = vmul.f32 %v489, %v664
        %v668 = vmul.f32 %v494, %v664
        %v669 = vmul.f32 %v499, %v664
        %v670 = vmul.f32 %v504, %v664
        %v671 = vmul.f32 %v509, %v664
        %v672 = vmul.f32 %v514, %v664
        %v673 = vmul.f32 %v519, %v664
        %v674 = vmul.f32 %v524, %v664
        %v675 = vmul.f32 %v529, %v664
        %v676 = vmul.f32 %v534, %v664
        %v677 = vmul.f32 %v539, %v664
        %v678 = vmul.f32 %v544, %v664
        %v679 = vmul.f32 %v549, %v664
        %v680 = vmul.f32 %v554, %v664
        %v681 = vmul.f32 %v559, %v664
        %v682 = vmul.f32 %v564, %v664
        %v683 = vmul.f32 %v569, %v664
        %v684 = vmul.f32 %v574, %v664
        %v685 = vmul.f32 %v579, %v664
        %v686 = vmul.f32 %v584, %v664
        %v687 = vmul.f32 %v589, %v664
        %v688 = vmul.f32 %v594, %v664
        %v689 = vmul.f32 %v599, %v664
        %v690 = vmul.f32 %v604, %v664
        %v691 = vmul.f32 %v609, %v664
        %v692 = vmul.f32 %v614, %v664
        %v693 = vmul.f32 %v619, %v664
        %v694 = vmul.f32 %v624, %v664
        %vm725 = vcmask 1046528
        %v726 = vrot.slane %v665, 1
        %v727 = vrot.slane %v666, 1
        %v728 = vsel %vm725, %v726, %v727
        %v729 = vrot.slane %v667, 1
        %v730 = vsel %vm725, %v727, %v729
        %v731 = vrot.slane %v668, 1
        %v732 = vsel %vm725, %v729, %v731
        %v733 = vrot.slane %v669, 1
        %v734 = vsel %vm725, %v731, %v733
        %v735 = vrot.slane %v670, 1
        %v736 = vsel %vm725, %v733, %v735
        %v737 = vrot.slane %v671, 1
        %v738 = vsel %vm725, %v735, %v737
        %v739 = vrot.slane %v672, 1
        %v740 = vsel %vm725, %v737, %v739
        %v741 = vrot.slane %v673, 1
        %v742 = vsel %vm725, %v739, %v741
        %v743 = vrot.slane %v674, 1
        %v744 = vsel %vm725, %v741, %v743
        %v745 = vrot.slane %v675, 1
        %v746 = vsel %vm725, %v743, %v745
        %v747 = vrot.slane %v676, 1
        %v748 = vsel %vm725, %v745, %v747
        %v749 = vrot.slane %v677, 1
        %v750 = vsel %vm725, %v747, %v749
        %v751 = vrot.slane %v678, 1
        %v752 = vsel %vm725, %v749, %v751
        %v753 = vrot.slane %v679, 1
        %v754 = vsel %vm725, %v751, %v753
        %v755 = vrot.slane %v680, 1
        %v756 = vsel %vm725, %v753, %v755
        %v757 = vrot.slane %v681, 1
        %v758 = vsel %vm725, %v755, %v757
        %v759 = vrot.slane %v682, 1
        %v760 = vsel %vm725, %v757, %v759
        %v761 = vrot.slane %v683, 1
        %v762 = vsel %vm725, %v759, %v761
        %v763 = vrot.slane %v684, 1
        %v764 = vsel %vm725, %v761, %v763
        %v765 = vrot.slane %v685, 1
        %v766 = vsel %vm725, %v763, %v765
        %v767 = vrot.slane %v686, 1
        %v768 = vsel %vm725, %v765, %v767
        %v769 = vrot.slane %v687, 1
        %v770 = vsel %vm725, %v767, %v769
        %v771 = vrot.slane %v688, 1
        %v772 = vsel %vm725, %v769, %v771
        %v773 = vrot.slane %v689, 1
        %v774 = vsel %vm725, %v771, %v773
        %v775 = vrot.slane %v690, 1
        %v776 = vsel %vm725, %v773, %v775
        %v777 = vrot.slane %v691, 1
        %v778 = vsel %vm725, %v775, %v777
        %v779 = vrot.slane %v692, 1
        %v780 = vsel %vm725, %v777, %v779
        %v781 = vrot.slane %v693, 1
        %v782 = vsel %vm725, %v779, %v781
        %v783 = vrot.slane %v694, 1
        %v784 = vsel %vm725, %v781, %v783
        %v816 = vadd.f32 %v630, %v726
        %v817 = vadd.f32 %v631, %v728
        %v818 = vadd.f32 %v632, %v730
        %v819 = vadd.f32 %v633, %v732
        %v820 = vadd.f32 %v634, %v734
        %v821 = vadd.f32 %v635, %v736
        %v822 = vadd.f32 %v636, %v738
        %v823 = vadd.f32 %v637, %v740
        %v824 = vadd.f32 %v638, %v742
        %v825 = vadd.f32 %v639, %v744
        %v826 = vadd.f32 %v640, %v746
        %v827 = vadd.f32 %v641, %v748
        %v828 = vadd.f32 %v642, %v750
        %v829 = vadd.f32 %v643, %v752
        %v830 = vadd.f32 %v644, %v754
        %v831 = vadd.f32 %v645, %v756
        %v832 = vadd.f32 %v646, %v758
        %v833 = vadd.f32 %v647, %v760
        %v834 = vadd.f32 %v648, %v762
        %v835 = vadd.f32 %v649, %v764
        %v836 = vadd.f32 %v650, %v766
        %v837 = vadd.f32 %v651, %v768
        %v838 = vadd.f32 %v652, %v770
        %v839 = vadd.f32 %v653, %v772
        %v840 = vadd.f32 %v654, %v774
        %v841 = vadd.f32 %v655, %v776
        %v842 = vadd.f32 %v656, %v778
        %v843 = vadd.f32 %v657, %v780
        %v844 = vadd.f32 %v658, %v782
        %v845 = vadd.f32 %v659, %v784
        %v846 = vadd.f32 %v660, %v783
        %848 = vset.pattern.permute.xlu0 0
        %849 = vperm.xlu0 %848, %v389
        %v850 = vpop.permute.xlu0 %849
        %v852 = vlaneseq
        %v853 = vshrl.u32 %v852, 7
        %v854 = vsub.s32 2, %v853
        %v855 = vrot.slane %v396, %v854
        %v856 = vmul.f32 %v479, %v855
        %v857 = vmul.f32 %v484, %v855
        %v858 = vmul.f32 %v489, %v855
        %v859 = vmul.f32 %v494, %v855
        %v860 = vmul.f32 %v499, %v855
        %v861 = vmul.f32 %v504, %v855
        %v862 = vmul.f32 %v509, %v855
        %v863 = vmul.f32 %v514, %v855
        %v864 = vmul.f32 %v519, %v855
        %v865 = vmul.f32 %v524, %v855
        %v866 = vmul.f32 %v529, %v855
        %v867 = vmul.f32 %v534, %v855
        %v868 = vmul.f32 %v539, %v855
        %v869 = vmul.f32 %v544, %v855
        %v870 = vmul.f32 %v549, %v855
        %v871 = vmul.f32 %v554, %v855
        %v872 = vmul.f32 %v559, %v855
        %v873 = vmul.f32 %v564, %v855
        %v874 = vmul.f32 %v569, %v855
        %v875 = vmul.f32 %v574, %v855
        %v876 = vmul.f32 %v579, %v855
        %v877 = vmul.f32 %v584, %v855
        %v878 = vmul.f32 %v589, %v855
        %v879 = vmul.f32 %v594, %v855
        %v880 = vmul.f32 %v599, %v855
        %v881 = vmul.f32 %v604, %v855
        %v882 = vmul.f32 %v609, %v855
        %v883 = vmul.f32 %v614, %v855
        %v884 = vmul.f32 %v619, %v855
        %v885 = vmul.f32 %v624, %v855
        %v886 = vmul.f32 %v850, %v855
        %vm918 = vcmask 1045504
        %v919 = vrot.slane %v856, 2
        %v920 = vrot.slane %v857, 2
        %v921 = vsel %vm918, %v919, %v920
        %v922 = vrot.slane %v858, 2
        %v923 = vsel %vm918, %v920, %v922
        %v924 = vrot.slane %v859, 2
        %v925 = vsel %vm918, %v922, %v924
        %v926 = vrot.slane %v860, 2
        %v927 = vsel %vm918, %v924, %v926
        %v928 = vrot.slane %v861, 2
        %v929 = vsel %vm918, %v926, %v928
        %v930 = vrot.slane %v862, 2
        %v931 = vsel %vm918, %v928, %v930
        %v932 = vrot.slane %v863, 2
        %v933 = vsel %vm918, %v930, %v932
        %v934 = vrot.slane %v864, 2
        %v935 = vsel %vm918, %v932, %v934
        %v936 = vrot.slane %v865, 2
        %v937 = vsel %vm918, %v934, %v936
        %v938 = vrot.slane %v866, 2
        %v939 = vsel %vm918, %v936, %v938
        %v940 = vrot.slane %v867, 2
        %v941 = vsel %vm918, %v938, %v940
        %v942 = vrot.slane %v868, 2
        %v943 = vsel %vm918, %v940, %v942
        %v944 = vrot.slane %v869, 2
        %v945 = vsel %vm918, %v942, %v944
        %v946 = vrot.slane %v870, 2
        %v947 = vsel %vm918, %v944, %v946
        %v948 = vrot.slane %v871, 2
        %v949 = vsel %vm918, %v946, %v948
        %v950 = vrot.slane %v872, 2
        %v951 = vsel %vm918, %v948, %v950
        %v952 = vrot.slane %v873, 2
        %v953 = vsel %vm918, %v950, %v952
        %v954 = vrot.slane %v874, 2
        %v955 = vsel %vm918, %v952, %v954
        %v956 = vrot.slane %v875, 2
        %v957 = vsel %vm918, %v954, %v956
        %v958 = vrot.slane %v876, 2
        %v959 = vsel %vm918, %v956, %v958
        %v960 = vrot.slane %v877, 2
        %v961 = vsel %vm918, %v958, %v960
        %v962 = vrot.slane %v878, 2
        %v963 = vsel %vm918, %v960, %v962
        %v964 = vrot.slane %v879, 2
        %v965 = vsel %vm918, %v962, %v964
        %v966 = vrot.slane %v880, 2
        %v967 = vsel %vm918, %v964, %v966
        %v968 = vrot.slane %v881, 2
        %v969 = vsel %vm918, %v966, %v968
        %v970 = vrot.slane %v882, 2
        %v971 = vsel %vm918, %v968, %v970
        %v972 = vrot.slane %v883, 2
        %v973 = vsel %vm918, %v970, %v972
        %v974 = vrot.slane %v884, 2
        %v975 = vsel %vm918, %v972, %v974
        %v976 = vrot.slane %v885, 2
        %v977 = vsel %vm918, %v974, %v976
        %v978 = vrot.slane %v886, 2
        %v979 = vsel %vm918, %v976, %v978
        %v1011 = vadd.f32 %v816, %v919
        %v1012 = vadd.f32 %v817, %v921
        %v1013 = vadd.f32 %v818, %v923
        %v1014 = vadd.f32 %v819, %v925
        %v1015 = vadd.f32 %v820, %v927
        %v1016 = vadd.f32 %v821, %v929
        %v1017 = vadd.f32 %v822, %v931
        %v1018 = vadd.f32 %v823, %v933
        %v1019 = vadd.f32 %v824, %v935
        %v1020 = vadd.f32 %v825, %v937
        %v1021 = vadd.f32 %v826, %v939
        %v1022 = vadd.f32 %v827, %v941
        %v1023 = vadd.f32 %v828, %v943
        %v1024 = vadd.f32 %v829, %v945
        %v1025 = vadd.f32 %v830, %v947
        %v1026 = vadd.f32 %v831, %v949
        %v1027 = vadd.f32 %v832, %v951
        %v1028 = vadd.f32 %v833, %v953
        %v1029 = vadd.f32 %v834, %v955
        %v1030 = vadd.f32 %v835, %v957
        %v1031 = vadd.f32 %v836, %v959
        %v1032 = vadd.f32 %v837, %v961
        %v1033 = vadd.f32 %v838, %v963
        %v1034 = vadd.f32 %v839, %v965
        %v1035 = vadd.f32 %v840, %v967
        %v1036 = vadd.f32 %v841, %v969
        %v1037 = vadd.f32 %v842, %v971
        %v1038 = vadd.f32 %v843, %v973
        %v1039 = vadd.f32 %v844, %v975
        %v1040 = vadd.f32 %v845, %v977
        %v1041 = vadd.f32 %v846, %v979
        %1043 = vset.pattern.permute.xlu0 0
        %1044 = vperm.xlu0 %1043, %v390
        %v1045 = vpop.permute.xlu0 %1044
        %1048 = vset.pattern.permute.xlu0 0
        %1049 = vperm.xlu0 %1048, %v391
        %v1050 = vpop.permute.xlu0 %1049
        %v1052 = vlaneseq
        %v1053 = vshrl.u32 %v1052, 7
        %v1054 = vsub.s32 3, %v1053
        %v1055 = vrot.slane %v396, %v1054
        %v1056 = vmul.f32 %v489, %v1055
        %v1057 = vmul.f32 %v494, %v1055
        %v1058 = vmul.f32 %v499, %v1055
        %v1059 = vmul.f32 %v504, %v1055
        %v1060 = vmul.f32 %v509, %v1055
        %v1061 = vmul.f32 %v514, %v1055
        %v1062 = vmul.f32 %v519, %v1055
        %v1063 = vmul.f32 %v524, %v1055
        %v1064 = vmul.f32 %v529, %v1055
        %v1065 = vmul.f32 %v534, %v1055
        %v1066 = vmul.f32 %v539, %v1055
        %v1067 = vmul.f32 %v544, %v1055
        %v1068 = vmul.f32 %v549, %v1055
        %v1069 = vmul.f32 %v554, %v1055
        %v1070 = vmul.f32 %v559, %v1055
        %v1071 = vmul.f32 %v564, %v1055
        %v1072 = vmul.f32 %v569, %v1055
        %v1073 = vmul.f32 %v574, %v1055
        %v1074 = vmul.f32 %v579, %v1055
        %v1075 = vmul.f32 %v584, %v1055
        %v1076 = vmul.f32 %v589, %v1055
        %v1077 = vmul.f32 %v594, %v1055
        %v1078 = vmul.f32 %v599, %v1055
        %v1079 = vmul.f32 %v604, %v1055
        %v1080 = vmul.f32 %v609, %v1055
        %v1081 = vmul.f32 %v614, %v1055
        %v1082 = vmul.f32 %v619, %v1055
        %v1083 = vmul.f32 %v624, %v1055
        %v1084 = vmul.f32 %v850, %v1055
        %v1085 = vmul.f32 %v1045, %v1055
        %v1086 = vmul.f32 %v1050, %v1055
        %v1087 = vadd.f32 %v1011, %v1056
        %v1088 = vadd.f32 %v1012, %v1057
        %v1089 = vadd.f32 %v1013, %v1058
        %v1090 = vadd.f32 %v1014, %v1059
        %v1091 = vadd.f32 %v1015, %v1060
        %v1092 = vadd.f32 %v1016, %v1061
        %v1093 = vadd.f32 %v1017, %v1062
        %v1094 = vadd.f32 %v1018, %v1063
        %v1095 = vadd.f32 %v1019, %v1064
        %v1096 = vadd.f32 %v1020, %v1065
        %v1097 = vadd.f32 %v1021, %v1066
        %v1098 = vadd.f32 %v1022, %v1067
        %v1099 = vadd.f32 %v1023, %v1068
        %v1100 = vadd.f32 %v1024, %v1069
        %v1101 = vadd.f32 %v1025, %v1070
        %v1102 = vadd.f32 %v1026, %v1071
        %v1103 = vadd.f32 %v1027, %v1072
        %v1104 = vadd.f32 %v1028, %v1073
        %v1105 = vadd.f32 %v1029, %v1074
        %v1106 = vadd.f32 %v1030, %v1075
        %v1107 = vadd.f32 %v1031, %v1076
        %v1108 = vadd.f32 %v1032, %v1077
        %v1109 = vadd.f32 %v1033, %v1078
        %v1110 = vadd.f32 %v1034, %v1079
        %v1111 = vadd.f32 %v1035, %v1080
        %v1112 = vadd.f32 %v1036, %v1081
        %v1113 = vadd.f32 %v1037, %v1082
        %v1114 = vadd.f32 %v1038, %v1083
        %v1115 = vadd.f32 %v1039, %v1084
        %v1116 = vadd.f32 %v1040, %v1085
        %v1117 = vadd.f32 %v1041, %v1086
        %v1118 = vlaneseq
        %v1119 = vshrl.u32 %v1118, 7
        %v1120 = vsub.s32 4, %v1119
        %v1121 = vrot.slane %v396, %v1120
        %v1122 = vmul.f32 %v494, %v1121
        %v1123 = vmul.f32 %v499, %v1121
        %v1124 = vmul.f32 %v504, %v1121
        %v1125 = vmul.f32 %v509, %v1121
        %v1126 = vmul.f32 %v514, %v1121
        %v1127 = vmul.f32 %v519, %v1121
        %v1128 = vmul.f32 %v524, %v1121
        %v1129 = vmul.f32 %v529, %v1121
        %v1130 = vmul.f32 %v534, %v1121
        %v1131 = vmul.f32 %v539, %v1121
        %v1132 = vmul.f32 %v544, %v1121
        %v1133 = vmul.f32 %v549, %v1121
        %v1134 = vmul.f32 %v554, %v1121
        %v1135 = vmul.f32 %v559, %v1121
        %v1136 = vmul.f32 %v564, %v1121
        %v1137 = vmul.f32 %v569, %v1121
        %v1138 = vmul.f32 %v574, %v1121
        %v1139 = vmul.f32 %v579, %v1121
        %v1140 = vmul.f32 %v584, %v1121
        %v1141 = vmul.f32 %v589, %v1121
        %v1142 = vmul.f32 %v594, %v1121
        %v1143 = vmul.f32 %v599, %v1121
        %v1144 = vmul.f32 %v604, %v1121
        %v1145 = vmul.f32 %v609, %v1121
        %v1146 = vmul.f32 %v614, %v1121
        %v1147 = vmul.f32 %v619, %v1121
        %v1148 = vmul.f32 %v624, %v1121
        %v1149 = vmul.f32 %v850, %v1121
        %v1150 = vmul.f32 %v1045, %v1121
        %v1151 = vmul.f32 %v1050, %v1121
        %v1182 = vrot.slane %v1122, 1
        %v1183 = vrot.slane %v1123, 1
        %v1184 = vsel %vm725, %v1182, %v1183
        %v1185 = vrot.slane %v1124, 1
        %v1186 = vsel %vm725, %v1183, %v1185
        %v1187 = vrot.slane %v1125, 1
        %v1188 = vsel %vm725, %v1185, %v1187
        %v1189 = vrot.slane %v1126, 1
        %v1190 = vsel %vm725, %v1187, %v1189
        %v1191 = vrot.slane %v1127, 1
        %v1192 = vsel %vm725, %v1189, %v1191
        %v1193 = vrot.slane %v1128, 1
        %v1194 = vsel %vm725, %v1191, %v1193
        %v1195 = vrot.slane %v1129, 1
        %v1196 = vsel %vm725, %v1193, %v1195
        %v1197 = vrot.slane %v1130, 1
        %v1198 = vsel %vm725, %v1195, %v1197
        %v1199 = vrot.slane %v1131, 1
        %v1200 = vsel %vm725, %v1197, %v1199
        %v1201 = vrot.slane %v1132, 1
        %v1202 = vsel %vm725, %v1199, %v1201
        %v1203 = vrot.slane %v1133, 1
        %v1204 = vsel %vm725, %v1201, %v1203
        %v1205 = vrot.slane %v1134, 1
        %v1206 = vsel %vm725, %v1203, %v1205
        %v1207 = vrot.slane %v1135, 1
        %v1208 = vsel %vm725, %v1205, %v1207
        %v1209 = vrot.slane %v1136, 1
        %v1210 = vsel %vm725, %v1207, %v1209
        %v1211 = vrot.slane %v1137, 1
        %v1212 = vsel %vm725, %v1209, %v1211
        %v1213 = vrot.slane %v1138, 1
        %v1214 = vsel %vm725, %v1211, %v1213
        %v1215 = vrot.slane %v1139, 1
        %v1216 = vsel %vm725, %v1213, %v1215
        %v1217 = vrot.slane %v1140, 1
        %v1218 = vsel %vm725, %v1215, %v1217
        %v1219 = vrot.slane %v1141, 1
        %v1220 = vsel %vm725, %v1217, %v1219
        %v1221 = vrot.slane %v1142, 1
        %v1222 = vsel %vm725, %v1219, %v1221
        %v1223 = vrot.slane %v1143, 1
        %v1224 = vsel %vm725, %v1221, %v1223
        %v1225 = vrot.slane %v1144, 1
        %v1226 = vsel %vm725, %v1223, %v1225
        %v1227 = vrot.slane %v1145, 1
        %v1228 = vsel %vm725, %v1225, %v1227
        %v1229 = vrot.slane %v1146, 1
        %v1230 = vsel %vm725, %v1227, %v1229
        %v1231 = vrot.slane %v1147, 1
        %v1232 = vsel %vm725, %v1229, %v1231
        %v1233 = vrot.slane %v1148, 1
        %v1234 = vsel %vm725, %v1231, %v1233
        %v1235 = vrot.slane %v1149, 1
        %v1236 = vsel %vm725, %v1233, %v1235
        %v1237 = vrot.slane %v1150, 1
        %v1238 = vsel %vm725, %v1235, %v1237
        %v1239 = vrot.slane %v1151, 1
        %v1240 = vsel %vm725, %v1237, %v1239
        %v1272 = vadd.f32 %v1087, %v1182
        %v1273 = vadd.f32 %v1088, %v1184
        %v1274 = vadd.f32 %v1089, %v1186
        %v1275 = vadd.f32 %v1090, %v1188
        %v1276 = vadd.f32 %v1091, %v1190
        %v1277 = vadd.f32 %v1092, %v1192
        %v1278 = vadd.f32 %v1093, %v1194
        %v1279 = vadd.f32 %v1094, %v1196
        %v1280 = vadd.f32 %v1095, %v1198
        %v1281 = vadd.f32 %v1096, %v1200
        %v1282 = vadd.f32 %v1097, %v1202
        %v1283 = vadd.f32 %v1098, %v1204
        %v1284 = vadd.f32 %v1099, %v1206
        %v1285 = vadd.f32 %v1100, %v1208
        %v1286 = vadd.f32 %v1101, %v1210
        %v1287 = vadd.f32 %v1102, %v1212
        %v1288 = vadd.f32 %v1103, %v1214
        %v1289 = vadd.f32 %v1104, %v1216
        %v1290 = vadd.f32 %v1105, %v1218
        %v1291 = vadd.f32 %v1106, %v1220
        %v1292 = vadd.f32 %v1107, %v1222
        %v1293 = vadd.f32 %v1108, %v1224
        %v1294 = vadd.f32 %v1109, %v1226
        %v1295 = vadd.f32 %v1110, %v1228
        %v1296 = vadd.f32 %v1111, %v1230
        %v1297 = vadd.f32 %v1112, %v1232
        %v1298 = vadd.f32 %v1113, %v1234
        %v1299 = vadd.f32 %v1114, %v1236
        %v1300 = vadd.f32 %v1115, %v1238
        %v1301 = vadd.f32 %v1116, %v1240
        %v1302 = vadd.f32 %v1117, %v1239
        %1304 = vset.pattern.permute.xlu0 0
        %1305 = vperm.xlu0 %1304, %v392
        %v1306 = vpop.permute.xlu0 %1305
        %v1308 = vlaneseq
        %v1309 = vshrl.u32 %v1308, 7
        %v1310 = vsub.s32 5, %v1309
        %v1311 = vrot.slane %v396, %v1310
        %v1312 = vmul.f32 %v494, %v1311
        %v1313 = vmul.f32 %v499, %v1311
        %v1314 = vmul.f32 %v504, %v1311
        %v1315 = vmul.f32 %v509, %v1311
        %v1316 = vmul.f32 %v514, %v1311
        %v1317 = vmul.f32 %v519, %v1311
        %v1318 = vmul.f32 %v524, %v1311
        %v1319 = vmul.f32 %v529, %v1311
        %v1320 = vmul.f32 %v534, %v1311
        %v1321 = vmul.f32 %v539, %v1311
        %v1322 = vmul.f32 %v544, %v1311
        %v1323 = vmul.f32 %v549, %v1311
        %v1324 = vmul.f32 %v554, %v1311
        %v1325 = vmul.f32 %v559, %v1311
        %v1326 = vmul.f32 %v564, %v1311
        %v1327 = vmul.f32 %v569, %v1311
        %v1328 = vmul.f32 %v574, %v1311
        %v1329 = vmul.f32 %v579, %v1311
        %v1330 = vmul.f32 %v584, %v1311
        %v1331 = vmul.f32 %v589, %v1311
        %v1332 = vmul.f32 %v594, %v1311
        %v1333 = vmul.f32 %v599, %v1311
        %v1334 = vmul.f32 %v604, %v1311
        %v1335 = vmul.f32 %v609, %v1311
        %v1336 = vmul.f32 %v614, %v1311
        %v1337 = vmul.f32 %v619, %v1311
        %v1338 = vmul.f32 %v624, %v1311
        %v1339 = vmul.f32 %v850, %v1311
        %v1340 = vmul.f32 %v1045, %v1311
        %v1341 = vmul.f32 %v1050, %v1311
        %v1342 = vmul.f32 %v1306, %v1311
        %v1374 = vrot.slane %v1312, 2
        %v1375 = vrot.slane %v1313, 2
        %v1376 = vsel %vm918, %v1374, %v1375
        %v1377 = vrot.slane %v1314, 2
        %v1378 = vsel %vm918, %v1375, %v1377
        %v1379 = vrot.slane %v1315, 2
        %v1380 = vsel %vm918, %v1377, %v1379
        %v1381 = vrot.slane %v1316, 2
        %v1382 = vsel %vm918, %v1379, %v1381
        %v1383 = vrot.slane %v1317, 2
        %v1384 = vsel %vm918, %v1381, %v1383
        %v1385 = vrot.slane %v1318, 2
        %v1386 = vsel %vm918, %v1383, %v1385
        %v1387 = vrot.slane %v1319, 2
        %v1388 = vsel %vm918, %v1385, %v1387
        %v1389 = vrot.slane %v1320, 2
        %v1390 = vsel %vm918, %v1387, %v1389
        %v1391 = vrot.slane %v1321, 2
        %v1392 = vsel %vm918, %v1389, %v1391
        %v1393 = vrot.slane %v1322, 2
        %v1394 = vsel %vm918, %v1391, %v1393
        %v1395 = vrot.slane %v1323, 2
        %v1396 = vsel %vm918, %v1393, %v1395
        %v1397 = vrot.slane %v1324, 2
        %v1398 = vsel %vm918, %v1395, %v1397
        %v1399 = vrot.slane %v1325, 2
        %v1400 = vsel %vm918, %v1397, %v1399
        %v1401 = vrot.slane %v1326, 2
        %v1402 = vsel %vm918, %v1399, %v1401
        %v1403 = vrot.slane %v1327, 2
        %v1404 = vsel %vm918, %v1401, %v1403
        %v1405 = vrot.slane %v1328, 2
        %v1406 = vsel %vm918, %v1403, %v1405
        %v1407 = vrot.slane %v1329, 2
        %v1408 = vsel %vm918, %v1405, %v1407
        %v1409 = vrot.slane %v1330, 2
        %v1410 = vsel %vm918, %v1407, %v1409
        %v1411 = vrot.slane %v1331, 2
        %v1412 = vsel %vm918, %v1409, %v1411
        %v1413 = vrot.slane %v1332, 2
        %v1414 = vsel %vm918, %v1411, %v1413
        %v1415 = vrot.slane %v1333, 2
        %v1416 = vsel %vm918, %v1413, %v1415
        %v1417 = vrot.slane %v1334, 2
        %v1418 = vsel %vm918, %v1415, %v1417
        %v1419 = vrot.slane %v1335, 2
        %v1420 = vsel %vm918, %v1417, %v1419
        %v1421 = vrot.slane %v1336, 2
        %v1422 = vsel %vm918, %v1419, %v1421
        %v1423 = vrot.slane %v1337, 2
        %v1424 = vsel %vm918, %v1421, %v1423
        %v1425 = vrot.slane %v1338, 2
        %v1426 = vsel %vm918, %v1423, %v1425
        %v1427 = vrot.slane %v1339, 2
        %v1428 = vsel %vm918, %v1425, %v1427
        %v1429 = vrot.slane %v1340, 2
        %v1430 = vsel %vm918, %v1427, %v1429
        %v1431 = vrot.slane %v1341, 2
        %v1432 = vsel %vm918, %v1429, %v1431
        %v1433 = vrot.slane %v1342, 2
        %v1434 = vsel %vm918, %v1431, %v1433
        %v1466 = vadd.f32 %v1272, %v1374
        %v1467 = vadd.f32 %v1273, %v1376
        %v1468 = vadd.f32 %v1274, %v1378
        %v1469 = vadd.f32 %v1275, %v1380
        %v1470 = vadd.f32 %v1276, %v1382
        %v1471 = vadd.f32 %v1277, %v1384
        %v1472 = vadd.f32 %v1278, %v1386
        %v1473 = vadd.f32 %v1279, %v1388
        %v1474 = vadd.f32 %v1280, %v1390
        %v1475 = vadd.f32 %v1281, %v1392
        %v1476 = vadd.f32 %v1282, %v1394
        %v1477 = vadd.f32 %v1283, %v1396
        %v1478 = vadd.f32 %v1284, %v1398
        %v1479 = vadd.f32 %v1285, %v1400
        %v1480 = vadd.f32 %v1286, %v1402
        %v1481 = vadd.f32 %v1287, %v1404
        %v1482 = vadd.f32 %v1288, %v1406
        %v1483 = vadd.f32 %v1289, %v1408
        %v1484 = vadd.f32 %v1290, %v1410
        %v1485 = vadd.f32 %v1291, %v1412
        %v1486 = vadd.f32 %v1292, %v1414
        %v1487 = vadd.f32 %v1293, %v1416
        %v1488 = vadd.f32 %v1294, %v1418
        %v1489 = vadd.f32 %v1295, %v1420
        %v1490 = vadd.f32 %v1296, %v1422
        %v1491 = vadd.f32 %v1297, %v1424
        %v1492 = vadd.f32 %v1298, %v1426
        %v1493 = vadd.f32 %v1299, %v1428
        %v1494 = vadd.f32 %v1300, %v1430
        %v1495 = vadd.f32 %v1301, %v1432
        %v1496 = vadd.f32 %v1302, %v1434
        %1498 = vset.pattern.permute.xlu0 0
        %1499 = vperm.xlu0 %1498, %v393
        %v1500 = vpop.permute.xlu0 %1499
        %1503 = vset.pattern.permute.xlu0 0
        %1504 = vperm.xlu0 %1503, %v394
        %v1505 = vpop.permute.xlu0 %1504
        %v1507 = vlaneseq
        %v1508 = vshrl.u32 %v1507, 7
        %v1509 = vsub.s32 6, %v1508
        %v1510 = vrot.slane %v396, %v1509
        %v1511 = vmul.f32 %v504, %v1510
        %v1512 = vmul.f32 %v509, %v1510
        %v1513 = vmul.f32 %v514, %v1510
        %v1514 = vmul.f32 %v519, %v1510
        %v1515 = vmul.f32 %v524, %v1510
        %v1516 = vmul.f32 %v529, %v1510
        %v1517 = vmul.f32 %v534, %v1510
        %v1518 = vmul.f32 %v539, %v1510
        %v1519 = vmul.f32 %v544, %v1510
        %v1520 = vmul.f32 %v549, %v1510
        %v1521 = vmul.f32 %v554, %v1510
        %v1522 = vmul.f32 %v559, %v1510
        %v1523 = vmul.f32 %v564, %v1510
        %v1524 = vmul.f32 %v569, %v1510
        %v1525 = vmul.f32 %v574, %v1510
        %v1526 = vmul.f32 %v579, %v1510
        %v1527 = vmul.f32 %v584, %v1510
        %v1528 = vmul.f32 %v589, %v1510
        %v1529 = vmul.f32 %v594, %v1510
        %v1530 = vmul.f32 %v599, %v1510
        %v1531 = vmul.f32 %v604, %v1510
        %v1532 = vmul.f32 %v609, %v1510
        %v1533 = vmul.f32 %v614, %v1510
        %v1534 = vmul.f32 %v619, %v1510
        %v1535 = vmul.f32 %v624, %v1510
        %v1536 = vmul.f32 %v850, %v1510
        %v1537 = vmul.f32 %v1045, %v1510
        %v1538 = vmul.f32 %v1050, %v1510
        %v1539 = vmul.f32 %v1306, %v1510
        %v1540 = vmul.f32 %v1500, %v1510
        %v1541 = vmul.f32 %v1505, %v1510
        %v1542 = vadd.f32 %v1466, %v1511
        %v1543 = vadd.f32 %v1467, %v1512
        %v1544 = vadd.f32 %v1468, %v1513
        %v1545 = vadd.f32 %v1469, %v1514
        %v1546 = vadd.f32 %v1470, %v1515
        %v1547 = vadd.f32 %v1471, %v1516
        %v1548 = vadd.f32 %v1472, %v1517
        %v1549 = vadd.f32 %v1473, %v1518
        %v1550 = vadd.f32 %v1474, %v1519
        %v1551 = vadd.f32 %v1475, %v1520
        %v1552 = vadd.f32 %v1476, %v1521
        %v1553 = vadd.f32 %v1477, %v1522
        %v1554 = vadd.f32 %v1478, %v1523
        %v1555 = vadd.f32 %v1479, %v1524
        %v1556 = vadd.f32 %v1480, %v1525
        %v1557 = vadd.f32 %v1481, %v1526
        %v1558 = vadd.f32 %v1482, %v1527
        %v1559 = vadd.f32 %v1483, %v1528
        %v1560 = vadd.f32 %v1484, %v1529
        %v1561 = vadd.f32 %v1485, %v1530
        %v1562 = vadd.f32 %v1486, %v1531
        %v1563 = vadd.f32 %v1487, %v1532
        %v1564 = vadd.f32 %v1488, %v1533
        %v1565 = vadd.f32 %v1489, %v1534
        %v1566 = vadd.f32 %v1490, %v1535
        %v1567 = vadd.f32 %v1491, %v1536
        %v1568 = vadd.f32 %v1492, %v1537
        %v1569 = vadd.f32 %v1493, %v1538
        %v1570 = vadd.f32 %v1494, %v1539
        %v1571 = vadd.f32 %v1495, %v1540
        %v1572 = vadd.f32 %v1496, %v1541
        %v1573 = vlaneseq
        %v1574 = vshrl.u32 %v1573, 7
        %v1575 = vsub.s32 7, %v1574
        %v1576 = vrot.slane %v396, %v1575
        %v1577 = vmul.f32 %v509, %v1576
        %v1578 = vmul.f32 %v514, %v1576
        %v1579 = vmul.f32 %v519, %v1576
        %v1580 = vmul.f32 %v524, %v1576
        %v1581 = vmul.f32 %v529, %v1576
        %v1582 = vmul.f32 %v534, %v1576
        %v1583 = vmul.f32 %v539, %v1576
        %v1584 = vmul.f32 %v544, %v1576
        %v1585 = vmul.f32 %v549, %v1576
        %v1586 = vmul.f32 %v554, %v1576
        %v1587 = vmul.f32 %v559, %v1576
        %v1588 = vmul.f32 %v564, %v1576
        %v1589 = vmul.f32 %v569, %v1576
        %v1590 = vmul.f32 %v574, %v1576
        %v1591 = vmul.f32 %v579, %v1576
        %v1592 = vmul.f32 %v584, %v1576
        %v1593 = vmul.f32 %v589, %v1576
        %v1594 = vmul.f32 %v594, %v1576
        %v1595 = vmul.f32 %v599, %v1576
        %v1596 = vmul.f32 %v604, %v1576
        %v1597 = vmul.f32 %v609, %v1576
        %v1598 = vmul.f32 %v614, %v1576
        %v1599 = vmul.f32 %v619, %v1576
        %v1600 = vmul.f32 %v624, %v1576
        %v1601 = vmul.f32 %v850, %v1576
        %v1602 = vmul.f32 %v1045, %v1576
        %v1603 = vmul.f32 %v1050, %v1576
        %v1604 = vmul.f32 %v1306, %v1576
        %v1605 = vmul.f32 %v1500, %v1576
        %v1606 = vmul.f32 %v1505, %v1576
        %v1637 = vrot.slane %v1577, 1
        %v1638 = vrot.slane %v1578, 1
        %v1639 = vsel %vm725, %v1637, %v1638
        %v1640 = vrot.slane %v1579, 1
        %v1641 = vsel %vm725, %v1638, %v1640
        %v1642 = vrot.slane %v1580, 1
        %v1643 = vsel %vm725, %v1640, %v1642
        %v1644 = vrot.slane %v1581, 1
        %v1645 = vsel %vm725, %v1642, %v1644
        %v1646 = vrot.slane %v1582, 1
        %v1647 = vsel %vm725, %v1644, %v1646
        %v1648 = vrot.slane %v1583, 1
        %v1649 = vsel %vm725, %v1646, %v1648
        %v1650 = vrot.slane %v1584, 1
        %v1651 = vsel %vm725, %v1648, %v1650
        %v1652 = vrot.slane %v1585, 1
        %v1653 = vsel %vm725, %v1650, %v1652
        %v1654 = vrot.slane %v1586, 1
        %v1655 = vsel %vm725, %v1652, %v1654
        %v1656 = vrot.slane %v1587, 1
        %v1657 = vsel %vm725, %v1654, %v1656
        %v1658 = vrot.slane %v1588, 1
        %v1659 = vsel %vm725, %v1656, %v1658
        %v1660 = vrot.slane %v1589, 1
        %v1661 = vsel %vm725, %v1658, %v1660
        %v1662 = vrot.slane %v1590, 1
        %v1663 = vsel %vm725, %v1660, %v1662
        %v1664 = vrot.slane %v1591, 1
        %v1665 = vsel %vm725, %v1662, %v1664
        %v1666 = vrot.slane %v1592, 1
        %v1667 = vsel %vm725, %v1664, %v1666
        %v1668 = vrot.slane %v1593, 1
        %v1669 = vsel %vm725, %v1666, %v1668
        %v1670 = vrot.slane %v1594, 1
        %v1671 = vsel %vm725, %v1668, %v1670
        %v1672 = vrot.slane %v1595, 1
        %v1673 = vsel %vm725, %v1670, %v1672
        %v1674 = vrot.slane %v1596, 1
        %v1675 = vsel %vm725, %v1672, %v1674
        %v1676 = vrot.slane %v1597, 1
        %v1677 = vsel %vm725, %v1674, %v1676
        %v1678 = vrot.slane %v1598, 1
        %v1679 = vsel %vm725, %v1676, %v1678
        %v1680 = vrot.slane %v1599, 1
        %v1681 = vsel %vm725, %v1678, %v1680
        %v1682 = vrot.slane %v1600, 1
        %v1683 = vsel %vm725, %v1680, %v1682
        %v1684 = vrot.slane %v1601, 1
        %v1685 = vsel %vm725, %v1682, %v1684
        %v1686 = vrot.slane %v1602, 1
        %v1687 = vsel %vm725, %v1684, %v1686
        %v1688 = vrot.slane %v1603, 1
        %v1689 = vsel %vm725, %v1686, %v1688
        %v1690 = vrot.slane %v1604, 1
        %v1691 = vsel %vm725, %v1688, %v1690
        %v1692 = vrot.slane %v1605, 1
        %v1693 = vsel %vm725, %v1690, %v1692
        %v1694 = vrot.slane %v1606, 1
        %v1695 = vsel %vm725, %v1692, %v1694
        %v1727 = vadd.f32 %v1542, %v1637
        %v1728 = vadd.f32 %v1543, %v1639
        %v1729 = vadd.f32 %v1544, %v1641
        %v1730 = vadd.f32 %v1545, %v1643
        %v1731 = vadd.f32 %v1546, %v1645
        %v1732 = vadd.f32 %v1547, %v1647
        %v1733 = vadd.f32 %v1548, %v1649
        %v1734 = vadd.f32 %v1549, %v1651
        %v1735 = vadd.f32 %v1550, %v1653
        %v1736 = vadd.f32 %v1551, %v1655
        %v1737 = vadd.f32 %v1552, %v1657
        %v1738 = vadd.f32 %v1553, %v1659
        %v1739 = vadd.f32 %v1554, %v1661
        %v1740 = vadd.f32 %v1555, %v1663
        %v1741 = vadd.f32 %v1556, %v1665
        %v1742 = vadd.f32 %v1557, %v1667
        %v1743 = vadd.f32 %v1558, %v1669
        %v1744 = vadd.f32 %v1559, %v1671
        %v1745 = vadd.f32 %v1560, %v1673
        %v1746 = vadd.f32 %v1561, %v1675
        %v1747 = vadd.f32 %v1562, %v1677
        %v1748 = vadd.f32 %v1563, %v1679
        %v1749 = vadd.f32 %v1564, %v1681
        %v1750 = vadd.f32 %v1565, %v1683
        %v1751 = vadd.f32 %v1566, %v1685
        %v1752 = vadd.f32 %v1567, %v1687
        %v1753 = vadd.f32 %v1568, %v1689
        %v1754 = vadd.f32 %v1569, %v1691
        %v1755 = vadd.f32 %v1570, %v1693
        %v1756 = vadd.f32 %v1571, %v1695
        %v1757 = vadd.f32 %v1572, %v1694
        %1759 = vset.pattern.permute.xlu0 0
        %1760 = vperm.xlu0 %1759, %v395
        %v1761 = vpop.permute.xlu0 %1760
        %v1763 = vlaneseq
        %v1764 = vshrl.u32 %v1763, 7
        %v1765 = vsub.s32 0, %v1764
        %v1766 = vrot.slane %v397, %v1765
        %v1767 = vmul.f32 %v509, %v1766
        %v1768 = vmul.f32 %v514, %v1766
        %v1769 = vmul.f32 %v519, %v1766
        %v1770 = vmul.f32 %v524, %v1766
        %v1771 = vmul.f32 %v529, %v1766
        %v1772 = vmul.f32 %v534, %v1766
        %v1773 = vmul.f32 %v539, %v1766
        %v1774 = vmul.f32 %v544, %v1766
        %v1775 = vmul.f32 %v549, %v1766
        %v1776 = vmul.f32 %v554, %v1766
        %v1777 = vmul.f32 %v559, %v1766
        %v1778 = vmul.f32 %v564, %v1766
        %v1779 = vmul.f32 %v569, %v1766
        %v1780 = vmul.f32 %v574, %v1766
        %v1781 = vmul.f32 %v579, %v1766
        %v1782 = vmul.f32 %v584, %v1766
        %v1783 = vmul.f32 %v589, %v1766
        %v1784 = vmul.f32 %v594, %v1766
        %v1785 = vmul.f32 %v599, %v1766
        %v1786 = vmul.f32 %v604, %v1766
        %v1787 = vmul.f32 %v609, %v1766
        %v1788 = vmul.f32 %v614, %v1766
        %v1789 = vmul.f32 %v619, %v1766
        %v1790 = vmul.f32 %v624, %v1766
        %v1791 = vmul.f32 %v850, %v1766
        %v1792 = vmul.f32 %v1045, %v1766
        %v1793 = vmul.f32 %v1050, %v1766
        %v1794 = vmul.f32 %v1306, %v1766
        %v1795 = vmul.f32 %v1500, %v1766
        %v1796 = vmul.f32 %v1505, %v1766
        %v1797 = vmul.f32 %v1761, %v1766
        %v1829 = vrot.slane %v1767, 2
        %v1830 = vrot.slane %v1768, 2
        %v1831 = vsel %vm918, %v1829, %v1830
        %v1832 = vrot.slane %v1769, 2
        %v1833 = vsel %vm918, %v1830, %v1832
        %v1834 = vrot.slane %v1770, 2
        %v1835 = vsel %vm918, %v1832, %v1834
        %v1836 = vrot.slane %v1771, 2
        %v1837 = vsel %vm918, %v1834, %v1836
        %v1838 = vrot.slane %v1772, 2
        %v1839 = vsel %vm918, %v1836, %v1838
        %v1840 = vrot.slane %v1773, 2
        %v1841 = vsel %vm918, %v1838, %v1840
        %v1842 = vrot.slane %v1774, 2
        %v1843 = vsel %vm918, %v1840, %v1842
        %v1844 = vrot.slane %v1775, 2
        %v1845 = vsel %vm918, %v1842, %v1844
        %v1846 = vrot.slane %v1776, 2
        %v1847 = vsel %vm918, %v1844, %v1846
        %v1848 = vrot.slane %v1777, 2
        %v1849 = vsel %vm918, %v1846, %v1848
        %v1850 = vrot.slane %v1778, 2
        %v1851 = vsel %vm918, %v1848, %v1850
        %v1852 = vrot.slane %v1779, 2
        %v1853 = vsel %vm918, %v1850, %v1852
        %v1854 = vrot.slane %v1780, 2
        %v1855 = vsel %vm918, %v1852, %v1854
        %v1856 = vrot.slane %v1781, 2
        %v1857 = vsel %vm918, %v1854, %v1856
        %v1858 = vrot.slane %v1782, 2
        %v1859 = vsel %vm918, %v1856, %v1858
        %v1860 = vrot.slane %v1783, 2
        %v1861 = vsel %vm918, %v1858, %v1860
        %v1862 = vrot.slane %v1784, 2
        %v1863 = vsel %vm918, %v1860, %v1862
        %v1864 = vrot.slane %v1785, 2
        %v1865 = vsel %vm918, %v1862, %v1864
        %v1866 = vrot.slane %v1786, 2
        %v1867 = vsel %vm918, %v1864, %v1866
        %v1868 = vrot.slane %v1787, 2
        %v1869 = vsel %vm918, %v1866, %v1868
        %v1870 = vrot.slane %v1788, 2
        %v1871 = vsel %vm918, %v1868, %v1870
        %v1872 = vrot.slane %v1789, 2
        %v1873 = vsel %vm918, %v1870, %v1872
        %v1874 = vrot.slane %v1790, 2
        %v1875 = vsel %vm918, %v1872, %v1874
        %v1876 = vrot.slane %v1791, 2
        %v1877 = vsel %vm918, %v1874, %v1876
        %v1878 = vrot.slane %v1792, 2
        %v1879 = vsel %vm918, %v1876, %v1878
        %v1880 = vrot.slane %v1793, 2
        %v1881 = vsel %vm918, %v1878, %v1880
        %v1882 = vrot.slane %v1794, 2
        %v1883 = vsel %vm918, %v1880, %v1882
        %v1884 = vrot.slane %v1795, 2
        %v1885 = vsel %vm918, %v1882, %v1884
        %v1886 = vrot.slane %v1796, 2
        %v1887 = vsel %vm918, %v1884, %v1886
        %v1888 = vrot.slane %v1797, 2
        %v1889 = vsel %vm918, %v1886, %v1888
        %v1921 = vadd.f32 %v1727, %v1829
        %v1922 = vadd.f32 %v1728, %v1831
        %v1923 = vadd.f32 %v1729, %v1833
        %v1924 = vadd.f32 %v1730, %v1835
        %v1925 = vadd.f32 %v1731, %v1837
        %v1926 = vadd.f32 %v1732, %v1839
        %v1927 = vadd.f32 %v1733, %v1841
        %v1928 = vadd.f32 %v1734, %v1843
        %v1929 = vadd.f32 %v1735, %v1845
        %v1930 = vadd.f32 %v1736, %v1847
        %v1931 = vadd.f32 %v1737, %v1849
        %v1932 = vadd.f32 %v1738, %v1851
        %v1933 = vadd.f32 %v1739, %v1853
        %v1934 = vadd.f32 %v1740, %v1855
        %v1935 = vadd.f32 %v1741, %v1857
        %v1936 = vadd.f32 %v1742, %v1859
        %v1937 = vadd.f32 %v1743, %v1861
        %v1938 = vadd.f32 %v1744, %v1863
        %v1939 = vadd.f32 %v1745, %v1865
        %v1940 = vadd.f32 %v1746, %v1867
        %v1941 = vadd.f32 %v1747, %v1869
        %v1942 = vadd.f32 %v1748, %v1871
        %v1943 = vadd.f32 %v1749, %v1873
        %v1944 = vadd.f32 %v1750, %v1875
        %v1945 = vadd.f32 %v1751, %v1877
        %v1946 = vadd.f32 %v1752, %v1879
        %v1947 = vadd.f32 %v1753, %v1881
        %v1948 = vadd.f32 %v1754, %v1883
        %v1949 = vadd.f32 %v1755, %v1885
        %v1950 = vadd.f32 %v1756, %v1887
        %v1951 = vadd.f32 %v1757, %v1889
        %v1953 = vlaneseq
        %v1954 = vshrl.u32 %v1953, 7
        %v1955 = vsub.s32 0, %v1954
        %v1956 = vrot.slane %v438, %v1955
        %v1958 = vadd.f32 %v1921, %v1956
        %v1959 = vadd.f32 %v1922, %v1956
        %v1960 = vadd.f32 %v1923, %v1956
        %v1961 = vadd.f32 %v1924, %v1956
        %v1962 = vadd.f32 %v1925, %v1956
        %v1963 = vadd.f32 %v1926, %v1956
        %v1964 = vadd.f32 %v1927, %v1956
        %v1965 = vadd.f32 %v1928, %v1956
        %v1966 = vadd.f32 %v1929, %v1956
        %v1967 = vadd.f32 %v1930, %v1956
        %v1968 = vadd.f32 %v1931, %v1956
        %v1969 = vadd.f32 %v1932, %v1956
        %v1970 = vadd.f32 %v1933, %v1956
        %v1971 = vadd.f32 %v1934, %v1956
        %v1972 = vadd.f32 %v1935, %v1956
        %v1973 = vadd.f32 %v1936, %v1956
        %v1974 = vadd.f32 %v1937, %v1956
        %v1975 = vadd.f32 %v1938, %v1956
        %v1976 = vadd.f32 %v1939, %v1956
        %v1977 = vadd.f32 %v1940, %v1956
        %v1978 = vadd.f32 %v1941, %v1956
        %v1979 = vadd.f32 %v1942, %v1956
        %v1980 = vadd.f32 %v1943, %v1956
        %v1981 = vadd.f32 %v1944, %v1956
        %v1982 = vadd.f32 %v1945, %v1956
        %v1983 = vadd.f32 %v1946, %v1956
        %v1984 = vadd.f32 %v1947, %v1956
        %v1985 = vadd.f32 %v1948, %v1956
        %v1986 = vadd.f32 %v1949, %v1956
        %v1987 = vadd.f32 %v1950, %v1956
        %v1988 = vadd.f32 %v1951, %v1956
        %v1989 = vmax.f32 %v1958, 0.0
        %v1990 = vmax.f32 %v1959, 0.0
        %v1991 = vmax.f32 %v1960, 0.0
        %v1992 = vmax.f32 %v1961, 0.0
        %v1993 = vmax.f32 %v1962, 0.0
        %v1994 = vmax.f32 %v1963, 0.0
        %v1995 = vmax.f32 %v1964, 0.0
        %v1996 = vmax.f32 %v1965, 0.0
        %v1997 = vmax.f32 %v1966, 0.0
        %v1998 = vmax.f32 %v1967, 0.0
        %v1999 = vmax.f32 %v1968, 0.0
        %v2000 = vmax.f32 %v1969, 0.0
        %v2001 = vmax.f32 %v1970, 0.0
        %v2002 = vmax.f32 %v1971, 0.0
        %v2003 = vmax.f32 %v1972, 0.0
        %v2004 = vmax.f32 %v1973, 0.0
        %v2005 = vmax.f32 %v1974, 0.0
        %v2006 = vmax.f32 %v1975, 0.0
        %v2007 = vmax.f32 %v1976, 0.0
        %v2008 = vmax.f32 %v1977, 0.0
        %v2009 = vmax.f32 %v1978, 0.0
        %v2010 = vmax.f32 %v1979, 0.0
        %v2011 = vmax.f32 %v1980, 0.0
        %v2012 = vmax.f32 %v1981, 0.0
        %v2013 = vmax.f32 %v1982, 0.0
        %v2014 = vmax.f32 %v1983, 0.0
        %v2015 = vmax.f32 %v1984, 0.0
        %v2016 = vmax.f32 %v1985, 0.0
        %v2017 = vmax.f32 %v1986, 0.0
        %v2018 = vmax.f32 %v1987, 0.0
        %v2019 = vmax.f32 %v1988, 0.0
        %2021 = vset.pattern.permute.xlu0 0
        %2022 = vperm.xlu0 %2021, %v441
        %v2023 = vpop.permute.xlu0 %2022
        %2025 = vset.pattern.permute.xlu0 0
        %2026 = vperm.xlu0 %2025, %v442
        %v2027 = vpop.permute.xlu0 %2026
        %2029 = vset.pattern.permute.xlu0 0
        %2030 = vperm.xlu0 %2029, %v443
        %v2031 = vpop.permute.xlu0 %2030
        %2033 = vset.pattern.permute.xlu0 0
        %2034 = vperm.xlu0 %2033, %v444
        %v2035 = vpop.permute.xlu0 %2034
        %2037 = vset.pattern.permute.xlu0 0
        %2038 = vperm.xlu0 %2037, %v445
        %v2039 = vpop.permute.xlu0 %2038
        %2041 = vset.pattern.permute.xlu0 0
        %2042 = vperm.xlu0 %2041, %v446
        %v2043 = vpop.permute.xlu0 %2042
        %2045 = vset.pattern.permute.xlu0 0
        %2046 = vperm.xlu0 %2045, %v447
        %v2047 = vpop.permute.xlu0 %2046
        %2049 = vset.pattern.permute.xlu0 0
        %2050 = vperm.xlu0 %2049, %v448
        %v2051 = vpop.permute.xlu0 %2050
        %2053 = vset.pattern.permute.xlu0 0
        %2054 = vperm.xlu0 %2053, %v449
        %v2055 = vpop.permute.xlu0 %2054
        %2057 = vset.pattern.permute.xlu0 0
        %2058 = vperm.xlu0 %2057, %v450
        %v2059 = vpop.permute.xlu0 %2058
        %2061 = vset.pattern.permute.xlu0 0
        %2062 = vperm.xlu0 %2061, %v451
        %v2063 = vpop.permute.xlu0 %2062
        %2065 = vset.pattern.permute.xlu0 0
        %2066 = vperm.xlu0 %2065, %v452
        %v2067 = vpop.permute.xlu0 %2066
        %2069 = vset.pattern.permute.xlu0 0
        %2070 = vperm.xlu0 %2069, %v453
        %v2071 = vpop.permute.xlu0 %2070
        %2073 = vset.pattern.permute.xlu0 0
        %2074 = vperm.xlu0 %2073, %v454
        %v2075 = vpop.permute.xlu0 %2074
        %2077 = vset.pattern.permute.xlu0 0
        %2078 = vperm.xlu0 %2077, %v455
        %v2079 = vpop.permute.xlu0 %2078
        %2081 = vset.pattern.permute.xlu0 0
        %2082 = vperm.xlu0 %2081, %v456
        %v2083 = vpop.permute.xlu0 %2082
        %2085 = vset.pattern.permute.xlu0 0
        %2086 = vperm.xlu0 %2085, %v457
        %v2087 = vpop.permute.xlu0 %2086
        %2089 = vset.pattern.permute.xlu0 0
        %2090 = vperm.xlu0 %2089, %v458
        %v2091 = vpop.permute.xlu0 %2090
        %2093 = vset.pattern.permute.xlu0 0
        %2094 = vperm.xlu0 %2093, %v459
        %v2095 = vpop.permute.xlu0 %2094
        %2097 = vset.pattern.permute.xlu0 0
        %2098 = vperm.xlu0 %2097, %v460
        %v2099 = vpop.permute.xlu0 %2098
        %2101 = vset.pattern.permute.xlu0 0
        %2102 = vperm.xlu0 %2101, %v461
        %v2103 = vpop.permute.xlu0 %2102
        %2105 = vset.pattern.permute.xlu0 0
        %2106 = vperm.xlu0 %2105, %v462
        %v2107 = vpop.permute.xlu0 %2106
        %2109 = vset.pattern.permute.xlu0 0
        %2110 = vperm.xlu0 %2109, %v463
        %v2111 = vpop.permute.xlu0 %2110
        %2113 = vset.pattern.permute.xlu0 0
        %2114 = vperm.xlu0 %2113, %v464
        %v2115 = vpop.permute.xlu0 %2114
        %2117 = vset.pattern.permute.xlu0 0
        %2118 = vperm.xlu0 %2117, %v465
        %v2119 = vpop.permute.xlu0 %2118
        %2121 = vset.pattern.permute.xlu0 0
        %2122 = vperm.xlu0 %2121, %v466
        %v2123 = vpop.permute.xlu0 %2122
        %2125 = vset.pattern.permute.xlu0 0
        %2126 = vperm.xlu0 %2125, %v467
        %v2127 = vpop.permute.xlu0 %2126
        %2129 = vset.pattern.permute.xlu0 0
        %2130 = vperm.xlu0 %2129, %v468
        %v2131 = vpop.permute.xlu0 %2130
        %2133 = vset.pattern.permute.xlu0 0
        %2134 = vperm.xlu0 %2133, %v469
        %v2135 = vpop.permute.xlu0 %2134
        %2137 = vset.pattern.permute.xlu0 0
        %2138 = vperm.xlu0 %2137, %v470
        %v2139 = vpop.permute.xlu0 %2138
        %v2140 = vrot.slane %v2023, 1
        %v2141 = vrot.slane %v2027, 1
        %v2142 = vsel %vm725, %v2140, %v2141
        %v2143 = vrot.slane %v2031, 1
        %v2144 = vsel %vm725, %v2141, %v2143
        %v2145 = vrot.slane %v2035, 1
        %v2146 = vsel %vm725, %v2143, %v2145
        %v2147 = vrot.slane %v2039, 1
        %v2148 = vsel %vm725, %v2145, %v2147
        %v2149 = vrot.slane %v2043, 1
        %v2150 = vsel %vm725, %v2147, %v2149
        %v2151 = vrot.slane %v2047, 1
        %v2152 = vsel %vm725, %v2149, %v2151
        %v2153 = vrot.slane %v2051, 1
        %v2154 = vsel %vm725, %v2151, %v2153
        %v2155 = vrot.slane %v2055, 1
        %v2156 = vsel %vm725, %v2153, %v2155
        %v2157 = vrot.slane %v2059, 1
        %v2158 = vsel %vm725, %v2155, %v2157
        %v2159 = vrot.slane %v2063, 1
        %v2160 = vsel %vm725, %v2157, %v2159
        %v2161 = vrot.slane %v2067, 1
        %v2162 = vsel %vm725, %v2159, %v2161
        %v2163 = vrot.slane %v2071, 1
        %v2164 = vsel %vm725, %v2161, %v2163
        %v2165 = vrot.slane %v2075, 1
        %v2166 = vsel %vm725, %v2163, %v2165
        %v2167 = vrot.slane %v2079, 1
        %v2168 = vsel %vm725, %v2165, %v2167
        %v2169 = vrot.slane %v2083, 1
        %v2170 = vsel %vm725, %v2167, %v2169
        %v2171 = vrot.slane %v2087, 1
        %v2172 = vsel %vm725, %v2169, %v2171
        %v2173 = vrot.slane %v2091, 1
        %v2174 = vsel %vm725, %v2171, %v2173
        %v2175 = vrot.slane %v2095, 1
        %v2176 = vsel %vm725, %v2173, %v2175
        %v2177 = vrot.slane %v2099, 1
        %v2178 = vsel %vm725, %v2175, %v2177
        %v2179 = vrot.slane %v2103, 1
        %v2180 = vsel %vm725, %v2177, %v2179
        %v2181 = vrot.slane %v2107, 1
        %v2182 = vsel %vm725, %v2179, %v2181
        %v2183 = vrot.slane %v2111, 1
        %v2184 = vsel %vm725, %v2181, %v2183
        %v2185 = vrot.slane %v2115, 1
        %v2186 = vsel %vm725, %v2183, %v2185
        %v2187 = vrot.slane %v2119, 1
        %v2188 = vsel %vm725, %v2185, %v2187
        %v2189 = vrot.slane %v2123, 1
        %v2190 = vsel %vm725, %v2187, %v2189
        %v2191 = vrot.slane %v2127, 1
        %v2192 = vsel %vm725, %v2189, %v2191
        %v2193 = vrot.slane %v2131, 1
        %v2194 = vsel %vm725, %v2191, %v2193
        %v2195 = vrot.slane %v2135, 1
        %v2196 = vsel %vm725, %v2193, %v2195
        %v2197 = vrot.slane %v2139, 1
        %v2198 = vsel %vm725, %v2195, %v2197
        %v2230 = vmul.f32 %v1989, %v2140
        %v2231 = vmul.f32 %v1990, %v2142
        %v2232 = vmul.f32 %v1991, %v2144
        %v2233 = vmul.f32 %v1992, %v2146
        %v2234 = vmul.f32 %v1993, %v2148
        %v2235 = vmul.f32 %v1994, %v2150
        %v2236 = vmul.f32 %v1995, %v2152
        %v2237 = vmul.f32 %v1996, %v2154
        %v2238 = vmul.f32 %v1997, %v2156
        %v2239 = vmul.f32 %v1998, %v2158
        %v2240 = vmul.f32 %v1999, %v2160
        %v2241 = vmul.f32 %v2000, %v2162
        %v2242 = vmul.f32 %v2001, %v2164
        %v2243 = vmul.f32 %v2002, %v2166
        %v2244 = vmul.f32 %v2003, %v2168
        %v2245 = vmul.f32 %v2004, %v2170
        %v2246 = vmul.f32 %v2005, %v2172
        %v2247 = vmul.f32 %v2006, %v2174
        %v2248 = vmul.f32 %v2007, %v2176
        %v2249 = vmul.f32 %v2008, %v2178
        %v2250 = vmul.f32 %v2009, %v2180
        %v2251 = vmul.f32 %v2010, %v2182
        %v2252 = vmul.f32 %v2011, %v2184
        %v2253 = vmul.f32 %v2012, %v2186
        %v2254 = vmul.f32 %v2013, %v2188
        %v2255 = vmul.f32 %v2014, %v2190
        %v2256 = vmul.f32 %v2015, %v2192
        %v2257 = vmul.f32 %v2016, %v2194
        %v2258 = vmul.f32 %v2017, %v2196
        %v2259 = vmul.f32 %v2018, %v2198
        %v2260 = vmul.f32 %v2019, %v2197
        %vm2261 = vcmask 261120
        %2262 = vst.msk [vmem:[#allocation2] sm:$0xff] %vm2261, 0.0
        %2263 = vst.msk [vmem:[#allocation2 + $0x8] sm:$0xff] %vm2261, 0.0
        %2264 = vst.msk [vmem:[#allocation2 + $0x10] sm:$0xff] %vm2261, 0.0
        %2265 = vst.msk [vmem:[#allocation2 + $0x108] sm:$0xff] %vm2261, 0.0
        %2266 = vst.msk [vmem:[#allocation2 + $0x110] sm:$0xff] %vm2261, 0.0
        %2267 = vst.msk [vmem:[#allocation2 + $0x118] sm:$0xff] %vm2261, 0.0
        %vm2268 = vcmask 261127
        %2269 = vst.msk [vmem:[#allocation2 + $0x11] sm:$0x80] %vm2268, %v2230
        %2270 = vst.msk [vmem:[#allocation2 + $0x19] sm:$0xff] %vm2261, %v2231
        %2271 = vst.msk [vmem:[#allocation2 + $0x21] sm:$0xff] %vm2261, %v2232
        %2272 = vst.msk [vmem:[#allocation2 + $0x29] sm:$0xff] %vm2261, %v2233
        %2273 = vst.msk [vmem:[#allocation2 + $0x31] sm:$0xff] %vm2261, %v2234
        %2274 = vst.msk [vmem:[#allocation2 + $0x39] sm:$0xff] %vm2261, %v2235
        %2275 = vst.msk [vmem:[#allocation2 + $0x41] sm:$0xff] %vm2261, %v2236
        %2276 = vst.msk [vmem:[#allocation2 + $0x49] sm:$0xff] %vm2261, %v2237
        %2277 = vst.msk [vmem:[#allocation2 + $0x51] sm:$0xff] %vm2261, %v2238
        %2278 = vst.msk [vmem:[#allocation2 + $0x59] sm:$0xff] %vm2261, %v2239
        %2279 = vst.msk [vmem:[#allocation2 + $0x61] sm:$0xff] %vm2261, %v2240
        %2280 = vst.msk [vmem:[#allocation2 + $0x69] sm:$0xff] %vm2261, %v2241
        %2281 = vst.msk [vmem:[#allocation2 + $0x71] sm:$0xff] %vm2261, %v2242
        %2282 = vst.msk [vmem:[#allocation2 + $0x79] sm:$0xff] %vm2261, %v2243
        %2283 = vst.msk [vmem:[#allocation2 + $0x81] sm:$0xff] %vm2261, %v2244
        %2284 = vst.msk [vmem:[#allocation2 + $0x89] sm:$0xff] %vm2261, %v2245
        %2285 = vst.msk [vmem:[#allocation2 + $0x91] sm:$0xff] %vm2261, %v2246
        %2286 = vst.msk [vmem:[#allocation2 + $0x99] sm:$0xff] %vm2261, %v2247
        %2287 = vst.msk [vmem:[#allocation2 + $0xa1] sm:$0xff] %vm2261, %v2248
        %2288 = vst.msk [vmem:[#allocation2 + $0xa9] sm:$0xff] %vm2261, %v2249
        %2289 = vst.msk [vmem:[#allocation2 + $0xb1] sm:$0xff] %vm2261, %v2250
        %2290 = vst.msk [vmem:[#allocation2 + $0xb9] sm:$0xff] %vm2261, %v2251
        %2291 = vst.msk [vmem:[#allocation2 + $0xc1] sm:$0xff] %vm2261, %v2252
        %2292 = vst.msk [vmem:[#allocation2 + $0xc9] sm:$0xff] %vm2261, %v2253
        %2293 = vst.msk [vmem:[#allocation2 + $0xd1] sm:$0xff] %vm2261, %v2254
        %2294 = vst.msk [vmem:[#allocation2 + $0xd9] sm:$0xff] %vm2261, %v2255
        %2295 = vst.msk [vmem:[#allocation2 + $0xe1] sm:$0xff] %vm2261, %v2256
        %2296 = vst.msk [vmem:[#allocation2 + $0xe9] sm:$0xff] %vm2261, %v2257
        %2297 = vst.msk [vmem:[#allocation2 + $0xf1] sm:$0xff] %vm2261, %v2258
        %2298 = vst.msk [vmem:[#allocation2 + $0xf9] sm:$0xff] %vm2261, %v2259
        %vm2299 = vcmask 260096
        %2300 = vst.msk [vmem:[#allocation2 + $0x101] sm:$0x7f] %vm2299, %v2260
        %p2301 = scmp.eq.s32.totalorder %s357, 0
        // Predicated region
        $region65: #{upconv_forward.1} parent=51 // pred_check
          %p2302 = pneg %p2301
        $region66: #{upconv_forward.1} parent=51 // pred_check_branch
          %2304 = sbr.rel (%p2302) target = $region68
        $region67: #{upconv_forward.1} parent=51 // pred_region
          %2305 = vst.msk [vmem:[#allocation2 + $0x18] sm:$0xff] %vm2261, 0.0
          %2306 = vst.msk [vmem:[#allocation2 + $0x20] sm:$0xff] %vm2261, 0.0
          %2307 = vst.msk [vmem:[#allocation2 + $0x28] sm:$0xff] %vm2261, 0.0
        $region68: #{upconv_forward.1} parent=51 // pred_fallthru
          _
        %p2308 = scmp.eq.s32.totalorder %s357, 1
        // Predicated region
        $region69: #{upconv_forward.1} parent=51 // pred_check
          %p2309 = pneg %p2308
        $region70: #{upconv_forward.1} parent=51 // pred_check_branch
          %2311 = sbr.rel (%p2309) target = $region72
        $region71: #{upconv_forward.1} parent=51 // pred_region
          %2312 = vst.msk [vmem:[#allocation2 + $0xf0] sm:$0xff] %vm2261, 0.0
          %2313 = vst.msk [vmem:[#allocation2 + $0xf8] sm:$0xff] %vm2261, 0.0
          %2314 = vst.msk [vmem:[#allocation2 + $0x100] sm:$0xff] %vm2261, 0.0
        $region72: #{upconv_forward.1} parent=51 // pred_fallthru
          _
        %v2315 = vld [vmem:[#allocation2 + $0x17] sm:$0xff]
        %v2316 = vld [vmem:[#allocation2 + $0x1f] sm:$0xff]
        %v2317 = vld [vmem:[#allocation2 + $0x27] sm:$0xff]
        %v2318 = vld [vmem:[#allocation2 + $0x2f] sm:$0xff]
        %v2319 = vld [vmem:[#allocation2 + $0x37] sm:$0xff]
        %v2320 = vld [vmem:[#allocation2 + $0x3f] sm:$0xff]
        %v2321 = vld [vmem:[#allocation2 + $0x47] sm:$0xff]
        %v2322 = vld [vmem:[#allocation2 + $0x4f] sm:$0xff]
        %v2323 = vld [vmem:[#allocation2 + $0x57] sm:$0xff]
        %v2324 = vld [vmem:[#allocation2 + $0x5f] sm:$0xff]
        %v2325 = vld [vmem:[#allocation2 + $0x67] sm:$0xff]
        %v2326 = vld [vmem:[#allocation2 + $0x6f] sm:$0xff]
        %v2327 = vld [vmem:[#allocation2 + $0x77] sm:$0xff]
        %v2328 = vld [vmem:[#allocation2 + $0x7f] sm:$0xff]
        %v2329 = vld [vmem:[#allocation2 + $0x87] sm:$0xff]
        %v2330 = vld [vmem:[#allocation2 + $0x8f] sm:$0xff]
        %v2331 = vld [vmem:[#allocation2 + $0x97] sm:$0xff]
        %v2332 = vld [vmem:[#allocation2 + $0x9f] sm:$0xff]
        %v2333 = vld [vmem:[#allocation2 + $0xa7] sm:$0xff]
        %v2334 = vld [vmem:[#allocation2 + $0xaf] sm:$0xff]
        %v2335 = vld [vmem:[#allocation2 + $0xb7] sm:$0xff]
        %v2336 = vld [vmem:[#allocation2 + $0xbf] sm:$0xff]
        %v2337 = vld [vmem:[#allocation2 + $0xc7] sm:$0xff]
        %v2338 = vld [vmem:[#allocation2 + $0xcf] sm:$0xff]
        %v2339 = vld [vmem:[#allocation2 + $0x18] sm:$0xff]
        %v2340 = vld [vmem:[#allocation2 + $0x20] sm:$0xff]
        %v2341 = vld [vmem:[#allocation2 + $0x28] sm:$0xff]
        %v2342 = vld [vmem:[#allocation2 + $0x30] sm:$0xff]
        %v2343 = vld [vmem:[#allocation2 + $0x38] sm:$0xff]
        %v2344 = vld [vmem:[#allocation2 + $0x40] sm:$0xff]
        %v2345 = vld [vmem:[#allocation2 + $0x48] sm:$0xff]
        %v2346 = vld [vmem:[#allocation2 + $0x50] sm:$0xff]
        %v2347 = vld [vmem:[#allocation2 + $0x58] sm:$0xff]
        %v2348 = vld [vmem:[#allocation2 + $0x60] sm:$0xff]
        %v2349 = vld [vmem:[#allocation2 + $0x68] sm:$0xff]
        %v2350 = vld [vmem:[#allocation2 + $0x70] sm:$0xff]
        %v2351 = vld [vmem:[#allocation2 + $0x78] sm:$0xff]
        %v2352 = vld [vmem:[#allocation2 + $0x80] sm:$0xff]
        %v2353 = vld [vmem:[#allocation2 + $0x88] sm:$0xff]
        %v2354 = vld [vmem:[#allocation2 + $0x90] sm:$0xff]
        %v2355 = vld [vmem:[#allocation2 + $0x98] sm:$0xff]
        %v2356 = vld [vmem:[#allocation2 + $0xa0] sm:$0xff]
        %v2357 = vld [vmem:[#allocation2 + $0xa8] sm:$0xff]
        %v2358 = vld [vmem:[#allocation2 + $0xb0] sm:$0xff]
        %v2359 = vld [vmem:[#allocation2 + $0xb8] sm:$0xff]
        %v2360 = vld [vmem:[#allocation2 + $0xc0] sm:$0xff]
        %v2361 = vld [vmem:[#allocation2 + $0xc8] sm:$0xff]
        %v2362 = vld [vmem:[#allocation2 + $0xd0] sm:$0xff]
        %v2364 = vsel %vm2261, %v2339, 0
        %v2367 = vsel %vm2261, %v2340, 0
        %v2370 = vsel %vm2261, %v2341, 0
        %v2373 = vsel %vm2261, %v2342, 0
        %v2376 = vsel %vm2261, %v2343, 0
        %v2379 = vsel %vm2261, %v2344, 0
        %v2382 = vsel %vm2261, %v2345, 0
        %v2385 = vsel %vm2261, %v2346, 0
        %v2388 = vsel %vm2261, %v2347, 0
        %v2391 = vsel %vm2261, %v2348, 0
        %v2394 = vsel %vm2261, %v2349, 0
        %v2397 = vsel %vm2261, %v2350, 0
        %v2400 = vsel %vm2261, %v2351, 0
        %v2403 = vsel %vm2261, %v2352, 0
        %v2406 = vsel %vm2261, %v2353, 0
        %v2409 = vsel %vm2261, %v2354, 0
        %v2412 = vsel %vm2261, %v2355, 0
        %v2415 = vsel %vm2261, %v2356, 0
        %v2418 = vsel %vm2261, %v2357, 0
        %v2421 = vsel %vm2261, %v2358, 0
        %v2424 = vsel %vm2261, %v2359, 0
        %v2427 = vsel %vm2261, %v2360, 0
        %v2430 = vsel %vm2261, %v2361, 0
        %v2433 = vsel %vm2261, %v2362, 0
        %2435 = vmatprep.subr.mxu0 0.0
        %2436 = vmatpush1.msra.mxu0 %v402
        %2437 = vmatprep.subr.mxu0 0.0
        %2438 = vmatpush1.msra.mxu0 %v403
        %2439 = vmatprep.subr.mxu0 0.0
        %2440 = vmatpush1.msra.mxu0 %v404
        %2441 = vmatprep.subr.mxu0 0.0
        %2442 = vmatpush1.msra.mxu0 %v405
        %2443 = vmatprep.subr.mxu0 0.0
        %2444 = vmatpush1.msra.mxu0 0.0
        %2445 = vmatprep.subr.mxu0 0.0
        %2446 = vmatpush1.msra.mxu0 0.0
        %2447 = vmatprep.subr.mxu0 0.0
        %2448 = vmatpush1.msra.mxu0 0.0
        %2449 = vmatprep.subr.mxu0 0.0
        %2450 = vmatpush1.msra.mxu0 0.0
        %2451 = vmatprep.subr.mxu0 0.0
        %2452 = vmatpush1.msra.mxu0 0.0
        %2453 = vmatprep.subr.mxu0 0.0
        %2454 = vmatpush1.msra.mxu0 0.0
        %2455 = vmatprep.subr.mxu0 0.0
        %2456 = vmatpush1.msra.mxu0 0.0
        %2457 = vmatprep.subr.mxu0 0.0
        %2458 = vmatpush1.msra.mxu0 0.0
        %2459 = vmatprep.subr.mxu0 0.0
        %2460 = vmatpush1.msra.mxu0 0.0
        %2461 = vmatprep.subr.mxu0 0.0
        %2462 = vmatpush1.msra.mxu0 0.0
        %2463 = vmatprep.subr.mxu0 0.0
        %2464 = vmatpush1.msra.mxu0 0.0
        %2465 = vmatprep.subr.mxu0 0.0
        %2466 = vmatpush1.msra.mxu0 0.0
        %2467 = vmatprep.subr.mxu0 0.0
        %2468 = vmatpush1.msra.mxu0 0.0
        %2469 = vmatprep.subr.mxu0 0.0
        %2470 = vmatpush1.msra.mxu0 0.0
        %2471 = vmatprep.subr.mxu0 0.0
        %2472 = vmatpush1.msra.mxu0 0.0
        %2473 = vmatprep.subr.mxu0 0.0
        %2474 = vmatpush1.msra.mxu0 0.0
        %2475 = vmatprep.subr.mxu0 0.0
        %2476 = vmatpush1.msra.mxu0 0.0
        %2477 = vmatprep.subr.mxu0 0.0
        %2478 = vmatpush1.msra.mxu0 0.0
        %2479 = vmatprep.subr.mxu0 0.0
        %2480 = vmatpush1.msra.mxu0 0.0
        %2481 = vmatprep.subr.mxu0 0.0
        %2482 = vmatpush1.msra.mxu0 0.0
        %2483 = vmatprep.subr.mxu0 0.0
        %2484 = vmatpush1.msra.mxu0 0.0
        %2485 = vmatprep.subr.mxu0 0.0
        %2486 = vmatpush1.msra.mxu0 0.0
        %2487 = vmatprep.subr.mxu0 0.0
        %2488 = vmatpush1.msra.mxu0 0.0
        %2489 = vmatprep.subr.mxu0 0.0
        %2490 = vmatpush1.msra.mxu0 0.0
        %2491 = vmatprep.subr.mxu0 0.0
        %2492 = vmatpush1.msra.mxu0 0.0
        %2493 = vmatprep.subr.mxu0 0.0
        %2494 = vmatpush1.msra.mxu0 0.0
        %2495 = vmatprep.subr.mxu0 0.0
        %2496 = vmatpush1.msra.mxu0 0.0
        %2497 = vmatprep.subr.mxu0 0.0
        %2498 = vmatpush1.msra.mxu0 0.0
        %2499 = vmatprep.mubr.f32.mxu0 0.0
        %2500 = vmatmul.mubr.f32.gmra.mrb[0].mxu0 %v2364
        %v2501 = vpop.f32.mrb[0].mxu0
        %v2502 = vadd.f32 0.0, %v2501
        %v2503 = vpop.f32.mrb[0].mxu0
        %2504 = vmatprep.mubr.f32.mxu0 0.0
        %2505 = vmatmul.mubr.f32.gmra.mrb[0].mxu0 %v2367
        %v2506 = vpop.f32.mrb[0].mxu0
        %v2507 = vadd.f32 0.0, %v2506
        %v2508 = vpop.f32.mrb[0].mxu0
        %2509 = vmatprep.mubr.f32.mxu0 0.0
        %2510 = vmatmul.mubr.f32.gmra.mrb[0].mxu0 %v2370
        %v2511 = vpop.f32.mrb[0].mxu0
        %v2512 = vadd.f32 0.0, %v2511
        %v2513 = vpop.f32.mrb[0].mxu0
        %2514 = vmatprep.mubr.f32.mxu0 0.0
        %2515 = vmatmul.mubr.f32.gmra.mrb[0].mxu0 %v2373
        %v2516 = vpop.f32.mrb[0].mxu0
        %v2517 = vadd.f32 0.0, %v2516
        %v2518 = vpop.f32.mrb[0].mxu0
        %2519 = vmatprep.mubr.f32.mxu0 0.0
        %2520 = vmatmul.mubr.f32.gmra.mrb[0].mxu0 %v2376
        %v2521 = vpop.f32.mrb[0].mxu0
        %v2522 = vadd.f32 0.0, %v2521
        %v2523 = vpop.f32.mrb[0].mxu0
        %2524 = vmatprep.mubr.f32.mxu0 0.0
        %2525 = vmatmul.mubr.f32.gmra.mrb[0].mxu0 %v2379
        %v2526 = vpop.f32.mrb[0].mxu0
        %v2527 = vadd.f32 0.0, %v2526
        %v2528 = vpop.f32.mrb[0].mxu0
        %2529 = vmatprep.mubr.f32.mxu0 0.0
        %2530 = vmatmul.mubr.f32.gmra.mrb[0].mxu0 %v2382
        %v2531 = vpop.f32.mrb[0].mxu0
        %v2532 = vadd.f32 0.0, %v2531
        %v2533 = vpop.f32.mrb[0].mxu0
        %2534 = vmatprep.mubr.f32.mxu0 0.0
        %2535 = vmatmul.mubr.f32.gmra.mrb[0].mxu0 %v2385
        %v2536 = vpop.f32.mrb[0].mxu0
        %v2537 = vadd.f32 0.0, %v2536
        %v2538 = vpop.f32.mrb[0].mxu0
        %2539 = vmatprep.mubr.f32.mxu0 0.0
        %2540 = vmatmul.mubr.f32.gmra.mrb[0].mxu0 %v2388
        %v2541 = vpop.f32.mrb[0].mxu0
        %v2542 = vadd.f32 0.0, %v2541
        %v2543 = vpop.f32.mrb[0].mxu0
        %2544 = vmatprep.mubr.f32.mxu0 0.0
        %2545 = vmatmul.mubr.f32.gmra.mrb[0].mxu0 %v2391
        %v2546 = vpop.f32.mrb[0].mxu0
        %v2547 = vadd.f32 0.0, %v2546
        %v2548 = vpop.f32.mrb[0].mxu0
        %2549 = vmatprep.mubr.f32.mxu0 0.0
        %2550 = vmatmul.mubr.f32.gmra.mrb[0].mxu0 %v2394
        %v2551 = vpop.f32.mrb[0].mxu0
        %v2552 = vadd.f32 0.0, %v2551
        %v2553 = vpop.f32.mrb[0].mxu0
        %2554 = vmatprep.mubr.f32.mxu0 0.0
        %2555 = vmatmul.mubr.f32.gmra.mrb[0].mxu0 %v2397
        %v2556 = vpop.f32.mrb[0].mxu0
        %v2557 = vadd.f32 0.0, %v2556
        %v2558 = vpop.f32.mrb[0].mxu0
        %2559 = vmatprep.mubr.f32.mxu0 0.0
        %2560 = vmatmul.mubr.f32.gmra.mrb[0].mxu0 %v2400
        %v2561 = vpop.f32.mrb[0].mxu0
        %v2562 = vadd.f32 0.0, %v2561
        %v2563 = vpop.f32.mrb[0].mxu0
        %2564 = vmatprep.mubr.f32.mxu0 0.0
        %2565 = vmatmul.mubr.f32.gmra.mrb[0].mxu0 %v2403
        %v2566 = vpop.f32.mrb[0].mxu0
        %v2567 = vadd.f32 0.0, %v2566
        %v2568 = vpop.f32.mrb[0].mxu0
        %2569 = vmatprep.mubr.f32.mxu0 0.0
        %2570 = vmatmul.mubr.f32.gmra.mrb[0].mxu0 %v2406
        %v2571 = vpop.f32.mrb[0].mxu0
        %v2572 = vadd.f32 0.0, %v2571
        %v2573 = vpop.f32.mrb[0].mxu0
        %2574 = vmatprep.mubr.f32.mxu0 0.0
        %2575 = vmatmul.mubr.f32.gmra.mrb[0].mxu0 %v2409
        %v2576 = vpop.f32.mrb[0].mxu0
        %v2577 = vadd.f32 0.0, %v2576
        %v2578 = vpop.f32.mrb[0].mxu0
        %2579 = vmatprep.mubr.f32.mxu0 0.0
        %2580 = vmatmul.mubr.f32.gmra.mrb[0].mxu0 %v2412
        %v2581 = vpop.f32.mrb[0].mxu0
        %v2582 = vadd.f32 0.0, %v2581
        %v2583 = vpop.f32.mrb[0].mxu0
        %2584 = vmatprep.mubr.f32.mxu0 0.0
        %2585 = vmatmul.mubr.f32.gmra.mrb[0].mxu0 %v2415
        %v2586 = vpop.f32.mrb[0].mxu0
        %v2587 = vadd.f32 0.0, %v2586
        %v2588 = vpop.f32.mrb[0].mxu0
        %2589 = vmatprep.mubr.f32.mxu0 0.0
        %2590 = vmatmul.mubr.f32.gmra.mrb[0].mxu0 %v2418
        %v2591 = vpop.f32.mrb[0].mxu0
        %v2592 = vadd.f32 0.0, %v2591
        %v2593 = vpop.f32.mrb[0].mxu0
        %2594 = vmatprep.mubr.f32.mxu0 0.0
        %2595 = vmatmul.mubr.f32.gmra.mrb[0].mxu0 %v2421
        %v2596 = vpop.f32.mrb[0].mxu0
        %v2597 = vadd.f32 0.0, %v2596
        %v2598 = vpop.f32.mrb[0].mxu0
        %2599 = vmatprep.mubr.f32.mxu0 0.0
        %2600 = vmatmul.mubr.f32.gmra.mrb[0].mxu0 %v2424
        %v2601 = vpop.f32.mrb[0].mxu0
        %v2602 = vadd.f32 0.0, %v2601
        %v2603 = vpop.f32.mrb[0].mxu0
        %2604 = vmatprep.mubr.f32.mxu0 0.0
        %2605 = vmatmul.mubr.f32.gmra.mrb[0].mxu0 %v2427
        %v2606 = vpop.f32.mrb[0].mxu0
        %v2607 = vadd.f32 0.0, %v2606
        %v2608 = vpop.f32.mrb[0].mxu0
        %2609 = vmatprep.mubr.f32.mxu0 0.0
        %2610 = vmatmul.mubr.f32.gmra.mrb[0].mxu0 %v2430
        %v2611 = vpop.f32.mrb[0].mxu0
        %v2612 = vadd.f32 0.0, %v2611
        %v2613 = vpop.f32.mrb[0].mxu0
        %2614 = vmatprep.mubr.f32.mxu0 0.0
        %2615 = vmatmul.mubr.f32.gmra.mrb[0].mxu0 %v2433
        %v2616 = vpop.f32.mrb[0].mxu0
        %v2617 = vadd.f32 0.0, %v2616
        %v2618 = vpop.f32.mrb[0].mxu0
        %2619 = vdwg.mxu0
        %v2621 = vsel %vm2261, %v2315, 0
        %v2624 = vsel %vm2261, %v2316, 0
        %v2627 = vsel %vm2261, %v2317, 0
        %v2630 = vsel %vm2261, %v2318, 0
        %v2633 = vsel %vm2261, %v2319, 0
        %v2636 = vsel %vm2261, %v2320, 0
        %v2639 = vsel %vm2261, %v2321, 0
        %v2642 = vsel %vm2261, %v2322, 0
        %v2645 = vsel %vm2261, %v2323, 0
        %v2648 = vsel %vm2261, %v2324, 0
        %v2651 = vsel %vm2261, %v2325, 0
        %v2654 = vsel %vm2261, %v2326, 0
        %v2657 = vsel %vm2261, %v2327, 0
        %v2660 = vsel %vm2261, %v2328, 0
        %v2663 = vsel %vm2261, %v2329, 0
        %v2666 = vsel %vm2261, %v2330, 0
        %v2669 = vsel %vm2261, %v2331, 0
        %v2672 = vsel %vm2261, %v2332, 0
        %v2675 = vsel %vm2261, %v2333, 0
        %v2678 = vsel %vm2261, %v2334, 0
        %v2681 = vsel %vm2261, %v2335, 0
        %v2684 = vsel %vm2261, %v2336, 0
        %v2687 = vsel %vm2261, %v2337, 0
        %v2690 = vsel %vm2261, %v2338, 0
        %2692 = vmatprep.subr.mxu0 0.0
        %2693 = vmatpush1.msra.mxu0 %v398
        %2694 = vmatprep.subr.mxu0 0.0
        %2695 = vmatpush1.msra.mxu0 %v399
        %2696 = vmatprep.subr.mxu0 0.0
        %2697 = vmatpush1.msra.mxu0 %v400
        %2698 = vmatprep.subr.mxu0 0.0
        %2699 = vmatpush1.msra.mxu0 %v401
        %2700 = vmatprep.subr.mxu0 0.0
        %2701 = vmatpush1.msra.mxu0 0.0
        %2702 = vmatprep.subr.mxu0 0.0
        %2703 = vmatpush1.msra.mxu0 0.0
        %2704 = vmatprep.subr.mxu0 0.0
        %2705 = vmatpush1.msra.mxu0 0.0
        %2706 = vmatprep.subr.mxu0 0.0
        %2707 = vmatpush1.msra.mxu0 0.0
        %2708 = vmatprep.subr.mxu0 0.0
        %2709 = vmatpush1.msra.mxu0 0.0
        %2710 = vmatprep.subr.mxu0 0.0
        %2711 = vmatpush1.msra.mxu0 0.0
        %2712 = vmatprep.subr.mxu0 0.0
        %2713 = vmatpush1.msra.mxu0 0.0
        %2714 = vmatprep.subr.mxu0 0.0
        %2715 = vmatpush1.msra.mxu0 0.0
        %2716 = vmatprep.subr.mxu0 0.0
        %2717 = vmatpush1.msra.mxu0 0.0
        %2718 = vmatprep.subr.mxu0 0.0
        %2719 = vmatpush1.msra.mxu0 0.0
        %2720 = vmatprep.subr.mxu0 0.0
        %2721 = vmatpush1.msra.mxu0 0.0
        %2722 = vmatprep.subr.mxu0 0.0
        %2723 = vmatpush1.msra.mxu0 0.0
        %2724 = vmatprep.subr.mxu0 0.0
        %2725 = vmatpush1.msra.mxu0 0.0
        %2726 = vmatprep.subr.mxu0 0.0
        %2727 = vmatpush1.msra.mxu0 0.0
        %2728 = vmatprep.subr.mxu0 0.0
        %2729 = vmatpush1.msra.mxu0 0.0
        %2730 = vmatprep.subr.mxu0 0.0
        %2731 = vmatpush1.msra.mxu0 0.0
        %2732 = vmatprep.subr.mxu0 0.0
        %2733 = vmatpush1.msra.mxu0 0.0
        %2734 = vmatprep.subr.mxu0 0.0
        %2735 = vmatpush1.msra.mxu0 0.0
        %2736 = vmatprep.subr.mxu0 0.0
        %2737 = vmatpush1.msra.mxu0 0.0
        %2738 = vmatprep.subr.mxu0 0.0
        %2739 = vmatpush1.msra.mxu0 0.0
        %2740 = vmatprep.subr.mxu0 0.0
        %2741 = vmatpush1.msra.mxu0 0.0
        %2742 = vmatprep.subr.mxu0 0.0
        %2743 = vmatpush1.msra.mxu0 0.0
        %2744 = vmatprep.subr.mxu0 0.0
        %2745 = vmatpush1.msra.mxu0 0.0
        %2746 = vmatprep.subr.mxu0 0.0
        %2747 = vmatpush1.msra.mxu0 0.0
        %2748 = vmatprep.subr.mxu0 0.0
        %2749 = vmatpush1.msra.mxu0 0.0
        %2750 = vmatprep.subr.mxu0 0.0
        %2751 = vmatpush1.msra.mxu0 0.0
        %2752 = vmatprep.subr.mxu0 0.0
        %2753 = vmatpush1.msra.mxu0 0.0
        %2754 = vmatprep.subr.mxu0 0.0
        %2755 = vmatpush1.msra.mxu0 0.0
        %2756 = vmatprep.mubr.f32.mxu0 0.0
        %2757 = vmatmul.mubr.f32.gmra.mrb[0].mxu0 %v2621
        %v2758 = vpop.f32.mrb[0].mxu0
        %v2759 = vadd.f32 %v2502, %v2758
        %v2760 = vpop.f32.mrb[0].mxu0
        %2761 = vmatprep.mubr.f32.mxu0 0.0
        %2762 = vmatmul.mubr.f32.gmra.mrb[0].mxu0 %v2624
        %v2763 = vpop.f32.mrb[0].mxu0
        %v2764 = vadd.f32 %v2507, %v2763
        %v2765 = vpop.f32.mrb[0].mxu0
        %2766 = vmatprep.mubr.f32.mxu0 0.0
        %2767 = vmatmul.mubr.f32.gmra.mrb[0].mxu0 %v2627
        %v2768 = vpop.f32.mrb[0].mxu0
        %v2769 = vadd.f32 %v2512, %v2768
        %v2770 = vpop.f32.mrb[0].mxu0
        %2771 = vmatprep.mubr.f32.mxu0 0.0
        %2772 = vmatmul.mubr.f32.gmra.mrb[0].mxu0 %v2630
        %v2773 = vpop.f32.mrb[0].mxu0
        %v2774 = vadd.f32 %v2517, %v2773
        %v2775 = vpop.f32.mrb[0].mxu0
        %2776 = vmatprep.mubr.f32.mxu0 0.0
        %2777 = vmatmul.mubr.f32.gmra.mrb[0].mxu0 %v2633
        %v2778 = vpop.f32.mrb[0].mxu0
        %v2779 = vadd.f32 %v2522, %v2778
        %v2780 = vpop.f32.mrb[0].mxu0
        %2781 = vmatprep.mubr.f32.mxu0 0.0
        %2782 = vmatmul.mubr.f32.gmra.mrb[0].mxu0 %v2636
        %v2783 = vpop.f32.mrb[0].mxu0
        %v2784 = vadd.f32 %v2527, %v2783
        %v2785 = vpop.f32.mrb[0].mxu0
        %2786 = vmatprep.mubr.f32.mxu0 0.0
        %2787 = vmatmul.mubr.f32.gmra.mrb[0].mxu0 %v2639
        %v2788 = vpop.f32.mrb[0].mxu0
        %v2789 = vadd.f32 %v2532, %v2788
        %v2790 = vpop.f32.mrb[0].mxu0
        %2791 = vmatprep.mubr.f32.mxu0 0.0
        %2792 = vmatmul.mubr.f32.gmra.mrb[0].mxu0 %v2642
        %v2793 = vpop.f32.mrb[0].mxu0
        %v2794 = vadd.f32 %v2537, %v2793
        %v2795 = vpop.f32.mrb[0].mxu0
        %2796 = vmatprep.mubr.f32.mxu0 0.0
        %2797 = vmatmul.mubr.f32.gmra.mrb[0].mxu0 %v2645
        %v2798 = vpop.f32.mrb[0].mxu0
        %v2799 = vadd.f32 %v2542, %v2798
        %v2800 = vpop.f32.mrb[0].mxu0
        %2801 = vmatprep.mubr.f32.mxu0 0.0
        %2802 = vmatmul.mubr.f32.gmra.mrb[0].mxu0 %v2648
        %v2803 = vpop.f32.mrb[0].mxu0
        %v2804 = vadd.f32 %v2547, %v2803
        %v2805 = vpop.f32.mrb[0].mxu0
        %2806 = vmatprep.mubr.f32.mxu0 0.0
        %2807 = vmatmul.mubr.f32.gmra.mrb[0].mxu0 %v2651
        %v2808 = vpop.f32.mrb[0].mxu0
        %v2809 = vadd.f32 %v2552, %v2808
        %v2810 = vpop.f32.mrb[0].mxu0
        %2811 = vmatprep.mubr.f32.mxu0 0.0
        %2812 = vmatmul.mubr.f32.gmra.mrb[0].mxu0 %v2654
        %v2813 = vpop.f32.mrb[0].mxu0
        %v2814 = vadd.f32 %v2557, %v2813
        %v2815 = vpop.f32.mrb[0].mxu0
        %2816 = vmatprep.mubr.f32.mxu0 0.0
        %2817 = vmatmul.mubr.f32.gmra.mrb[0].mxu0 %v2657
        %v2818 = vpop.f32.mrb[0].mxu0
        %v2819 = vadd.f32 %v2562, %v2818
        %v2820 = vpop.f32.mrb[0].mxu0
        %2821 = vmatprep.mubr.f32.mxu0 0.0
        %2822 = vmatmul.mubr.f32.gmra.mrb[0].mxu0 %v2660
        %v2823 = vpop.f32.mrb[0].mxu0
        %v2824 = vadd.f32 %v2567, %v2823
        %v2825 = vpop.f32.mrb[0].mxu0
        %2826 = vmatprep.mubr.f32.mxu0 0.0
        %2827 = vmatmul.mubr.f32.gmra.mrb[0].mxu0 %v2663
        %v2828 = vpop.f32.mrb[0].mxu0
        %v2829 = vadd.f32 %v2572, %v2828
        %v2830 = vpop.f32.mrb[0].mxu0
        %2831 = vmatprep.mubr.f32.mxu0 0.0
        %2832 = vmatmul.mubr.f32.gmra.mrb[0].mxu0 %v2666
        %v2833 = vpop.f32.mrb[0].mxu0
        %v2834 = vadd.f32 %v2577, %v2833
        %v2835 = vpop.f32.mrb[0].mxu0
        %2836 = vmatprep.mubr.f32.mxu0 0.0
        %2837 = vmatmul.mubr.f32.gmra.mrb[0].mxu0 %v2669
        %v2838 = vpop.f32.mrb[0].mxu0
        %v2839 = vadd.f32 %v2582, %v2838
        %v2840 = vpop.f32.mrb[0].mxu0
        %2841 = vmatprep.mubr.f32.mxu0 0.0
        %2842 = vmatmul.mubr.f32.gmra.mrb[0].mxu0 %v2672
        %v2843 = vpop.f32.mrb[0].mxu0
        %v2844 = vadd.f32 %v2587, %v2843
        %v2845 = vpop.f32.mrb[0].mxu0
        %2846 = vmatprep.mubr.f32.mxu0 0.0
        %2847 = vmatmul.mubr.f32.gmra.mrb[0].mxu0 %v2675
        %v2848 = vpop.f32.mrb[0].mxu0
        %v2849 = vadd.f32 %v2592, %v2848
        %v2850 = vpop.f32.mrb[0].mxu0
        %2851 = vmatprep.mubr.f32.mxu0 0.0
        %2852 = vmatmul.mubr.f32.gmra.mrb[0].mxu0 %v2678
        %v2853 = vpop.f32.mrb[0].mxu0
        %v2854 = vadd.f32 %v2597, %v2853
        %v2855 = vpop.f32.mrb[0].mxu0
        %2856 = vmatprep.mubr.f32.mxu0 0.0
        %2857 = vmatmul.mubr.f32.gmra.mrb[0].mxu0 %v2681
        %v2858 = vpop.f32.mrb[0].mxu0
        %v2859 = vadd.f32 %v2602, %v2858
        %v2860 = vpop.f32.mrb[0].mxu0
        %2861 = vmatprep.mubr.f32.mxu0 0.0
        %2862 = vmatmul.mubr.f32.gmra.mrb[0].mxu0 %v2684
        %v2863 = vpop.f32.mrb[0].mxu0
        %v2864 = vadd.f32 %v2607, %v2863
        %v2865 = vpop.f32.mrb[0].mxu0
        %2866 = vmatprep.mubr.f32.mxu0 0.0
        %2867 = vmatmul.mubr.f32.gmra.mrb[0].mxu0 %v2687
        %v2868 = vpop.f32.mrb[0].mxu0
        %v2869 = vadd.f32 %v2612, %v2868
        %v2870 = vpop.f32.mrb[0].mxu0
        %2871 = vmatprep.mubr.f32.mxu0 0.0
        %2872 = vmatmul.mubr.f32.gmra.mrb[0].mxu0 %v2690
        %v2873 = vpop.f32.mrb[0].mxu0
        %v2874 = vadd.f32 %v2617, %v2873
        %v2875 = vpop.f32.mrb[0].mxu0
        %2876 = vdwg.mxu0
        %v2877 = vld [vmem:[#allocation2 + $0x19] sm:$0xff]
        %v2878 = vld [vmem:[#allocation2 + $0x21] sm:$0xff]
        %v2879 = vld [vmem:[#allocation2 + $0x29] sm:$0xff]
        %v2880 = vld [vmem:[#allocation2 + $0x31] sm:$0xff]
        %v2881 = vld [vmem:[#allocation2 + $0x39] sm:$0xff]
        %v2882 = vld [vmem:[#allocation2 + $0x41] sm:$0xff]
        %v2883 = vld [vmem:[#allocation2 + $0x49] sm:$0xff]
        %v2884 = vld [vmem:[#allocation2 + $0x51] sm:$0xff]
        %v2885 = vld [vmem:[#allocation2 + $0x59] sm:$0xff]
        %v2886 = vld [vmem:[#allocation2 + $0x61] sm:$0xff]
        %v2887 = vld [vmem:[#allocation2 + $0x69] sm:$0xff]
        %v2888 = vld [vmem:[#allocation2 + $0x71] sm:$0xff]
        %v2889 = vld [vmem:[#allocation2 + $0x79] sm:$0xff]
        %v2890 = vld [vmem:[#allocation2 + $0x81] sm:$0xff]
        %v2891 = vld [vmem:[#allocation2 + $0x89] sm:$0xff]
        %v2892 = vld [vmem:[#allocation2 + $0x91] sm:$0xff]
        %v2893 = vld [vmem:[#allocation2 + $0x99] sm:$0xff]
        %v2894 = vld [vmem:[#allocation2 + $0xa1] sm:$0xff]
        %v2895 = vld [vmem:[#allocation2 + $0xa9] sm:$0xff]
        %v2896 = vld [vmem:[#allocation2 + $0xb1] sm:$0xff]
        %v2897 = vld [vmem:[#allocation2 + $0xb9] sm:$0xff]
        %v2898 = vld [vmem:[#allocation2 + $0xc1] sm:$0xff]
        %v2899 = vld [vmem:[#allocation2 + $0xc9] sm:$0xff]
        %v2900 = vld [vmem:[#allocation2 + $0xd1] sm:$0xff]
        %v2902 = vsel %vm2261, %v2877, 0
        %v2905 = vsel %vm2261, %v2878, 0
        %v2908 = vsel %vm2261, %v2879, 0
        %v2911 = vsel %vm2261, %v2880, 0
        %v2914 = vsel %vm2261, %v2881, 0
        %v2917 = vsel %vm2261, %v2882, 0
        %v2920 = vsel %vm2261, %v2883, 0
        %v2923 = vsel %vm2261, %v2884, 0
        %v2926 = vsel %vm2261, %v2885, 0
        %v2929 = vsel %vm2261, %v2886, 0
        %v2932 = vsel %vm2261, %v2887, 0
        %v2935 = vsel %vm2261, %v2888, 0
        %v2938 = vsel %vm2261, %v2889, 0
        %v2941 = vsel %vm2261, %v2890, 0
        %v2944 = vsel %vm2261, %v2891, 0
        %v2947 = vsel %vm2261, %v2892, 0
        %v2950 = vsel %vm2261, %v2893, 0
        %v2953 = vsel %vm2261, %v2894, 0
        %v2956 = vsel %vm2261, %v2895, 0
        %v2959 = vsel %vm2261, %v2896, 0
        %v2962 = vsel %vm2261, %v2897, 0
        %v2965 = vsel %vm2261, %v2898, 0
        %v2968 = vsel %vm2261, %v2899, 0
        %v2971 = vsel %vm2261, %v2900, 0
        %2973 = vmatprep.subr.mxu0 0.0
        %2974 = vmatpush1.msra.mxu0 %v406
        %2975 = vmatprep.subr.mxu0 0.0
        %2976 = vmatpush1.msra.mxu0 %v407
        %2977 = vmatprep.subr.mxu0 0.0
        %2978 = vmatpush1.msra.mxu0 %v408
        %2979 = vmatprep.subr.mxu0 0.0
        %2980 = vmatpush1.msra.mxu0 %v409
        %2981 = vmatprep.subr.mxu0 0.0
        %2982 = vmatpush1.msra.mxu0 0.0
        %2983 = vmatprep.subr.mxu0 0.0
        %2984 = vmatpush1.msra.mxu0 0.0
        %2985 = vmatprep.subr.mxu0 0.0
        %2986 = vmatpush1.msra.mxu0 0.0
        %2987 = vmatprep.subr.mxu0 0.0
        %2988 = vmatpush1.msra.mxu0 0.0
        %2989 = vmatprep.subr.mxu0 0.0
        %2990 = vmatpush1.msra.mxu0 0.0
        %2991 = vmatprep.subr.mxu0 0.0
        %2992 = vmatpush1.msra.mxu0 0.0
        %2993 = vmatprep.subr.mxu0 0.0
        %2994 = vmatpush1.msra.mxu0 0.0
        %2995 = vmatprep.subr.mxu0 0.0
        %2996 = vmatpush1.msra.mxu0 0.0
        %2997 = vmatprep.subr.mxu0 0.0
        %2998 = vmatpush1.msra.mxu0 0.0
        %2999 = vmatprep.subr.mxu0 0.0
        %3000 = vmatpush1.msra.mxu0 0.0
        %3001 = vmatprep.subr.mxu0 0.0
        %3002 = vmatpush1.msra.mxu0 0.0
        %3003 = vmatprep.subr.mxu0 0.0
        %3004 = vmatpush1.msra.mxu0 0.0
        %3005 = vmatprep.subr.mxu0 0.0
        %3006 = vmatpush1.msra.mxu0 0.0
        %3007 = vmatprep.subr.mxu0 0.0
        %3008 = vmatpush1.msra.mxu0 0.0
        %3009 = vmatprep.subr.mxu0 0.0
        %3010 = vmatpush1.msra.mxu0 0.0
        %3011 = vmatprep.subr.mxu0 0.0
        %3012 = vmatpush1.msra.mxu0 0.0
        %3013 = vmatprep.subr.mxu0 0.0
        %3014 = vmatpush1.msra.mxu0 0.0
        %3015 = vmatprep.subr.mxu0 0.0
        %3016 = vmatpush1.msra.mxu0 0.0
        %3017 = vmatprep.subr.mxu0 0.0
        %3018 = vmatpush1.msra.mxu0 0.0
        %3019 = vmatprep.subr.mxu0 0.0
        %3020 = vmatpush1.msra.mxu0 0.0
        %3021 = vmatprep.subr.mxu0 0.0
        %3022 = vmatpush1.msra.mxu0 0.0
        %3023 = vmatprep.subr.mxu0 0.0
        %3024 = vmatpush1.msra.mxu0 0.0
        %3025 = vmatprep.subr.mxu0 0.0
        %3026 = vmatpush1.msra.mxu0 0.0
        %3027 = vmatprep.subr.mxu0 0.0
        %3028 = vmatpush1.msra.mxu0 0.0
        %3029 = vmatprep.subr.mxu0 0.0
        %3030 = vmatpush1.msra.mxu0 0.0
        %3031 = vmatprep.subr.mxu0 0.0
        %3032 = vmatpush1.msra.mxu0 0.0
        %3033 = vmatprep.subr.mxu0 0.0
        %3034 = vmatpush1.msra.mxu0 0.0
        %3035 = vmatprep.subr.mxu0 0.0
        %3036 = vmatpush1.msra.mxu0 0.0
        %3037 = vmatprep.mubr.f32.mxu0 0.0
        %3038 = vmatmul.mubr.f32.gmra.mrb[0].mxu0 %v2902
        %v3039 = vpop.f32.mrb[0].mxu0
        %v3040 = vadd.f32 0.0, %v3039
        %v3041 = vpop.f32.mrb[0].mxu0
        %3042 = vmatprep.mubr.f32.mxu0 0.0
        %3043 = vmatmul.mubr.f32.gmra.mrb[0].mxu0 %v2905
        %v3044 = vpop.f32.mrb[0].mxu0
        %v3045 = vadd.f32 0.0, %v3044
        %v3046 = vpop.f32.mrb[0].mxu0
        %3047 = vmatprep.mubr.f32.mxu0 0.0
        %3048 = vmatmul.mubr.f32.gmra.mrb[0].mxu0 %v2908
        %v3049 = vpop.f32.mrb[0].mxu0
        %v3050 = vadd.f32 0.0, %v3049
        %v3051 = vpop.f32.mrb[0].mxu0
        %3052 = vmatprep.mubr.f32.mxu0 0.0
        %3053 = vmatmul.mubr.f32.gmra.mrb[0].mxu0 %v2911
        %v3054 = vpop.f32.mrb[0].mxu0
        %v3055 = vadd.f32 0.0, %v3054
        %v3056 = vpop.f32.mrb[0].mxu0
        %3057 = vmatprep.mubr.f32.mxu0 0.0
        %3058 = vmatmul.mubr.f32.gmra.mrb[0].mxu0 %v2914
        %v3059 = vpop.f32.mrb[0].mxu0
        %v3060 = vadd.f32 0.0, %v3059
        %v3061 = vpop.f32.mrb[0].mxu0
        %3062 = vmatprep.mubr.f32.mxu0 0.0
        %3063 = vmatmul.mubr.f32.gmra.mrb[0].mxu0 %v2917
        %v3064 = vpop.f32.mrb[0].mxu0
        %v3065 = vadd.f32 0.0, %v3064
        %v3066 = vpop.f32.mrb[0].mxu0
        %3067 = vmatprep.mubr.f32.mxu0 0.0
        %3068 = vmatmul.mubr.f32.gmra.mrb[0].mxu0 %v2920
        %v3069 = vpop.f32.mrb[0].mxu0
        %v3070 = vadd.f32 0.0, %v3069
        %v3071 = vpop.f32.mrb[0].mxu0
        %3072 = vmatprep.mubr.f32.mxu0 0.0
        %3073 = vmatmul.mubr.f32.gmra.mrb[0].mxu0 %v2923
        %v3074 = vpop.f32.mrb[0].mxu0
        %v3075 = vadd.f32 0.0, %v3074
        %v3076 = vpop.f32.mrb[0].mxu0
        %3077 = vmatprep.mubr.f32.mxu0 0.0
        %3078 = vmatmul.mubr.f32.gmra.mrb[0].mxu0 %v2926
        %v3079 = vpop.f32.mrb[0].mxu0
        %v3080 = vadd.f32 0.0, %v3079
        %v3081 = vpop.f32.mrb[0].mxu0
        %3082 = vmatprep.mubr.f32.mxu0 0.0
        %3083 = vmatmul.mubr.f32.gmra.mrb[0].mxu0 %v2929
        %v3084 = vpop.f32.mrb[0].mxu0
        %v3085 = vadd.f32 0.0, %v3084
        %v3086 = vpop.f32.mrb[0].mxu0
        %3087 = vmatprep.mubr.f32.mxu0 0.0
        %3088 = vmatmul.mubr.f32.gmra.mrb[0].mxu0 %v2932
        %v3089 = vpop.f32.mrb[0].mxu0
        %v3090 = vadd.f32 0.0, %v3089
        %v3091 = vpop.f32.mrb[0].mxu0
        %3092 = vmatprep.mubr.f32.mxu0 0.0
        %3093 = vmatmul.mubr.f32.gmra.mrb[0].mxu0 %v2935
        %v3094 = vpop.f32.mrb[0].mxu0
        %v3095 = vadd.f32 0.0, %v3094
        %v3096 = vpop.f32.mrb[0].mxu0
        %3097 = vmatprep.mubr.f32.mxu0 0.0
        %3098 = vmatmul.mubr.f32.gmra.mrb[0].mxu0 %v2938
        %v3099 = vpop.f32.mrb[0].mxu0
        %v3100 = vadd.f32 0.0, %v3099
        %v3101 = vpop.f32.mrb[0].mxu0
        %3102 = vmatprep.mubr.f32.mxu0 0.0
        %3103 = vmatmul.mubr.f32.gmra.mrb[0].mxu0 %v2941
        %v3104 = vpop.f32.mrb[0].mxu0
        %v3105 = vadd.f32 0.0, %v3104
        %v3106 = vpop.f32.mrb[0].mxu0
        %3107 = vmatprep.mubr.f32.mxu0 0.0
        %3108 = vmatmul.mubr.f32.gmra.mrb[0].mxu0 %v2944
        %v3109 = vpop.f32.mrb[0].mxu0
        %v3110 = vadd.f32 0.0, %v3109
        %v3111 = vpop.f32.mrb[0].mxu0
        %3112 = vmatprep.mubr.f32.mxu0 0.0
        %3113 = vmatmul.mubr.f32.gmra.mrb[0].mxu0 %v2947
        %v3114 = vpop.f32.mrb[0].mxu0
        %v3115 = vadd.f32 0.0, %v3114
        %v3116 = vpop.f32.mrb[0].mxu0
        %3117 = vmatprep.mubr.f32.mxu0 0.0
        %3118 = vmatmul.mubr.f32.gmra.mrb[0].mxu0 %v2950
        %v3119 = vpop.f32.mrb[0].mxu0
        %v3120 = vadd.f32 0.0, %v3119
        %v3121 = vpop.f32.mrb[0].mxu0
        %3122 = vmatprep.mubr.f32.mxu0 0.0
        %3123 = vmatmul.mubr.f32.gmra.mrb[0].mxu0 %v2953
        %v3124 = vpop.f32.mrb[0].mxu0
        %v3125 = vadd.f32 0.0, %v3124
        %v3126 = vpop.f32.mrb[0].mxu0
        %3127 = vmatprep.mubr.f32.mxu0 0.0
        %3128 = vmatmul.mubr.f32.gmra.mrb[0].mxu0 %v2956
        %v3129 = vpop.f32.mrb[0].mxu0
        %v3130 = vadd.f32 0.0, %v3129
        %v3131 = vpop.f32.mrb[0].mxu0
        %3132 = vmatprep.mubr.f32.mxu0 0.0
        %3133 = vmatmul.mubr.f32.gmra.mrb[0].mxu0 %v2959
        %v3134 = vpop.f32.mrb[0].mxu0
        %v3135 = vadd.f32 0.0, %v3134
        %v3136 = vpop.f32.mrb[0].mxu0
        %3137 = vmatprep.mubr.f32.mxu0 0.0
        %3138 = vmatmul.mubr.f32.gmra.mrb[0].mxu0 %v2962
        %v3139 = vpop.f32.mrb[0].mxu0
        %v3140 = vadd.f32 0.0, %v3139
        %v3141 = vpop.f32.mrb[0].mxu0
        %3142 = vmatprep.mubr.f32.mxu0 0.0
        %3143 = vmatmul.mubr.f32.gmra.mrb[0].mxu0 %v2965
        %v3144 = vpop.f32.mrb[0].mxu0
        %v3145 = vadd.f32 0.0, %v3144
        %v3146 = vpop.f32.mrb[0].mxu0
        %3147 = vmatprep.mubr.f32.mxu0 0.0
        %3148 = vmatmul.mubr.f32.gmra.mrb[0].mxu0 %v2968
        %v3149 = vpop.f32.mrb[0].mxu0
        %v3150 = vadd.f32 0.0, %v3149
        %v3151 = vpop.f32.mrb[0].mxu0
        %3152 = vmatprep.mubr.f32.mxu0 0.0
        %3153 = vmatmul.mubr.f32.gmra.mrb[0].mxu0 %v2971
        %v3154 = vpop.f32.mrb[0].mxu0
        %v3155 = vadd.f32 0.0, %v3154
        %v3156 = vpop.f32.mrb[0].mxu0
        %3157 = vdwg.mxu0
        %v3158 = vadd.f32 %v2759, %v3040
        %v3159 = vadd.f32 %v2764, %v3045
        %v3160 = vadd.f32 %v2769, %v3050
        %v3161 = vadd.f32 %v2774, %v3055
        %v3162 = vadd.f32 %v2779, %v3060
        %v3163 = vadd.f32 %v2784, %v3065
        %v3164 = vadd.f32 %v2789, %v3070
        %v3165 = vadd.f32 %v2794, %v3075
        %v3166 = vadd.f32 %v2799, %v3080
        %v3167 = vadd.f32 %v2804, %v3085
        %v3168 = vadd.f32 %v2809, %v3090
        %v3169 = vadd.f32 %v2814, %v3095
        %v3170 = vadd.f32 %v2819, %v3100
        %v3171 = vadd.f32 %v2824, %v3105
        %v3172 = vadd.f32 %v2829, %v3110
        %v3173 = vadd.f32 %v2834, %v3115
        %v3174 = vadd.f32 %v2839, %v3120
        %v3175 = vadd.f32 %v2844, %v3125
        %v3176 = vadd.f32 %v2849, %v3130
        %v3177 = vadd.f32 %v2854, %v3135
        %v3178 = vadd.f32 %v2859, %v3140
        %v3179 = vadd.f32 %v2864, %v3145
        %v3180 = vadd.f32 %v2869, %v3150
        %v3181 = vadd.f32 %v2874, %v3155
        %v3182 = vld [vmem:[#allocation2 + $0x2f] sm:$0xff]
        %v3183 = vld [vmem:[#allocation2 + $0x37] sm:$0xff]
        %v3184 = vld [vmem:[#allocation2 + $0x3f] sm:$0xff]
        %v3185 = vld [vmem:[#allocation2 + $0x47] sm:$0xff]
        %v3186 = vld [vmem:[#allocation2 + $0x4f] sm:$0xff]
        %v3187 = vld [vmem:[#allocation2 + $0x57] sm:$0xff]
        %v3188 = vld [vmem:[#allocation2 + $0x5f] sm:$0xff]
        %v3189 = vld [vmem:[#allocation2 + $0x67] sm:$0xff]
        %v3190 = vld [vmem:[#allocation2 + $0x6f] sm:$0xff]
        %v3191 = vld [vmem:[#allocation2 + $0x77] sm:$0xff]
        %v3192 = vld [vmem:[#allocation2 + $0x7f] sm:$0xff]
        %v3193 = vld [vmem:[#allocation2 + $0x87] sm:$0xff]
        %v3194 = vld [vmem:[#allocation2 + $0x8f] sm:$0xff]
        %v3195 = vld [vmem:[#allocation2 + $0x97] sm:$0xff]
        %v3196 = vld [vmem:[#allocation2 + $0x9f] sm:$0xff]
        %v3197 = vld [vmem:[#allocation2 + $0xa7] sm:$0xff]
        %v3198 = vld [vmem:[#allocation2 + $0xaf] sm:$0xff]
        %v3199 = vld [vmem:[#allocation2 + $0xb7] sm:$0xff]
        %v3200 = vld [vmem:[#allocation2 + $0xbf] sm:$0xff]
        %v3201 = vld [vmem:[#allocation2 + $0xc7] sm:$0xff]
        %v3202 = vld [vmem:[#allocation2 + $0xcf] sm:$0xff]
        %v3203 = vld [vmem:[#allocation2 + $0xd7] sm:$0xff]
        %v3204 = vld [vmem:[#allocation2 + $0xdf] sm:$0xff]
        %v3205 = vld [vmem:[#allocation2 + $0xe7] sm:$0xff]
        %v3207 = vsel %vm2261, %v3182, 0
        %v3210 = vsel %vm2261, %v3183, 0
        %v3213 = vsel %vm2261, %v3184, 0
        %v3216 = vsel %vm2261, %v3185, 0
        %v3219 = vsel %vm2261, %v3186, 0
        %v3222 = vsel %vm2261, %v3187, 0
        %v3225 = vsel %vm2261, %v3188, 0
        %v3228 = vsel %vm2261, %v3189, 0
        %v3231 = vsel %vm2261, %v3190, 0
        %v3234 = vsel %vm2261, %v3191, 0
        %v3237 = vsel %vm2261, %v3192, 0
        %v3240 = vsel %vm2261, %v3193, 0
        %v3243 = vsel %vm2261, %v3194, 0
        %v3246 = vsel %vm2261, %v3195, 0
        %v3249 = vsel %vm2261, %v3196, 0
        %v3252 = vsel %vm2261, %v3197, 0
        %v3255 = vsel %vm2261, %v3198, 0
        %v3258 = vsel %vm2261, %v3199, 0
        %v3261 = vsel %vm2261, %v3200, 0
        %v3264 = vsel %vm2261, %v3201, 0
        %v3267 = vsel %vm2261, %v3202, 0
        %v3270 = vsel %vm2261, %v3203, 0
        %v3273 = vsel %vm2261, %v3204, 0
        %v3276 = vsel %vm2261, %v3205, 0
        %3278 = vmatprep.subr.mxu0 0.0
        %3279 = vmatpush1.msra.mxu0 %v410
        %3280 = vmatprep.subr.mxu0 0.0
        %3281 = vmatpush1.msra.mxu0 %v411
        %3282 = vmatprep.subr.mxu0 0.0
        %3283 = vmatpush1.msra.mxu0 %v412
        %3284 = vmatprep.subr.mxu0 0.0
        %3285 = vmatpush1.msra.mxu0 %v413
        %3286 = vmatprep.subr.mxu0 0.0
        %3287 = vmatpush1.msra.mxu0 0.0
        %3288 = vmatprep.subr.mxu0 0.0
        %3289 = vmatpush1.msra.mxu0 0.0
        %3290 = vmatprep.subr.mxu0 0.0
        %3291 = vmatpush1.msra.mxu0 0.0
        %3292 = vmatprep.subr.mxu0 0.0
        %3293 = vmatpush1.msra.mxu0 0.0
        %3294 = vmatprep.subr.mxu0 0.0
        %3295 = vmatpush1.msra.mxu0 0.0
        %3296 = vmatprep.subr.mxu0 0.0
        %3297 = vmatpush1.msra.mxu0 0.0
        %3298 = vmatprep.subr.mxu0 0.0
        %3299 = vmatpush1.msra.mxu0 0.0
        %3300 = vmatprep.subr.mxu0 0.0
        %3301 = vmatpush1.msra.mxu0 0.0
        %3302 = vmatprep.subr.mxu0 0.0
        %3303 = vmatpush1.msra.mxu0 0.0
        %3304 = vmatprep.subr.mxu0 0.0
        %3305 = vmatpush1.msra.mxu0 0.0
        %3306 = vmatprep.subr.mxu0 0.0
        %3307 = vmatpush1.msra.mxu0 0.0
        %3308 = vmatprep.subr.mxu0 0.0
        %3309 = vmatpush1.msra.mxu0 0.0
        %3310 = vmatprep.subr.mxu0 0.0
        %3311 = vmatpush1.msra.mxu0 0.0
        %3312 = vmatprep.subr.mxu0 0.0
        %3313 = vmatpush1.msra.mxu0 0.0
        %3314 = vmatprep.subr.mxu0 0.0
        %3315 = vmatpush1.msra.mxu0 0.0
        %3316 = vmatprep.subr.mxu0 0.0
        %3317 = vmatpush1.msra.mxu0 0.0
        %3318 = vmatprep.subr.mxu0 0.0
        %3319 = vmatpush1.msra.mxu0 0.0
        %3320 = vmatprep.subr.mxu0 0.0
        %3321 = vmatpush1.msra.mxu0 0.0
        %3322 = vmatprep.subr.mxu0 0.0
        %3323 = vmatpush1.msra.mxu0 0.0
        %3324 = vmatprep.subr.mxu0 0.0
        %3325 = vmatpush1.msra.mxu0 0.0
        %3326 = vmatprep.subr.mxu0 0.0
        %3327 = vmatpush1.msra.mxu0 0.0
        %3328 = vmatprep.subr.mxu0 0.0
        %3329 = vmatpush1.msra.mxu0 0.0
        %3330 = vmatprep.subr.mxu0 0.0
        %3331 = vmatpush1.msra.mxu0 0.0
        %3332 = vmatprep.subr.mxu0 0.0
        %3333 = vmatpush1.msra.mxu0 0.0
        %3334 = vmatprep.subr.mxu0 0.0
        %3335 = vmatpush1.msra.mxu0 0.0
        %3336 = vmatprep.subr.mxu0 0.0
        %3337 = vmatpush1.msra.mxu0 0.0
        %3338 = vmatprep.subr.mxu0 0.0
        %3339 = vmatpush1.msra.mxu0 0.0
        %3340 = vmatprep.subr.mxu0 0.0
        %3341 = vmatpush1.msra.mxu0 0.0
        %3342 = vmatprep.mubr.f32.mxu0 0.0
        %3343 = vmatmul.mubr.f32.gmra.mrb[0].mxu0 %v3207
        %v3344 = vpop.f32.mrb[0].mxu0
        %v3345 = vadd.f32 0.0, %v3344
        %v3346 = vpop.f32.mrb[0].mxu0
        %3347 = vmatprep.mubr.f32.mxu0 0.0
        %3348 = vmatmul.mubr.f32.gmra.mrb[0].mxu0 %v3210
        %v3349 = vpop.f32.mrb[0].mxu0
        %v3350 = vadd.f32 0.0, %v3349
        %v3351 = vpop.f32.mrb[0].mxu0
        %3352 = vmatprep.mubr.f32.mxu0 0.0
        %3353 = vmatmul.mubr.f32.gmra.mrb[0].mxu0 %v3213
        %v3354 = vpop.f32.mrb[0].mxu0
        %v3355 = vadd.f32 0.0, %v3354
        %v3356 = vpop.f32.mrb[0].mxu0
        %3357 = vmatprep.mubr.f32.mxu0 0.0
        %3358 = vmatmul.mubr.f32.gmra.mrb[0].mxu0 %v3216
        %v3359 = vpop.f32.mrb[0].mxu0
        %v3360 = vadd.f32 0.0, %v3359
        %v3361 = vpop.f32.mrb[0].mxu0
        %3362 = vmatprep.mubr.f32.mxu0 0.0
        %3363 = vmatmul.mubr.f32.gmra.mrb[0].mxu0 %v3219
        %v3364 = vpop.f32.mrb[0].mxu0
        %v3365 = vadd.f32 0.0, %v3364
        %v3366 = vpop.f32.mrb[0].mxu0
        %3367 = vmatprep.mubr.f32.mxu0 0.0
        %3368 = vmatmul.mubr.f32.gmra.mrb[0].mxu0 %v3222
        %v3369 = vpop.f32.mrb[0].mxu0
        %v3370 = vadd.f32 0.0, %v3369
        %v3371 = vpop.f32.mrb[0].mxu0
        %3372 = vmatprep.mubr.f32.mxu0 0.0
        %3373 = vmatmul.mubr.f32.gmra.mrb[0].mxu0 %v3225
        %v3374 = vpop.f32.mrb[0].mxu0
        %v3375 = vadd.f32 0.0, %v3374
        %v3376 = vpop.f32.mrb[0].mxu0
        %3377 = vmatprep.mubr.f32.mxu0 0.0
        %3378 = vmatmul.mubr.f32.gmra.mrb[0].mxu0 %v3228
        %v3379 = vpop.f32.mrb[0].mxu0
        %v3380 = vadd.f32 0.0, %v3379
        %v3381 = vpop.f32.mrb[0].mxu0
        %3382 = vmatprep.mubr.f32.mxu0 0.0
        %3383 = vmatmul.mubr.f32.gmra.mrb[0].mxu0 %v3231
        %v3384 = vpop.f32.mrb[0].mxu0
        %v3385 = vadd.f32 0.0, %v3384
        %v3386 = vpop.f32.mrb[0].mxu0
        %3387 = vmatprep.mubr.f32.mxu0 0.0
        %3388 = vmatmul.mubr.f32.gmra.mrb[0].mxu0 %v3234
        %v3389 = vpop.f32.mrb[0].mxu0
        %v3390 = vadd.f32 0.0, %v3389
        %v3391 = vpop.f32.mrb[0].mxu0
        %3392 = vmatprep.mubr.f32.mxu0 0.0
        %3393 = vmatmul.mubr.f32.gmra.mrb[0].mxu0 %v3237
        %v3394 = vpop.f32.mrb[0].mxu0
        %v3395 = vadd.f32 0.0, %v3394
        %v3396 = vpop.f32.mrb[0].mxu0
        %3397 = vmatprep.mubr.f32.mxu0 0.0
        %3398 = vmatmul.mubr.f32.gmra.mrb[0].mxu0 %v3240
        %v3399 = vpop.f32.mrb[0].mxu0
        %v3400 = vadd.f32 0.0, %v3399
        %v3401 = vpop.f32.mrb[0].mxu0
        %3402 = vmatprep.mubr.f32.mxu0 0.0
        %3403 = vmatmul.mubr.f32.gmra.mrb[0].mxu0 %v3243
        %v3404 = vpop.f32.mrb[0].mxu0
        %v3405 = vadd.f32 0.0, %v3404
        %v3406 = vpop.f32.mrb[0].mxu0
        %3407 = vmatprep.mubr.f32.mxu0 0.0
        %3408 = vmatmul.mubr.f32.gmra.mrb[0].mxu0 %v3246
        %v3409 = vpop.f32.mrb[0].mxu0
        %v3410 = vadd.f32 0.0, %v3409
        %v3411 = vpop.f32.mrb[0].mxu0
        %3412 = vmatprep.mubr.f32.mxu0 0.0
        %3413 = vmatmul.mubr.f32.gmra.mrb[0].mxu0 %v3249
        %v3414 = vpop.f32.mrb[0].mxu0
        %v3415 = vadd.f32 0.0, %v3414
        %v3416 = vpop.f32.mrb[0].mxu0
        %3417 = vmatprep.mubr.f32.mxu0 0.0
        %3418 = vmatmul.mubr.f32.gmra.mrb[0].mxu0 %v3252
        %v3419 = vpop.f32.mrb[0].mxu0
        %v3420 = vadd.f32 0.0, %v3419
        %v3421 = vpop.f32.mrb[0].mxu0
        %3422 = vmatprep.mubr.f32.mxu0 0.0
        %3423 = vmatmul.mubr.f32.gmra.mrb[0].mxu0 %v3255
        %v3424 = vpop.f32.mrb[0].mxu0
        %v3425 = vadd.f32 0.0, %v3424
        %v3426 = vpop.f32.mrb[0].mxu0
        %3427 = vmatprep.mubr.f32.mxu0 0.0
        %3428 = vmatmul.mubr.f32.gmra.mrb[0].mxu0 %v3258
        %v3429 = vpop.f32.mrb[0].mxu0
        %v3430 = vadd.f32 0.0, %v3429
        %v3431 = vpop.f32.mrb[0].mxu0
        %3432 = vmatprep.mubr.f32.mxu0 0.0
        %3433 = vmatmul.mubr.f32.gmra.mrb[0].mxu0 %v3261
        %v3434 = vpop.f32.mrb[0].mxu0
        %v3435 = vadd.f32 0.0, %v3434
        %v3436 = vpop.f32.mrb[0].mxu0
        %3437 = vmatprep.mubr.f32.mxu0 0.0
        %3438 = vmatmul.mubr.f32.gmra.mrb[0].mxu0 %v3264
        %v3439 = vpop.f32.mrb[0].mxu0
        %v3440 = vadd.f32 0.0, %v3439
        %v3441 = vpop.f32.mrb[0].mxu0
        %3442 = vmatprep.mubr.f32.mxu0 0.0
        %3443 = vmatmul.mubr.f32.gmra.mrb[0].mxu0 %v3267
        %v3444 = vpop.f32.mrb[0].mxu0
        %v3445 = vadd.f32 0.0, %v3444
        %v3446 = vpop.f32.mrb[0].mxu0
        %3447 = vmatprep.mubr.f32.mxu0 0.0
        %3448 = vmatmul.mubr.f32.gmra.mrb[0].mxu0 %v3270
        %v3449 = vpop.f32.mrb[0].mxu0
        %v3450 = vadd.f32 0.0, %v3449
        %v3451 = vpop.f32.mrb[0].mxu0
        %3452 = vmatprep.mubr.f32.mxu0 0.0
        %3453 = vmatmul.mubr.f32.gmra.mrb[0].mxu0 %v3273
        %v3454 = vpop.f32.mrb[0].mxu0
        %v3455 = vadd.f32 0.0, %v3454
        %v3456 = vpop.f32.mrb[0].mxu0
        %3457 = vmatprep.mubr.f32.mxu0 0.0
        %3458 = vmatmul.mubr.f32.gmra.mrb[0].mxu0 %v3276
        %v3459 = vpop.f32.mrb[0].mxu0
        %v3460 = vadd.f32 0.0, %v3459
        %v3461 = vpop.f32.mrb[0].mxu0
        %3462 = vdwg.mxu0
        %v3463 = vadd.f32 %v3158, %v3345
        %v3464 = vadd.f32 %v3159, %v3350
        %v3465 = vadd.f32 %v3160, %v3355
        %v3466 = vadd.f32 %v3161, %v3360
        %v3467 = vadd.f32 %v3162, %v3365
        %v3468 = vadd.f32 %v3163, %v3370
        %v3469 = vadd.f32 %v3164, %v3375
        %v3470 = vadd.f32 %v3165, %v3380
        %v3471 = vadd.f32 %v3166, %v3385
        %v3472 = vadd.f32 %v3167, %v3390
        %v3473 = vadd.f32 %v3168, %v3395
        %v3474 = vadd.f32 %v3169, %v3400
        %v3475 = vadd.f32 %v3170, %v3405
        %v3476 = vadd.f32 %v3171, %v3410
        %v3477 = vadd.f32 %v3172, %v3415
        %v3478 = vadd.f32 %v3173, %v3420
        %v3479 = vadd.f32 %v3174, %v3425
        %v3480 = vadd.f32 %v3175, %v3430
        %v3481 = vadd.f32 %v3176, %v3435
        %v3482 = vadd.f32 %v3177, %v3440
        %v3483 = vadd.f32 %v3178, %v3445
        %v3484 = vadd.f32 %v3179, %v3450
        %v3485 = vadd.f32 %v3180, %v3455
        %v3486 = vadd.f32 %v3181, %v3460
        %v3487 = vld [vmem:[#allocation2 + $0x30] sm:$0xff]
        %v3488 = vld [vmem:[#allocation2 + $0x38] sm:$0xff]
        %v3489 = vld [vmem:[#allocation2 + $0x40] sm:$0xff]
        %v3490 = vld [vmem:[#allocation2 + $0x48] sm:$0xff]
        %v3491 = vld [vmem:[#allocation2 + $0x50] sm:$0xff]
        %v3492 = vld [vmem:[#allocation2 + $0x58] sm:$0xff]
        %v3493 = vld [vmem:[#allocation2 + $0x60] sm:$0xff]
        %v3494 = vld [vmem:[#allocation2 + $0x68] sm:$0xff]
        %v3495 = vld [vmem:[#allocation2 + $0x70] sm:$0xff]
        %v3496 = vld [vmem:[#allocation2 + $0x78] sm:$0xff]
        %v3497 = vld [vmem:[#allocation2 + $0x80] sm:$0xff]
        %v3498 = vld [vmem:[#allocation2 + $0x88] sm:$0xff]
        %v3499 = vld [vmem:[#allocation2 + $0x90] sm:$0xff]
        %v3500 = vld [vmem:[#allocation2 + $0x98] sm:$0xff]
        %v3501 = vld [vmem:[#allocation2 + $0xa0] sm:$0xff]
        %v3502 = vld [vmem:[#allocation2 + $0xa8] sm:$0xff]
        %v3503 = vld [vmem:[#allocation2 + $0xb0] sm:$0xff]
        %v3504 = vld [vmem:[#allocation2 + $0xb8] sm:$0xff]
        %v3505 = vld [vmem:[#allocation2 + $0xc0] sm:$0xff]
        %v3506 = vld [vmem:[#allocation2 + $0xc8] sm:$0xff]
        %v3507 = vld [vmem:[#allocation2 + $0xd0] sm:$0xff]
        %v3508 = vld [vmem:[#allocation2 + $0xd8] sm:$0xff]
        %v3509 = vld [vmem:[#allocation2 + $0xe0] sm:$0xff]
        %v3510 = vld [vmem:[#allocation2 + $0xe8] sm:$0xff]
        %v3512 = vsel %vm2261, %v3487, 0
        %v3515 = vsel %vm2261, %v3488, 0
        %v3518 = vsel %vm2261, %v3489, 0
        %v3521 = vsel %vm2261, %v3490, 0
        %v3524 = vsel %vm2261, %v3491, 0
        %v3527 = vsel %vm2261, %v3492, 0
        %v3530 = vsel %vm2261, %v3493, 0
        %v3533 = vsel %vm2261, %v3494, 0
        %v3536 = vsel %vm2261, %v3495, 0
        %v3539 = vsel %vm2261, %v3496, 0
        %v3542 = vsel %vm2261, %v3497, 0
        %v3545 = vsel %vm2261, %v3498, 0
        %v3548 = vsel %vm2261, %v3499, 0
        %v3551 = vsel %vm2261, %v3500, 0
        %v3554 = vsel %vm2261, %v3501, 0
        %v3557 = vsel %vm2261, %v3502, 0
        %v3560 = vsel %vm2261, %v3503, 0
        %v3563 = vsel %vm2261, %v3504, 0
        %v3566 = vsel %vm2261, %v3505, 0
        %v3569 = vsel %vm2261, %v3506, 0
        %v3572 = vsel %vm2261, %v3507, 0
        %v3575 = vsel %vm2261, %v3508, 0
        %v3578 = vsel %vm2261, %v3509, 0
        %v3581 = vsel %vm2261, %v3510, 0
        %3583 = vmatprep.subr.mxu0 0.0
        %3584 = vmatpush1.msra.mxu0 %v414
        %3585 = vmatprep.subr.mxu0 0.0
        %3586 = vmatpush1.msra.mxu0 %v415
        %3587 = vmatprep.subr.mxu0 0.0
        %3588 = vmatpush1.msra.mxu0 %v416
        %3589 = vmatprep.subr.mxu0 0.0
        %3590 = vmatpush1.msra.mxu0 %v417
        %3591 = vmatprep.subr.mxu0 0.0
        %3592 = vmatpush1.msra.mxu0 0.0
        %3593 = vmatprep.subr.mxu0 0.0
        %3594 = vmatpush1.msra.mxu0 0.0
        %3595 = vmatprep.subr.mxu0 0.0
        %3596 = vmatpush1.msra.mxu0 0.0
        %3597 = vmatprep.subr.mxu0 0.0
        %3598 = vmatpush1.msra.mxu0 0.0
        %3599 = vmatprep.subr.mxu0 0.0
        %3600 = vmatpush1.msra.mxu0 0.0
        %3601 = vmatprep.subr.mxu0 0.0
        %3602 = vmatpush1.msra.mxu0 0.0
        %3603 = vmatprep.subr.mxu0 0.0
        %3604 = vmatpush1.msra.mxu0 0.0
        %3605 = vmatprep.subr.mxu0 0.0
        %3606 = vmatpush1.msra.mxu0 0.0
        %3607 = vmatprep.subr.mxu0 0.0
        %3608 = vmatpush1.msra.mxu0 0.0
        %3609 = vmatprep.subr.mxu0 0.0
        %3610 = vmatpush1.msra.mxu0 0.0
        %3611 = vmatprep.subr.mxu0 0.0
        %3612 = vmatpush1.msra.mxu0 0.0
        %3613 = vmatprep.subr.mxu0 0.0
        %3614 = vmatpush1.msra.mxu0 0.0
        %3615 = vmatprep.subr.mxu0 0.0
        %3616 = vmatpush1.msra.mxu0 0.0
        %3617 = vmatprep.subr.mxu0 0.0
        %3618 = vmatpush1.msra.mxu0 0.0
        %3619 = vmatprep.subr.mxu0 0.0
        %3620 = vmatpush1.msra.mxu0 0.0
        %3621 = vmatprep.subr.mxu0 0.0
        %3622 = vmatpush1.msra.mxu0 0.0
        %3623 = vmatprep.subr.mxu0 0.0
        %3624 = vmatpush1.msra.mxu0 0.0
        %3625 = vmatprep.subr.mxu0 0.0
        %3626 = vmatpush1.msra.mxu0 0.0
        %3627 = vmatprep.subr.mxu0 0.0
        %3628 = vmatpush1.msra.mxu0 0.0
        %3629 = vmatprep.subr.mxu0 0.0
        %3630 = vmatpush1.msra.mxu0 0.0
        %3631 = vmatprep.subr.mxu0 0.0
        %3632 = vmatpush1.msra.mxu0 0.0
        %3633 = vmatprep.subr.mxu0 0.0
        %3634 = vmatpush1.msra.mxu0 0.0
        %3635 = vmatprep.subr.mxu0 0.0
        %3636 = vmatpush1.msra.mxu0 0.0
        %3637 = vmatprep.subr.mxu0 0.0
        %3638 = vmatpush1.msra.mxu0 0.0
        %3639 = vmatprep.subr.mxu0 0.0
        %3640 = vmatpush1.msra.mxu0 0.0
        %3641 = vmatprep.subr.mxu0 0.0
        %3642 = vmatpush1.msra.mxu0 0.0
        %3643 = vmatprep.subr.mxu0 0.0
        %3644 = vmatpush1.msra.mxu0 0.0
        %3645 = vmatprep.subr.mxu0 0.0
        %3646 = vmatpush1.msra.mxu0 0.0
        %3647 = vmatprep.mubr.f32.mxu0 0.0
        %3648 = vmatmul.mubr.f32.gmra.mrb[0].mxu0 %v3512
        %v3649 = vpop.f32.mrb[0].mxu0
        %v3650 = vadd.f32 0.0, %v3649
        %v3651 = vpop.f32.mrb[0].mxu0
        %3652 = vmatprep.mubr.f32.mxu0 0.0
        %3653 = vmatmul.mubr.f32.gmra.mrb[0].mxu0 %v3515
        %v3654 = vpop.f32.mrb[0].mxu0
        %v3655 = vadd.f32 0.0, %v3654
        %v3656 = vpop.f32.mrb[0].mxu0
        %3657 = vmatprep.mubr.f32.mxu0 0.0
        %3658 = vmatmul.mubr.f32.gmra.mrb[0].mxu0 %v3518
        %v3659 = vpop.f32.mrb[0].mxu0
        %v3660 = vadd.f32 0.0, %v3659
        %v3661 = vpop.f32.mrb[0].mxu0
        %3662 = vmatprep.mubr.f32.mxu0 0.0
        %3663 = vmatmul.mubr.f32.gmra.mrb[0].mxu0 %v3521
        %v3664 = vpop.f32.mrb[0].mxu0
        %v3665 = vadd.f32 0.0, %v3664
        %v3666 = vpop.f32.mrb[0].mxu0
        %3667 = vmatprep.mubr.f32.mxu0 0.0
        %3668 = vmatmul.mubr.f32.gmra.mrb[0].mxu0 %v3524
        %v3669 = vpop.f32.mrb[0].mxu0
        %v3670 = vadd.f32 0.0, %v3669
        %v3671 = vpop.f32.mrb[0].mxu0
        %3672 = vmatprep.mubr.f32.mxu0 0.0
        %3673 = vmatmul.mubr.f32.gmra.mrb[0].mxu0 %v3527
        %v3674 = vpop.f32.mrb[0].mxu0
        %v3675 = vadd.f32 0.0, %v3674
        %v3676 = vpop.f32.mrb[0].mxu0
        %3677 = vmatprep.mubr.f32.mxu0 0.0
        %3678 = vmatmul.mubr.f32.gmra.mrb[0].mxu0 %v3530
        %v3679 = vpop.f32.mrb[0].mxu0
        %v3680 = vadd.f32 0.0, %v3679
        %v3681 = vpop.f32.mrb[0].mxu0
        %3682 = vmatprep.mubr.f32.mxu0 0.0
        %3683 = vmatmul.mubr.f32.gmra.mrb[0].mxu0 %v3533
        %v3684 = vpop.f32.mrb[0].mxu0
        %v3685 = vadd.f32 0.0, %v3684
        %v3686 = vpop.f32.mrb[0].mxu0
        %3687 = vmatprep.mubr.f32.mxu0 0.0
        %3688 = vmatmul.mubr.f32.gmra.mrb[0].mxu0 %v3536
        %v3689 = vpop.f32.mrb[0].mxu0
        %v3690 = vadd.f32 0.0, %v3689
        %v3691 = vpop.f32.mrb[0].mxu0
        %3692 = vmatprep.mubr.f32.mxu0 0.0
        %3693 = vmatmul.mubr.f32.gmra.mrb[0].mxu0 %v3539
        %v3694 = vpop.f32.mrb[0].mxu0
        %v3695 = vadd.f32 0.0, %v3694
        %v3696 = vpop.f32.mrb[0].mxu0
        %3697 = vmatprep.mubr.f32.mxu0 0.0
        %3698 = vmatmul.mubr.f32.gmra.mrb[0].mxu0 %v3542
        %v3699 = vpop.f32.mrb[0].mxu0
        %v3700 = vadd.f32 0.0, %v3699
        %v3701 = vpop.f32.mrb[0].mxu0
        %3702 = vmatprep.mubr.f32.mxu0 0.0
        %3703 = vmatmul.mubr.f32.gmra.mrb[0].mxu0 %v3545
        %v3704 = vpop.f32.mrb[0].mxu0
        %v3705 = vadd.f32 0.0, %v3704
        %v3706 = vpop.f32.mrb[0].mxu0
        %3707 = vmatprep.mubr.f32.mxu0 0.0
        %3708 = vmatmul.mubr.f32.gmra.mrb[0].mxu0 %v3548
        %v3709 = vpop.f32.mrb[0].mxu0
        %v3710 = vadd.f32 0.0, %v3709
        %v3711 = vpop.f32.mrb[0].mxu0
        %3712 = vmatprep.mubr.f32.mxu0 0.0
        %3713 = vmatmul.mubr.f32.gmra.mrb[0].mxu0 %v3551
        %v3714 = vpop.f32.mrb[0].mxu0
        %v3715 = vadd.f32 0.0, %v3714
        %v3716 = vpop.f32.mrb[0].mxu0
        %3717 = vmatprep.mubr.f32.mxu0 0.0
        %3718 = vmatmul.mubr.f32.gmra.mrb[0].mxu0 %v3554
        %v3719 = vpop.f32.mrb[0].mxu0
        %v3720 = vadd.f32 0.0, %v3719
        %v3721 = vpop.f32.mrb[0].mxu0
        %3722 = vmatprep.mubr.f32.mxu0 0.0
        %3723 = vmatmul.mubr.f32.gmra.mrb[0].mxu0 %v3557
        %v3724 = vpop.f32.mrb[0].mxu0
        %v3725 = vadd.f32 0.0, %v3724
        %v3726 = vpop.f32.mrb[0].mxu0
        %3727 = vmatprep.mubr.f32.mxu0 0.0
        %3728 = vmatmul.mubr.f32.gmra.mrb[0].mxu0 %v3560
        %v3729 = vpop.f32.mrb[0].mxu0
        %v3730 = vadd.f32 0.0, %v3729
        %v3731 = vpop.f32.mrb[0].mxu0
        %3732 = vmatprep.mubr.f32.mxu0 0.0
        %3733 = vmatmul.mubr.f32.gmra.mrb[0].mxu0 %v3563
        %v3734 = vpop.f32.mrb[0].mxu0
        %v3735 = vadd.f32 0.0, %v3734
        %v3736 = vpop.f32.mrb[0].mxu0
        %3737 = vmatprep.mubr.f32.mxu0 0.0
        %3738 = vmatmul.mubr.f32.gmra.mrb[0].mxu0 %v3566
        %v3739 = vpop.f32.mrb[0].mxu0
        %v3740 = vadd.f32 0.0, %v3739
        %v3741 = vpop.f32.mrb[0].mxu0
        %3742 = vmatprep.mubr.f32.mxu0 0.0
        %3743 = vmatmul.mubr.f32.gmra.mrb[0].mxu0 %v3569
        %v3744 = vpop.f32.mrb[0].mxu0
        %v3745 = vadd.f32 0.0, %v3744
        %v3746 = vpop.f32.mrb[0].mxu0
        %3747 = vmatprep.mubr.f32.mxu0 0.0
        %3748 = vmatmul.mubr.f32.gmra.mrb[0].mxu0 %v3572
        %v3749 = vpop.f32.mrb[0].mxu0
        %v3750 = vadd.f32 0.0, %v3749
        %v3751 = vpop.f32.mrb[0].mxu0
        %3752 = vmatprep.mubr.f32.mxu0 0.0
        %3753 = vmatmul.mubr.f32.gmra.mrb[0].mxu0 %v3575
        %v3754 = vpop.f32.mrb[0].mxu0
        %v3755 = vadd.f32 0.0, %v3754
        %v3756 = vpop.f32.mrb[0].mxu0
        %3757 = vmatprep.mubr.f32.mxu0 0.0
        %3758 = vmatmul.mubr.f32.gmra.mrb[0].mxu0 %v3578
        %v3759 = vpop.f32.mrb[0].mxu0
        %v3760 = vadd.f32 0.0, %v3759
        %v3761 = vpop.f32.mrb[0].mxu0
        %3762 = vmatprep.mubr.f32.mxu0 0.0
        %3763 = vmatmul.mubr.f32.gmra.mrb[0].mxu0 %v3581
        %v3764 = vpop.f32.mrb[0].mxu0
        %v3765 = vadd.f32 0.0, %v3764
        %v3766 = vpop.f32.mrb[0].mxu0
        %3767 = vdwg.mxu0
        %v3768 = vadd.f32 %v3463, %v3650
        %v3769 = vadd.f32 %v3464, %v3655
        %v3770 = vadd.f32 %v3465, %v3660
        %v3771 = vadd.f32 %v3466, %v3665
        %v3772 = vadd.f32 %v3467, %v3670
        %v3773 = vadd.f32 %v3468, %v3675
        %v3774 = vadd.f32 %v3469, %v3680
        %v3775 = vadd.f32 %v3470, %v3685
        %v3776 = vadd.f32 %v3471, %v3690
        %v3777 = vadd.f32 %v3472, %v3695
        %v3778 = vadd.f32 %v3473, %v3700
        %v3779 = vadd.f32 %v3474, %v3705
        %v3780 = vadd.f32 %v3475, %v3710
        %v3781 = vadd.f32 %v3476, %v3715
        %v3782 = vadd.f32 %v3477, %v3720
        %v3783 = vadd.f32 %v3478, %v3725
        %v3784 = vadd.f32 %v3479, %v3730
        %v3785 = vadd.f32 %v3480, %v3735
        %v3786 = vadd.f32 %v3481, %v3740
        %v3787 = vadd.f32 %v3482, %v3745
        %v3788 = vadd.f32 %v3483, %v3750
        %v3789 = vadd.f32 %v3484, %v3755
        %v3790 = vadd.f32 %v3485, %v3760
        %v3791 = vadd.f32 %v3486, %v3765
        %v3792 = vld [vmem:[#allocation2 + $0x31] sm:$0xff]
        %v3793 = vld [vmem:[#allocation2 + $0x39] sm:$0xff]
        %v3794 = vld [vmem:[#allocation2 + $0x41] sm:$0xff]
        %v3795 = vld [vmem:[#allocation2 + $0x49] sm:$0xff]
        %v3796 = vld [vmem:[#allocation2 + $0x51] sm:$0xff]
        %v3797 = vld [vmem:[#allocation2 + $0x59] sm:$0xff]
        %v3798 = vld [vmem:[#allocation2 + $0x61] sm:$0xff]
        %v3799 = vld [vmem:[#allocation2 + $0x69] sm:$0xff]
        %v3800 = vld [vmem:[#allocation2 + $0x71] sm:$0xff]
        %v3801 = vld [vmem:[#allocation2 + $0x79] sm:$0xff]
        %v3802 = vld [vmem:[#allocation2 + $0x81] sm:$0xff]
        %v3803 = vld [vmem:[#allocation2 + $0x89] sm:$0xff]
        %v3804 = vld [vmem:[#allocation2 + $0x91] sm:$0xff]
        %v3805 = vld [vmem:[#allocation2 + $0x99] sm:$0xff]
        %v3806 = vld [vmem:[#allocation2 + $0xa1] sm:$0xff]
        %v3807 = vld [vmem:[#allocation2 + $0xa9] sm:$0xff]
        %v3808 = vld [vmem:[#allocation2 + $0xb1] sm:$0xff]
        %v3809 = vld [vmem:[#allocation2 + $0xb9] sm:$0xff]
        %v3810 = vld [vmem:[#allocation2 + $0xc1] sm:$0xff]
        %v3811 = vld [vmem:[#allocation2 + $0xc9] sm:$0xff]
        %v3812 = vld [vmem:[#allocation2 + $0xd1] sm:$0xff]
        %v3813 = vld [vmem:[#allocation2 + $0xd9] sm:$0xff]
        %v3814 = vld [vmem:[#allocation2 + $0xe1] sm:$0xff]
        %v3815 = vld [vmem:[#allocation2 + $0xe9] sm:$0xff]
        %v3817 = vsel %vm2261, %v3792, 0
        %v3820 = vsel %vm2261, %v3793, 0
        %v3823 = vsel %vm2261, %v3794, 0
        %v3826 = vsel %vm2261, %v3795, 0
        %v3829 = vsel %vm2261, %v3796, 0
        %v3832 = vsel %vm2261, %v3797, 0
        %v3835 = vsel %vm2261, %v3798, 0
        %v3838 = vsel %vm2261, %v3799, 0
        %v3841 = vsel %vm2261, %v3800, 0
        %v3844 = vsel %vm2261, %v3801, 0
        %v3847 = vsel %vm2261, %v3802, 0
        %v3850 = vsel %vm2261, %v3803, 0
        %v3853 = vsel %vm2261, %v3804, 0
        %v3856 = vsel %vm2261, %v3805, 0
        %v3859 = vsel %vm2261, %v3806, 0
        %v3862 = vsel %vm2261, %v3807, 0
        %v3865 = vsel %vm2261, %v3808, 0
        %v3868 = vsel %vm2261, %v3809, 0
        %v3871 = vsel %vm2261, %v3810, 0
        %v3874 = vsel %vm2261, %v3811, 0
        %v3877 = vsel %vm2261, %v3812, 0
        %v3880 = vsel %vm2261, %v3813, 0
        %v3883 = vsel %vm2261, %v3814, 0
        %v3886 = vsel %vm2261, %v3815, 0
        %3888 = vmatprep.subr.mxu0 0.0
        %3889 = vmatpush1.msra.mxu0 %v418
        %3890 = vmatprep.subr.mxu0 0.0
        %3891 = vmatpush1.msra.mxu0 %v419
        %3892 = vmatprep.subr.mxu0 0.0
        %3893 = vmatpush1.msra.mxu0 %v420
        %3894 = vmatprep.subr.mxu0 0.0
        %3895 = vmatpush1.msra.mxu0 %v421
        %3896 = vmatprep.subr.mxu0 0.0
        %3897 = vmatpush1.msra.mxu0 0.0
        %3898 = vmatprep.subr.mxu0 0.0
        %3899 = vmatpush1.msra.mxu0 0.0
        %3900 = vmatprep.subr.mxu0 0.0
        %3901 = vmatpush1.msra.mxu0 0.0
        %3902 = vmatprep.subr.mxu0 0.0
        %3903 = vmatpush1.msra.mxu0 0.0
        %3904 = vmatprep.subr.mxu0 0.0
        %3905 = vmatpush1.msra.mxu0 0.0
        %3906 = vmatprep.subr.mxu0 0.0
        %3907 = vmatpush1.msra.mxu0 0.0
        %3908 = vmatprep.subr.mxu0 0.0
        %3909 = vmatpush1.msra.mxu0 0.0
        %3910 = vmatprep.subr.mxu0 0.0
        %3911 = vmatpush1.msra.mxu0 0.0
        %3912 = vmatprep.subr.mxu0 0.0
        %3913 = vmatpush1.msra.mxu0 0.0
        %3914 = vmatprep.subr.mxu0 0.0
        %3915 = vmatpush1.msra.mxu0 0.0
        %3916 = vmatprep.subr.mxu0 0.0
        %3917 = vmatpush1.msra.mxu0 0.0
        %3918 = vmatprep.subr.mxu0 0.0
        %3919 = vmatpush1.msra.mxu0 0.0
        %3920 = vmatprep.subr.mxu0 0.0
        %3921 = vmatpush1.msra.mxu0 0.0
        %3922 = vmatprep.subr.mxu0 0.0
        %3923 = vmatpush1.msra.mxu0 0.0
        %3924 = vmatprep.subr.mxu0 0.0
        %3925 = vmatpush1.msra.mxu0 0.0
        %3926 = vmatprep.subr.mxu0 0.0
        %3927 = vmatpush1.msra.mxu0 0.0
        %3928 = vmatprep.subr.mxu0 0.0
        %3929 = vmatpush1.msra.mxu0 0.0
        %3930 = vmatprep.subr.mxu0 0.0
        %3931 = vmatpush1.msra.mxu0 0.0
        %3932 = vmatprep.subr.mxu0 0.0
        %3933 = vmatpush1.msra.mxu0 0.0
        %3934 = vmatprep.subr.mxu0 0.0
        %3935 = vmatpush1.msra.mxu0 0.0
        %3936 = vmatprep.subr.mxu0 0.0
        %3937 = vmatpush1.msra.mxu0 0.0
        %3938 = vmatprep.subr.mxu0 0.0
        %3939 = vmatpush1.msra.mxu0 0.0
        %3940 = vmatprep.subr.mxu0 0.0
        %3941 = vmatpush1.msra.mxu0 0.0
        %3942 = vmatprep.subr.mxu0 0.0
        %3943 = vmatpush1.msra.mxu0 0.0
        %3944 = vmatprep.subr.mxu0 0.0
        %3945 = vmatpush1.msra.mxu0 0.0
        %3946 = vmatprep.subr.mxu0 0.0
        %3947 = vmatpush1.msra.mxu0 0.0
        %3948 = vmatprep.subr.mxu0 0.0
        %3949 = vmatpush1.msra.mxu0 0.0
        %3950 = vmatprep.subr.mxu0 0.0
        %3951 = vmatpush1.msra.mxu0 0.0
        %3952 = vmatprep.mubr.f32.mxu0 0.0
        %3953 = vmatmul.mubr.f32.gmra.mrb[0].mxu0 %v3817
        %v3954 = vpop.f32.mrb[0].mxu0
        %v3955 = vadd.f32 0.0, %v3954
        %v3956 = vpop.f32.mrb[0].mxu0
        %3957 = vmatprep.mubr.f32.mxu0 0.0
        %3958 = vmatmul.mubr.f32.gmra.mrb[0].mxu0 %v3820
        %v3959 = vpop.f32.mrb[0].mxu0
        %v3960 = vadd.f32 0.0, %v3959
        %v3961 = vpop.f32.mrb[0].mxu0
        %3962 = vmatprep.mubr.f32.mxu0 0.0
        %3963 = vmatmul.mubr.f32.gmra.mrb[0].mxu0 %v3823
        %v3964 = vpop.f32.mrb[0].mxu0
        %v3965 = vadd.f32 0.0, %v3964
        %v3966 = vpop.f32.mrb[0].mxu0
        %3967 = vmatprep.mubr.f32.mxu0 0.0
        %3968 = vmatmul.mubr.f32.gmra.mrb[0].mxu0 %v3826
        %v3969 = vpop.f32.mrb[0].mxu0
        %v3970 = vadd.f32 0.0, %v3969
        %v3971 = vpop.f32.mrb[0].mxu0
        %3972 = vmatprep.mubr.f32.mxu0 0.0
        %3973 = vmatmul.mubr.f32.gmra.mrb[0].mxu0 %v3829
        %v3974 = vpop.f32.mrb[0].mxu0
        %v3975 = vadd.f32 0.0, %v3974
        %v3976 = vpop.f32.mrb[0].mxu0
        %3977 = vmatprep.mubr.f32.mxu0 0.0
        %3978 = vmatmul.mubr.f32.gmra.mrb[0].mxu0 %v3832
        %v3979 = vpop.f32.mrb[0].mxu0
        %v3980 = vadd.f32 0.0, %v3979
        %v3981 = vpop.f32.mrb[0].mxu0
        %3982 = vmatprep.mubr.f32.mxu0 0.0
        %3983 = vmatmul.mubr.f32.gmra.mrb[0].mxu0 %v3835
        %v3984 = vpop.f32.mrb[0].mxu0
        %v3985 = vadd.f32 0.0, %v3984
        %v3986 = vpop.f32.mrb[0].mxu0
        %3987 = vmatprep.mubr.f32.mxu0 0.0
        %3988 = vmatmul.mubr.f32.gmra.mrb[0].mxu0 %v3838
        %v3989 = vpop.f32.mrb[0].mxu0
        %v3990 = vadd.f32 0.0, %v3989
        %v3991 = vpop.f32.mrb[0].mxu0
        %3992 = vmatprep.mubr.f32.mxu0 0.0
        %3993 = vmatmul.mubr.f32.gmra.mrb[0].mxu0 %v3841
        %v3994 = vpop.f32.mrb[0].mxu0
        %v3995 = vadd.f32 0.0, %v3994
        %v3996 = vpop.f32.mrb[0].mxu0
        %3997 = vmatprep.mubr.f32.mxu0 0.0
        %3998 = vmatmul.mubr.f32.gmra.mrb[0].mxu0 %v3844
        %v3999 = vpop.f32.mrb[0].mxu0
        %v4000 = vadd.f32 0.0, %v3999
        %v4001 = vpop.f32.mrb[0].mxu0
        %4002 = vmatprep.mubr.f32.mxu0 0.0
        %4003 = vmatmul.mubr.f32.gmra.mrb[0].mxu0 %v3847
        %v4004 = vpop.f32.mrb[0].mxu0
        %v4005 = vadd.f32 0.0, %v4004
        %v4006 = vpop.f32.mrb[0].mxu0
        %4007 = vmatprep.mubr.f32.mxu0 0.0
        %4008 = vmatmul.mubr.f32.gmra.mrb[0].mxu0 %v3850
        %v4009 = vpop.f32.mrb[0].mxu0
        %v4010 = vadd.f32 0.0, %v4009
        %v4011 = vpop.f32.mrb[0].mxu0
        %4012 = vmatprep.mubr.f32.mxu0 0.0
        %4013 = vmatmul.mubr.f32.gmra.mrb[0].mxu0 %v3853
        %v4014 = vpop.f32.mrb[0].mxu0
        %v4015 = vadd.f32 0.0, %v4014
        %v4016 = vpop.f32.mrb[0].mxu0
        %4017 = vmatprep.mubr.f32.mxu0 0.0
        %4018 = vmatmul.mubr.f32.gmra.mrb[0].mxu0 %v3856
        %v4019 = vpop.f32.mrb[0].mxu0
        %v4020 = vadd.f32 0.0, %v4019
        %v4021 = vpop.f32.mrb[0].mxu0
        %4022 = vmatprep.mubr.f32.mxu0 0.0
        %4023 = vmatmul.mubr.f32.gmra.mrb[0].mxu0 %v3859
        %v4024 = vpop.f32.mrb[0].mxu0
        %v4025 = vadd.f32 0.0, %v4024
        %v4026 = vpop.f32.mrb[0].mxu0
        %4027 = vmatprep.mubr.f32.mxu0 0.0
        %4028 = vmatmul.mubr.f32.gmra.mrb[0].mxu0 %v3862
        %v4029 = vpop.f32.mrb[0].mxu0
        %v4030 = vadd.f32 0.0, %v4029
        %v4031 = vpop.f32.mrb[0].mxu0
        %4032 = vmatprep.mubr.f32.mxu0 0.0
        %4033 = vmatmul.mubr.f32.gmra.mrb[0].mxu0 %v3865
        %v4034 = vpop.f32.mrb[0].mxu0
        %v4035 = vadd.f32 0.0, %v4034
        %v4036 = vpop.f32.mrb[0].mxu0
        %4037 = vmatprep.mubr.f32.mxu0 0.0
        %4038 = vmatmul.mubr.f32.gmra.mrb[0].mxu0 %v3868
        %v4039 = vpop.f32.mrb[0].mxu0
        %v4040 = vadd.f32 0.0, %v4039
        %v4041 = vpop.f32.mrb[0].mxu0
        %4042 = vmatprep.mubr.f32.mxu0 0.0
        %4043 = vmatmul.mubr.f32.gmra.mrb[0].mxu0 %v3871
        %v4044 = vpop.f32.mrb[0].mxu0
        %v4045 = vadd.f32 0.0, %v4044
        %v4046 = vpop.f32.mrb[0].mxu0
        %4047 = vmatprep.mubr.f32.mxu0 0.0
        %4048 = vmatmul.mubr.f32.gmra.mrb[0].mxu0 %v3874
        %v4049 = vpop.f32.mrb[0].mxu0
        %v4050 = vadd.f32 0.0, %v4049
        %v4051 = vpop.f32.mrb[0].mxu0
        %4052 = vmatprep.mubr.f32.mxu0 0.0
        %4053 = vmatmul.mubr.f32.gmra.mrb[0].mxu0 %v3877
        %v4054 = vpop.f32.mrb[0].mxu0
        %v4055 = vadd.f32 0.0, %v4054
        %v4056 = vpop.f32.mrb[0].mxu0
        %4057 = vmatprep.mubr.f32.mxu0 0.0
        %4058 = vmatmul.mubr.f32.gmra.mrb[0].mxu0 %v3880
        %v4059 = vpop.f32.mrb[0].mxu0
        %v4060 = vadd.f32 0.0, %v4059
        %v4061 = vpop.f32.mrb[0].mxu0
        %4062 = vmatprep.mubr.f32.mxu0 0.0
        %4063 = vmatmul.mubr.f32.gmra.mrb[0].mxu0 %v3883
        %v4064 = vpop.f32.mrb[0].mxu0
        %v4065 = vadd.f32 0.0, %v4064
        %v4066 = vpop.f32.mrb[0].mxu0
        %4067 = vmatprep.mubr.f32.mxu0 0.0
        %4068 = vmatmul.mubr.f32.gmra.mrb[0].mxu0 %v3886
        %v4069 = vpop.f32.mrb[0].mxu0
        %v4070 = vadd.f32 0.0, %v4069
        %v4071 = vpop.f32.mrb[0].mxu0
        %4072 = vdwg.mxu0
        %v4073 = vadd.f32 %v3768, %v3955
        %v4074 = vadd.f32 %v3769, %v3960
        %v4075 = vadd.f32 %v3770, %v3965
        %v4076 = vadd.f32 %v3771, %v3970
        %v4077 = vadd.f32 %v3772, %v3975
        %v4078 = vadd.f32 %v3773, %v3980
        %v4079 = vadd.f32 %v3774, %v3985
        %v4080 = vadd.f32 %v3775, %v3990
        %v4081 = vadd.f32 %v3776, %v3995
        %v4082 = vadd.f32 %v3777, %v4000
        %v4083 = vadd.f32 %v3778, %v4005
        %v4084 = vadd.f32 %v3779, %v4010
        %v4085 = vadd.f32 %v3780, %v4015
        %v4086 = vadd.f32 %v3781, %v4020
        %v4087 = vadd.f32 %v3782, %v4025
        %v4088 = vadd.f32 %v3783, %v4030
        %v4089 = vadd.f32 %v3784, %v4035
        %v4090 = vadd.f32 %v3785, %v4040
        %v4091 = vadd.f32 %v3786, %v4045
        %v4092 = vadd.f32 %v3787, %v4050
        %v4093 = vadd.f32 %v3788, %v4055
        %v4094 = vadd.f32 %v3789, %v4060
        %v4095 = vadd.f32 %v3790, %v4065
        %v4096 = vadd.f32 %v3791, %v4070
        %v4097 = vld [vmem:[#allocation2 + $0x47] sm:$0xff]
        %v4098 = vld [vmem:[#allocation2 + $0x4f] sm:$0xff]
        %v4099 = vld [vmem:[#allocation2 + $0x57] sm:$0xff]
        %v4100 = vld [vmem:[#allocation2 + $0x5f] sm:$0xff]
        %v4101 = vld [vmem:[#allocation2 + $0x67] sm:$0xff]
        %v4102 = vld [vmem:[#allocation2 + $0x6f] sm:$0xff]
        %v4103 = vld [vmem:[#allocation2 + $0x77] sm:$0xff]
        %v4104 = vld [vmem:[#allocation2 + $0x7f] sm:$0xff]
        %v4105 = vld [vmem:[#allocation2 + $0x87] sm:$0xff]
        %v4106 = vld [vmem:[#allocation2 + $0x8f] sm:$0xff]
        %v4107 = vld [vmem:[#allocation2 + $0x97] sm:$0xff]
        %v4108 = vld [vmem:[#allocation2 + $0x9f] sm:$0xff]
        %v4109 = vld [vmem:[#allocation2 + $0xa7] sm:$0xff]
        %v4110 = vld [vmem:[#allocation2 + $0xaf] sm:$0xff]
        %v4111 = vld [vmem:[#allocation2 + $0xb7] sm:$0xff]
        %v4112 = vld [vmem:[#allocation2 + $0xbf] sm:$0xff]
        %v4113 = vld [vmem:[#allocation2 + $0xc7] sm:$0xff]
        %v4114 = vld [vmem:[#allocation2 + $0xcf] sm:$0xff]
        %v4115 = vld [vmem:[#allocation2 + $0xd7] sm:$0xff]
        %v4116 = vld [vmem:[#allocation2 + $0xdf] sm:$0xff]
        %v4117 = vld [vmem:[#allocation2 + $0xe7] sm:$0xff]
        %v4118 = vld [vmem:[#allocation2 + $0xef] sm:$0xff]
        %v4119 = vld [vmem:[#allocation2 + $0xf7] sm:$0xff]
        %v4120 = vld [vmem:[#allocation2 + $0xff] sm:$0xff]
        %v4122 = vsel %vm2261, %v4097, 0
        %v4125 = vsel %vm2261, %v4098, 0
        %v4128 = vsel %vm2261, %v4099, 0
        %v4131 = vsel %vm2261, %v4100, 0
        %v4134 = vsel %vm2261, %v4101, 0
        %v4137 = vsel %vm2261, %v4102, 0
        %v4140 = vsel %vm2261, %v4103, 0
        %v4143 = vsel %vm2261, %v4104, 0
        %v4146 = vsel %vm2261, %v4105, 0
        %v4149 = vsel %vm2261, %v4106, 0
        %v4152 = vsel %vm2261, %v4107, 0
        %v4155 = vsel %vm2261, %v4108, 0
        %v4158 = vsel %vm2261, %v4109, 0
        %v4161 = vsel %vm2261, %v4110, 0
        %v4164 = vsel %vm2261, %v4111, 0
        %v4167 = vsel %vm2261, %v4112, 0
        %v4170 = vsel %vm2261, %v4113, 0
        %v4173 = vsel %vm2261, %v4114, 0
        %v4176 = vsel %vm2261, %v4115, 0
        %v4179 = vsel %vm2261, %v4116, 0
        %v4182 = vsel %vm2261, %v4117, 0
        %v4185 = vsel %vm2261, %v4118, 0
        %v4188 = vsel %vm2261, %v4119, 0
        %v4191 = vsel %vm2261, %v4120, 0
        %4193 = vmatprep.subr.mxu0 0.0
        %4194 = vmatpush1.msra.mxu0 %v422
        %4195 = vmatprep.subr.mxu0 0.0
        %4196 = vmatpush1.msra.mxu0 %v423
        %4197 = vmatprep.subr.mxu0 0.0
        %4198 = vmatpush1.msra.mxu0 %v424
        %4199 = vmatprep.subr.mxu0 0.0
        %4200 = vmatpush1.msra.mxu0 %v425
        %4201 = vmatprep.subr.mxu0 0.0
        %4202 = vmatpush1.msra.mxu0 0.0
        %4203 = vmatprep.subr.mxu0 0.0
        %4204 = vmatpush1.msra.mxu0 0.0
        %4205 = vmatprep.subr.mxu0 0.0
        %4206 = vmatpush1.msra.mxu0 0.0
        %4207 = vmatprep.subr.mxu0 0.0
        %4208 = vmatpush1.msra.mxu0 0.0
        %4209 = vmatprep.subr.mxu0 0.0
        %4210 = vmatpush1.msra.mxu0 0.0
        %4211 = vmatprep.subr.mxu0 0.0
        %4212 = vmatpush1.msra.mxu0 0.0
        %4213 = vmatprep.subr.mxu0 0.0
        %4214 = vmatpush1.msra.mxu0 0.0
        %4215 = vmatprep.subr.mxu0 0.0
        %4216 = vmatpush1.msra.mxu0 0.0
        %4217 = vmatprep.subr.mxu0 0.0
        %4218 = vmatpush1.msra.mxu0 0.0
        %4219 = vmatprep.subr.mxu0 0.0
        %4220 = vmatpush1.msra.mxu0 0.0
        %4221 = vmatprep.subr.mxu0 0.0
        %4222 = vmatpush1.msra.mxu0 0.0
        %4223 = vmatprep.subr.mxu0 0.0
        %4224 = vmatpush1.msra.mxu0 0.0
        %4225 = vmatprep.subr.mxu0 0.0
        %4226 = vmatpush1.msra.mxu0 0.0
        %4227 = vmatprep.subr.mxu0 0.0
        %4228 = vmatpush1.msra.mxu0 0.0
        %4229 = vmatprep.subr.mxu0 0.0
        %4230 = vmatpush1.msra.mxu0 0.0
        %4231 = vmatprep.subr.mxu0 0.0
        %4232 = vmatpush1.msra.mxu0 0.0
        %4233 = vmatprep.subr.mxu0 0.0
        %4234 = vmatpush1.msra.mxu0 0.0
        %4235 = vmatprep.subr.mxu0 0.0
        %4236 = vmatpush1.msra.mxu0 0.0
        %4237 = vmatprep.subr.mxu0 0.0
        %4238 = vmatpush1.msra.mxu0 0.0
        %4239 = vmatprep.subr.mxu0 0.0
        %4240 = vmatpush1.msra.mxu0 0.0
        %4241 = vmatprep.subr.mxu0 0.0
        %4242 = vmatpush1.msra.mxu0 0.0
        %4243 = vmatprep.subr.mxu0 0.0
        %4244 = vmatpush1.msra.mxu0 0.0
        %4245 = vmatprep.subr.mxu0 0.0
        %4246 = vmatpush1.msra.mxu0 0.0
        %4247 = vmatprep.subr.mxu0 0.0
        %4248 = vmatpush1.msra.mxu0 0.0
        %4249 = vmatprep.subr.mxu0 0.0
        %4250 = vmatpush1.msra.mxu0 0.0
        %4251 = vmatprep.subr.mxu0 0.0
        %4252 = vmatpush1.msra.mxu0 0.0
        %4253 = vmatprep.subr.mxu0 0.0
        %4254 = vmatpush1.msra.mxu0 0.0
        %4255 = vmatprep.subr.mxu0 0.0
        %4256 = vmatpush1.msra.mxu0 0.0
        %4257 = vmatprep.mubr.f32.mxu0 0.0
        %4258 = vmatmul.mubr.f32.gmra.mrb[0].mxu0 %v4122
        %v4259 = vpop.f32.mrb[0].mxu0
        %v4260 = vadd.f32 0.0, %v4259
        %v4261 = vpop.f32.mrb[0].mxu0
        %4262 = vmatprep.mubr.f32.mxu0 0.0
        %4263 = vmatmul.mubr.f32.gmra.mrb[0].mxu0 %v4125
        %v4264 = vpop.f32.mrb[0].mxu0
        %v4265 = vadd.f32 0.0, %v4264
        %v4266 = vpop.f32.mrb[0].mxu0
        %4267 = vmatprep.mubr.f32.mxu0 0.0
        %4268 = vmatmul.mubr.f32.gmra.mrb[0].mxu0 %v4128
        %v4269 = vpop.f32.mrb[0].mxu0
        %v4270 = vadd.f32 0.0, %v4269
        %v4271 = vpop.f32.mrb[0].mxu0
        %4272 = vmatprep.mubr.f32.mxu0 0.0
        %4273 = vmatmul.mubr.f32.gmra.mrb[0].mxu0 %v4131
        %v4274 = vpop.f32.mrb[0].mxu0
        %v4275 = vadd.f32 0.0, %v4274
        %v4276 = vpop.f32.mrb[0].mxu0
        %4277 = vmatprep.mubr.f32.mxu0 0.0
        %4278 = vmatmul.mubr.f32.gmra.mrb[0].mxu0 %v4134
        %v4279 = vpop.f32.mrb[0].mxu0
        %v4280 = vadd.f32 0.0, %v4279
        %v4281 = vpop.f32.mrb[0].mxu0
        %4282 = vmatprep.mubr.f32.mxu0 0.0
        %4283 = vmatmul.mubr.f32.gmra.mrb[0].mxu0 %v4137
        %v4284 = vpop.f32.mrb[0].mxu0
        %v4285 = vadd.f32 0.0, %v4284
        %v4286 = vpop.f32.mrb[0].mxu0
        %4287 = vmatprep.mubr.f32.mxu0 0.0
        %4288 = vmatmul.mubr.f32.gmra.mrb[0].mxu0 %v4140
        %v4289 = vpop.f32.mrb[0].mxu0
        %v4290 = vadd.f32 0.0, %v4289
        %v4291 = vpop.f32.mrb[0].mxu0
        %4292 = vmatprep.mubr.f32.mxu0 0.0
        %4293 = vmatmul.mubr.f32.gmra.mrb[0].mxu0 %v4143
        %v4294 = vpop.f32.mrb[0].mxu0
        %v4295 = vadd.f32 0.0, %v4294
        %v4296 = vpop.f32.mrb[0].mxu0
        %4297 = vmatprep.mubr.f32.mxu0 0.0
        %4298 = vmatmul.mubr.f32.gmra.mrb[0].mxu0 %v4146
        %v4299 = vpop.f32.mrb[0].mxu0
        %v4300 = vadd.f32 0.0, %v4299
        %v4301 = vpop.f32.mrb[0].mxu0
        %4302 = vmatprep.mubr.f32.mxu0 0.0
        %4303 = vmatmul.mubr.f32.gmra.mrb[0].mxu0 %v4149
        %v4304 = vpop.f32.mrb[0].mxu0
        %v4305 = vadd.f32 0.0, %v4304
        %v4306 = vpop.f32.mrb[0].mxu0
        %4307 = vmatprep.mubr.f32.mxu0 0.0
        %4308 = vmatmul.mubr.f32.gmra.mrb[0].mxu0 %v4152
        %v4309 = vpop.f32.mrb[0].mxu0
        %v4310 = vadd.f32 0.0, %v4309
        %v4311 = vpop.f32.mrb[0].mxu0
        %4312 = vmatprep.mubr.f32.mxu0 0.0
        %4313 = vmatmul.mubr.f32.gmra.mrb[0].mxu0 %v4155
        %v4314 = vpop.f32.mrb[0].mxu0
        %v4315 = vadd.f32 0.0, %v4314
        %v4316 = vpop.f32.mrb[0].mxu0
        %4317 = vmatprep.mubr.f32.mxu0 0.0
        %4318 = vmatmul.mubr.f32.gmra.mrb[0].mxu0 %v4158
        %v4319 = vpop.f32.mrb[0].mxu0
        %v4320 = vadd.f32 0.0, %v4319
        %v4321 = vpop.f32.mrb[0].mxu0
        %4322 = vmatprep.mubr.f32.mxu0 0.0
        %4323 = vmatmul.mubr.f32.gmra.mrb[0].mxu0 %v4161
        %v4324 = vpop.f32.mrb[0].mxu0
        %v4325 = vadd.f32 0.0, %v4324
        %v4326 = vpop.f32.mrb[0].mxu0
        %4327 = vmatprep.mubr.f32.mxu0 0.0
        %4328 = vmatmul.mubr.f32.gmra.mrb[0].mxu0 %v4164
        %v4329 = vpop.f32.mrb[0].mxu0
        %v4330 = vadd.f32 0.0, %v4329
        %v4331 = vpop.f32.mrb[0].mxu0
        %4332 = vmatprep.mubr.f32.mxu0 0.0
        %4333 = vmatmul.mubr.f32.gmra.mrb[0].mxu0 %v4167
        %v4334 = vpop.f32.mrb[0].mxu0
        %v4335 = vadd.f32 0.0, %v4334
        %v4336 = vpop.f32.mrb[0].mxu0
        %4337 = vmatprep.mubr.f32.mxu0 0.0
        %4338 = vmatmul.mubr.f32.gmra.mrb[0].mxu0 %v4170
        %v4339 = vpop.f32.mrb[0].mxu0
        %v4340 = vadd.f32 0.0, %v4339
        %v4341 = vpop.f32.mrb[0].mxu0
        %4342 = vmatprep.mubr.f32.mxu0 0.0
        %4343 = vmatmul.mubr.f32.gmra.mrb[0].mxu0 %v4173
        %v4344 = vpop.f32.mrb[0].mxu0
        %v4345 = vadd.f32 0.0, %v4344
        %v4346 = vpop.f32.mrb[0].mxu0
        %4347 = vmatprep.mubr.f32.mxu0 0.0
        %4348 = vmatmul.mubr.f32.gmra.mrb[0].mxu0 %v4176
        %v4349 = vpop.f32.mrb[0].mxu0
        %v4350 = vadd.f32 0.0, %v4349
        %v4351 = vpop.f32.mrb[0].mxu0
        %4352 = vmatprep.mubr.f32.mxu0 0.0
        %4353 = vmatmul.mubr.f32.gmra.mrb[0].mxu0 %v4179
        %v4354 = vpop.f32.mrb[0].mxu0
        %v4355 = vadd.f32 0.0, %v4354
        %v4356 = vpop.f32.mrb[0].mxu0
        %4357 = vmatprep.mubr.f32.mxu0 0.0
        %4358 = vmatmul.mubr.f32.gmra.mrb[0].mxu0 %v4182
        %v4359 = vpop.f32.mrb[0].mxu0
        %v4360 = vadd.f32 0.0, %v4359
        %v4361 = vpop.f32.mrb[0].mxu0
        %4362 = vmatprep.mubr.f32.mxu0 0.0
        %4363 = vmatmul.mubr.f32.gmra.mrb[0].mxu0 %v4185
        %v4364 = vpop.f32.mrb[0].mxu0
        %v4365 = vadd.f32 0.0, %v4364
        %v4366 = vpop.f32.mrb[0].mxu0
        %4367 = vmatprep.mubr.f32.mxu0 0.0
        %4368 = vmatmul.mubr.f32.gmra.mrb[0].mxu0 %v4188
        %v4369 = vpop.f32.mrb[0].mxu0
        %v4370 = vadd.f32 0.0, %v4369
        %v4371 = vpop.f32.mrb[0].mxu0
        %4372 = vmatprep.mubr.f32.mxu0 0.0
        %4373 = vmatmul.mubr.f32.gmra.mrb[0].mxu0 %v4191
        %v4374 = vpop.f32.mrb[0].mxu0
        %v4375 = vadd.f32 0.0, %v4374
        %v4376 = vpop.f32.mrb[0].mxu0
        %4377 = vdwg.mxu0
        %v4378 = vadd.f32 %v4073, %v4260
        %v4379 = vadd.f32 %v4074, %v4265
        %v4380 = vadd.f32 %v4075, %v4270
        %v4381 = vadd.f32 %v4076, %v4275
        %v4382 = vadd.f32 %v4077, %v4280
        %v4383 = vadd.f32 %v4078, %v4285
        %v4384 = vadd.f32 %v4079, %v4290
        %v4385 = vadd.f32 %v4080, %v4295
        %v4386 = vadd.f32 %v4081, %v4300
        %v4387 = vadd.f32 %v4082, %v4305
        %v4388 = vadd.f32 %v4083, %v4310
        %v4389 = vadd.f32 %v4084, %v4315
        %v4390 = vadd.f32 %v4085, %v4320
        %v4391 = vadd.f32 %v4086, %v4325
        %v4392 = vadd.f32 %v4087, %v4330
        %v4393 = vadd.f32 %v4088, %v4335
        %v4394 = vadd.f32 %v4089, %v4340
        %v4395 = vadd.f32 %v4090, %v4345
        %v4396 = vadd.f32 %v4091, %v4350
        %v4397 = vadd.f32 %v4092, %v4355
        %v4398 = vadd.f32 %v4093, %v4360
        %v4399 = vadd.f32 %v4094, %v4365
        %v4400 = vadd.f32 %v4095, %v4370
        %v4401 = vadd.f32 %v4096, %v4375
        %v4402 = vld [vmem:[#allocation2 + $0x48] sm:$0xff]
        %v4403 = vld [vmem:[#allocation2 + $0x50] sm:$0xff]
        %v4404 = vld [vmem:[#allocation2 + $0x58] sm:$0xff]
        %v4405 = vld [vmem:[#allocation2 + $0x60] sm:$0xff]
        %v4406 = vld [vmem:[#allocation2 + $0x68] sm:$0xff]
        %v4407 = vld [vmem:[#allocation2 + $0x70] sm:$0xff]
        %v4408 = vld [vmem:[#allocation2 + $0x78] sm:$0xff]
        %v4409 = vld [vmem:[#allocation2 + $0x80] sm:$0xff]
        %v4410 = vld [vmem:[#allocation2 + $0x88] sm:$0xff]
        %v4411 = vld [vmem:[#allocation2 + $0x90] sm:$0xff]
        %v4412 = vld [vmem:[#allocation2 + $0x98] sm:$0xff]
        %v4413 = vld [vmem:[#allocation2 + $0xa0] sm:$0xff]
        %v4414 = vld [vmem:[#allocation2 + $0xa8] sm:$0xff]
        %v4415 = vld [vmem:[#allocation2 + $0xb0] sm:$0xff]
        %v4416 = vld [vmem:[#allocation2 + $0xb8] sm:$0xff]
        %v4417 = vld [vmem:[#allocation2 + $0xc0] sm:$0xff]
        %v4418 = vld [vmem:[#allocation2 + $0xc8] sm:$0xff]
        %v4419 = vld [vmem:[#allocation2 + $0xd0] sm:$0xff]
        %v4420 = vld [vmem:[#allocation2 + $0xd8] sm:$0xff]
        %v4421 = vld [vmem:[#allocation2 + $0xe0] sm:$0xff]
        %v4422 = vld [vmem:[#allocation2 + $0xe8] sm:$0xff]
        %v4423 = vld [vmem:[#allocation2 + $0xf0] sm:$0xff]
        %v4424 = vld [vmem:[#allocation2 + $0xf8] sm:$0xff]
        %v4425 = vld [vmem:[#allocation2 + $0x100] sm:$0xff]
        %v4427 = vsel %vm2261, %v4402, 0
        %v4430 = vsel %vm2261, %v4403, 0
        %v4433 = vsel %vm2261, %v4404, 0
        %v4436 = vsel %vm2261, %v4405, 0
        %v4439 = vsel %vm2261, %v4406, 0
        %v4442 = vsel %vm2261, %v4407, 0
        %v4445 = vsel %vm2261, %v4408, 0
        %v4448 = vsel %vm2261, %v4409, 0
        %v4451 = vsel %vm2261, %v4410, 0
        %v4454 = vsel %vm2261, %v4411, 0
        %v4457 = vsel %vm2261, %v4412, 0
        %v4460 = vsel %vm2261, %v4413, 0
        %v4463 = vsel %vm2261, %v4414, 0
        %v4466 = vsel %vm2261, %v4415, 0
        %v4469 = vsel %vm2261, %v4416, 0
        %v4472 = vsel %vm2261, %v4417, 0
        %v4475 = vsel %vm2261, %v4418, 0
        %v4478 = vsel %vm2261, %v4419, 0
        %v4481 = vsel %vm2261, %v4420, 0
        %v4484 = vsel %vm2261, %v4421, 0
        %v4487 = vsel %vm2261, %v4422, 0
        %v4490 = vsel %vm2261, %v4423, 0
        %v4493 = vsel %vm2261, %v4424, 0
        %v4496 = vsel %vm2261, %v4425, 0
        %4498 = vmatprep.subr.mxu0 0.0
        %4499 = vmatpush1.msra.mxu0 %v426
        %4500 = vmatprep.subr.mxu0 0.0
        %4501 = vmatpush1.msra.mxu0 %v427
        %4502 = vmatprep.subr.mxu0 0.0
        %4503 = vmatpush1.msra.mxu0 %v428
        %4504 = vmatprep.subr.mxu0 0.0
        %4505 = vmatpush1.msra.mxu0 %v429
        %4506 = vmatprep.subr.mxu0 0.0
        %4507 = vmatpush1.msra.mxu0 0.0
        %4508 = vmatprep.subr.mxu0 0.0
        %4509 = vmatpush1.msra.mxu0 0.0
        %4510 = vmatprep.subr.mxu0 0.0
        %4511 = vmatpush1.msra.mxu0 0.0
        %4512 = vmatprep.subr.mxu0 0.0
        %4513 = vmatpush1.msra.mxu0 0.0
        %4514 = vmatprep.subr.mxu0 0.0
        %4515 = vmatpush1.msra.mxu0 0.0
        %4516 = vmatprep.subr.mxu0 0.0
        %4517 = vmatpush1.msra.mxu0 0.0
        %4518 = vmatprep.subr.mxu0 0.0
        %4519 = vmatpush1.msra.mxu0 0.0
        %4520 = vmatprep.subr.mxu0 0.0
        %4521 = vmatpush1.msra.mxu0 0.0
        %4522 = vmatprep.subr.mxu0 0.0
        %4523 = vmatpush1.msra.mxu0 0.0
        %4524 = vmatprep.subr.mxu0 0.0
        %4525 = vmatpush1.msra.mxu0 0.0
        %4526 = vmatprep.subr.mxu0 0.0
        %4527 = vmatpush1.msra.mxu0 0.0
        %4528 = vmatprep.subr.mxu0 0.0
        %4529 = vmatpush1.msra.mxu0 0.0
        %4530 = vmatprep.subr.mxu0 0.0
        %4531 = vmatpush1.msra.mxu0 0.0
        %4532 = vmatprep.subr.mxu0 0.0
        %4533 = vmatpush1.msra.mxu0 0.0
        %4534 = vmatprep.subr.mxu0 0.0
        %4535 = vmatpush1.msra.mxu0 0.0
        %4536 = vmatprep.subr.mxu0 0.0
        %4537 = vmatpush1.msra.mxu0 0.0
        %4538 = vmatprep.subr.mxu0 0.0
        %4539 = vmatpush1.msra.mxu0 0.0
        %4540 = vmatprep.subr.mxu0 0.0
        %4541 = vmatpush1.msra.mxu0 0.0
        %4542 = vmatprep.subr.mxu0 0.0
        %4543 = vmatpush1.msra.mxu0 0.0
        %4544 = vmatprep.subr.mxu0 0.0
        %4545 = vmatpush1.msra.mxu0 0.0
        %4546 = vmatprep.subr.mxu0 0.0
        %4547 = vmatpush1.msra.mxu0 0.0
        %4548 = vmatprep.subr.mxu0 0.0
        %4549 = vmatpush1.msra.mxu0 0.0
        %4550 = vmatprep.subr.mxu0 0.0
        %4551 = vmatpush1.msra.mxu0 0.0
        %4552 = vmatprep.subr.mxu0 0.0
        %4553 = vmatpush1.msra.mxu0 0.0
        %4554 = vmatprep.subr.mxu0 0.0
        %4555 = vmatpush1.msra.mxu0 0.0
        %4556 = vmatprep.subr.mxu0 0.0
        %4557 = vmatpush1.msra.mxu0 0.0
        %4558 = vmatprep.subr.mxu0 0.0
        %4559 = vmatpush1.msra.mxu0 0.0
        %4560 = vmatprep.subr.mxu0 0.0
        %4561 = vmatpush1.msra.mxu0 0.0
        %4562 = vmatprep.mubr.f32.mxu0 0.0
        %4563 = vmatmul.mubr.f32.gmra.mrb[0].mxu0 %v4427
        %v4564 = vpop.f32.mrb[0].mxu0
        %v4565 = vadd.f32 0.0, %v4564
        %v4566 = vpop.f32.mrb[0].mxu0
        %4567 = vmatprep.mubr.f32.mxu0 0.0
        %4568 = vmatmul.mubr.f32.gmra.mrb[0].mxu0 %v4430
        %v4569 = vpop.f32.mrb[0].mxu0
        %v4570 = vadd.f32 0.0, %v4569
        %v4571 = vpop.f32.mrb[0].mxu0
        %4572 = vmatprep.mubr.f32.mxu0 0.0
        %4573 = vmatmul.mubr.f32.gmra.mrb[0].mxu0 %v4433
        %v4574 = vpop.f32.mrb[0].mxu0
        %v4575 = vadd.f32 0.0, %v4574
        %v4576 = vpop.f32.mrb[0].mxu0
        %4577 = vmatprep.mubr.f32.mxu0 0.0
        %4578 = vmatmul.mubr.f32.gmra.mrb[0].mxu0 %v4436
        %v4579 = vpop.f32.mrb[0].mxu0
        %v4580 = vadd.f32 0.0, %v4579
        %v4581 = vpop.f32.mrb[0].mxu0
        %4582 = vmatprep.mubr.f32.mxu0 0.0
        %4583 = vmatmul.mubr.f32.gmra.mrb[0].mxu0 %v4439
        %v4584 = vpop.f32.mrb[0].mxu0
        %v4585 = vadd.f32 0.0, %v4584
        %v4586 = vpop.f32.mrb[0].mxu0
        %4587 = vmatprep.mubr.f32.mxu0 0.0
        %4588 = vmatmul.mubr.f32.gmra.mrb[0].mxu0 %v4442
        %v4589 = vpop.f32.mrb[0].mxu0
        %v4590 = vadd.f32 0.0, %v4589
        %v4591 = vpop.f32.mrb[0].mxu0
        %4592 = vmatprep.mubr.f32.mxu0 0.0
        %4593 = vmatmul.mubr.f32.gmra.mrb[0].mxu0 %v4445
        %v4594 = vpop.f32.mrb[0].mxu0
        %v4595 = vadd.f32 0.0, %v4594
        %v4596 = vpop.f32.mrb[0].mxu0
        %4597 = vmatprep.mubr.f32.mxu0 0.0
        %4598 = vmatmul.mubr.f32.gmra.mrb[0].mxu0 %v4448
        %v4599 = vpop.f32.mrb[0].mxu0
        %v4600 = vadd.f32 0.0, %v4599
        %v4601 = vpop.f32.mrb[0].mxu0
        %4602 = vmatprep.mubr.f32.mxu0 0.0
        %4603 = vmatmul.mubr.f32.gmra.mrb[0].mxu0 %v4451
        %v4604 = vpop.f32.mrb[0].mxu0
        %v4605 = vadd.f32 0.0, %v4604
        %v4606 = vpop.f32.mrb[0].mxu0
        %4607 = vmatprep.mubr.f32.mxu0 0.0
        %4608 = vmatmul.mubr.f32.gmra.mrb[0].mxu0 %v4454
        %v4609 = vpop.f32.mrb[0].mxu0
        %v4610 = vadd.f32 0.0, %v4609
        %v4611 = vpop.f32.mrb[0].mxu0
        %4612 = vmatprep.mubr.f32.mxu0 0.0
        %4613 = vmatmul.mubr.f32.gmra.mrb[0].mxu0 %v4457
        %v4614 = vpop.f32.mrb[0].mxu0
        %v4615 = vadd.f32 0.0, %v4614
        %v4616 = vpop.f32.mrb[0].mxu0
        %4617 = vmatprep.mubr.f32.mxu0 0.0
        %4618 = vmatmul.mubr.f32.gmra.mrb[0].mxu0 %v4460
        %v4619 = vpop.f32.mrb[0].mxu0
        %v4620 = vadd.f32 0.0, %v4619
        %v4621 = vpop.f32.mrb[0].mxu0
        %4622 = vmatprep.mubr.f32.mxu0 0.0
        %4623 = vmatmul.mubr.f32.gmra.mrb[0].mxu0 %v4463
        %v4624 = vpop.f32.mrb[0].mxu0
        %v4625 = vadd.f32 0.0, %v4624
        %v4626 = vpop.f32.mrb[0].mxu0
        %4627 = vmatprep.mubr.f32.mxu0 0.0
        %4628 = vmatmul.mubr.f32.gmra.mrb[0].mxu0 %v4466
        %v4629 = vpop.f32.mrb[0].mxu0
        %v4630 = vadd.f32 0.0, %v4629
        %v4631 = vpop.f32.mrb[0].mxu0
        %4632 = vmatprep.mubr.f32.mxu0 0.0
        %4633 = vmatmul.mubr.f32.gmra.mrb[0].mxu0 %v4469
        %v4634 = vpop.f32.mrb[0].mxu0
        %v4635 = vadd.f32 0.0, %v4634
        %v4636 = vpop.f32.mrb[0].mxu0
        %4637 = vmatprep.mubr.f32.mxu0 0.0
        %4638 = vmatmul.mubr.f32.gmra.mrb[0].mxu0 %v4472
        %v4639 = vpop.f32.mrb[0].mxu0
        %v4640 = vadd.f32 0.0, %v4639
        %v4641 = vpop.f32.mrb[0].mxu0
        %4642 = vmatprep.mubr.f32.mxu0 0.0
        %4643 = vmatmul.mubr.f32.gmra.mrb[0].mxu0 %v4475
        %v4644 = vpop.f32.mrb[0].mxu0
        %v4645 = vadd.f32 0.0, %v4644
        %v4646 = vpop.f32.mrb[0].mxu0
        %4647 = vmatprep.mubr.f32.mxu0 0.0
        %4648 = vmatmul.mubr.f32.gmra.mrb[0].mxu0 %v4478
        %v4649 = vpop.f32.mrb[0].mxu0
        %v4650 = vadd.f32 0.0, %v4649
        %v4651 = vpop.f32.mrb[0].mxu0
        %4652 = vmatprep.mubr.f32.mxu0 0.0
        %4653 = vmatmul.mubr.f32.gmra.mrb[0].mxu0 %v4481
        %v4654 = vpop.f32.mrb[0].mxu0
        %v4655 = vadd.f32 0.0, %v4654
        %v4656 = vpop.f32.mrb[0].mxu0
        %4657 = vmatprep.mubr.f32.mxu0 0.0
        %4658 = vmatmul.mubr.f32.gmra.mrb[0].mxu0 %v4484
        %v4659 = vpop.f32.mrb[0].mxu0
        %v4660 = vadd.f32 0.0, %v4659
        %v4661 = vpop.f32.mrb[0].mxu0
        %4662 = vmatprep.mubr.f32.mxu0 0.0
        %4663 = vmatmul.mubr.f32.gmra.mrb[0].mxu0 %v4487
        %v4664 = vpop.f32.mrb[0].mxu0
        %v4665 = vadd.f32 0.0, %v4664
        %v4666 = vpop.f32.mrb[0].mxu0
        %4667 = vmatprep.mubr.f32.mxu0 0.0
        %4668 = vmatmul.mubr.f32.gmra.mrb[0].mxu0 %v4490
        %v4669 = vpop.f32.mrb[0].mxu0
        %v4670 = vadd.f32 0.0, %v4669
        %v4671 = vpop.f32.mrb[0].mxu0
        %4672 = vmatprep.mubr.f32.mxu0 0.0
        %4673 = vmatmul.mubr.f32.gmra.mrb[0].mxu0 %v4493
        %v4674 = vpop.f32.mrb[0].mxu0
        %v4675 = vadd.f32 0.0, %v4674
        %v4676 = vpop.f32.mrb[0].mxu0
        %4677 = vmatprep.mubr.f32.mxu0 0.0
        %4678 = vmatmul.mubr.f32.gmra.mrb[0].mxu0 %v4496
        %v4679 = vpop.f32.mrb[0].mxu0
        %v4680 = vadd.f32 0.0, %v4679
        %v4681 = vpop.f32.mrb[0].mxu0
        %4682 = vdwg.mxu0
        %v4683 = vadd.f32 %v4378, %v4565
        %v4684 = vadd.f32 %v4379, %v4570
        %v4685 = vadd.f32 %v4380, %v4575
        %v4686 = vadd.f32 %v4381, %v4580
        %v4687 = vadd.f32 %v4382, %v4585
        %v4688 = vadd.f32 %v4383, %v4590
        %v4689 = vadd.f32 %v4384, %v4595
        %v4690 = vadd.f32 %v4385, %v4600
        %v4691 = vadd.f32 %v4386, %v4605
        %v4692 = vadd.f32 %v4387, %v4610
        %v4693 = vadd.f32 %v4388, %v4615
        %v4694 = vadd.f32 %v4389, %v4620
        %v4695 = vadd.f32 %v4390, %v4625
        %v4696 = vadd.f32 %v4391, %v4630
        %v4697 = vadd.f32 %v4392, %v4635
        %v4698 = vadd.f32 %v4393, %v4640
        %v4699 = vadd.f32 %v4394, %v4645
        %v4700 = vadd.f32 %v4395, %v4650
        %v4701 = vadd.f32 %v4396, %v4655
        %v4702 = vadd.f32 %v4397, %v4660
        %v4703 = vadd.f32 %v4398, %v4665
        %v4704 = vadd.f32 %v4399, %v4670
        %v4705 = vadd.f32 %v4400, %v4675
        %v4706 = vadd.f32 %v4401, %v4680
        %v4707 = vld [vmem:[#allocation2 + $0x49] sm:$0xff]
        %v4708 = vld [vmem:[#allocation2 + $0x51] sm:$0xff]
        %v4709 = vld [vmem:[#allocation2 + $0x59] sm:$0xff]
        %v4710 = vld [vmem:[#allocation2 + $0x61] sm:$0xff]
        %v4711 = vld [vmem:[#allocation2 + $0x69] sm:$0xff]
        %v4712 = vld [vmem:[#allocation2 + $0x71] sm:$0xff]
        %v4713 = vld [vmem:[#allocation2 + $0x79] sm:$0xff]
        %v4714 = vld [vmem:[#allocation2 + $0x81] sm:$0xff]
        %v4715 = vld [vmem:[#allocation2 + $0x89] sm:$0xff]
        %v4716 = vld [vmem:[#allocation2 + $0x91] sm:$0xff]
        %v4717 = vld [vmem:[#allocation2 + $0x99] sm:$0xff]
        %v4718 = vld [vmem:[#allocation2 + $0xa1] sm:$0xff]
        %v4719 = vld [vmem:[#allocation2 + $0xa9] sm:$0xff]
        %v4720 = vld [vmem:[#allocation2 + $0xb1] sm:$0xff]
        %v4721 = vld [vmem:[#allocation2 + $0xb9] sm:$0xff]
        %v4722 = vld [vmem:[#allocation2 + $0xc1] sm:$0xff]
        %v4723 = vld [vmem:[#allocation2 + $0xc9] sm:$0xff]
        %v4724 = vld [vmem:[#allocation2 + $0xd1] sm:$0xff]
        %v4725 = vld [vmem:[#allocation2 + $0xd9] sm:$0xff]
        %v4726 = vld [vmem:[#allocation2 + $0xe1] sm:$0xff]
        %v4727 = vld [vmem:[#allocation2 + $0xe9] sm:$0xff]
        %v4728 = vld [vmem:[#allocation2 + $0xf1] sm:$0xff]
        %v4729 = vld [vmem:[#allocation2 + $0xf9] sm:$0xff]
        %v4730 = vld [vmem:[#allocation2 + $0x101] sm:$0xff]
        %v4732 = vsel %vm2261, %v4707, 0
        %v4735 = vsel %vm2261, %v4708, 0
        %v4738 = vsel %vm2261, %v4709, 0
        %v4741 = vsel %vm2261, %v4710, 0
        %v4744 = vsel %vm2261, %v4711, 0
        %v4747 = vsel %vm2261, %v4712, 0
        %v4750 = vsel %vm2261, %v4713, 0
        %v4753 = vsel %vm2261, %v4714, 0
        %v4756 = vsel %vm2261, %v4715, 0
        %v4759 = vsel %vm2261, %v4716, 0
        %v4762 = vsel %vm2261, %v4717, 0
        %v4765 = vsel %vm2261, %v4718, 0
        %v4768 = vsel %vm2261, %v4719, 0
        %v4771 = vsel %vm2261, %v4720, 0
        %v4774 = vsel %vm2261, %v4721, 0
        %v4777 = vsel %vm2261, %v4722, 0
        %v4780 = vsel %vm2261, %v4723, 0
        %v4783 = vsel %vm2261, %v4724, 0
        %v4786 = vsel %vm2261, %v4725, 0
        %v4789 = vsel %vm2261, %v4726, 0
        %v4792 = vsel %vm2261, %v4727, 0
        %v4795 = vsel %vm2261, %v4728, 0
        %v4798 = vsel %vm2261, %v4729, 0
        %v4801 = vsel %vm2261, %v4730, 0
        %4803 = vmatprep.subr.mxu0 0.0
        %4804 = vmatpush1.msra.mxu0 %v430
        %4805 = vmatprep.subr.mxu0 0.0
        %4806 = vmatpush1.msra.mxu0 %v431
        %4807 = vmatprep.subr.mxu0 0.0
        %4808 = vmatpush1.msra.mxu0 %v432
        %4809 = vmatprep.subr.mxu0 0.0
        %4810 = vmatpush1.msra.mxu0 %v433
        %4811 = vmatprep.subr.mxu0 0.0
        %4812 = vmatpush1.msra.mxu0 0.0
        %4813 = vmatprep.subr.mxu0 0.0
        %4814 = vmatpush1.msra.mxu0 0.0
        %4815 = vmatprep.subr.mxu0 0.0
        %4816 = vmatpush1.msra.mxu0 0.0
        %4817 = vmatprep.subr.mxu0 0.0
        %4818 = vmatpush1.msra.mxu0 0.0
        %4819 = vmatprep.subr.mxu0 0.0
        %4820 = vmatpush1.msra.mxu0 0.0
        %4821 = vmatprep.subr.mxu0 0.0
        %4822 = vmatpush1.msra.mxu0 0.0
        %4823 = vmatprep.subr.mxu0 0.0
        %4824 = vmatpush1.msra.mxu0 0.0
        %4825 = vmatprep.subr.mxu0 0.0
        %4826 = vmatpush1.msra.mxu0 0.0
        %4827 = vmatprep.subr.mxu0 0.0
        %4828 = vmatpush1.msra.mxu0 0.0
        %4829 = vmatprep.subr.mxu0 0.0
        %4830 = vmatpush1.msra.mxu0 0.0
        %4831 = vmatprep.subr.mxu0 0.0
        %4832 = vmatpush1.msra.mxu0 0.0
        %4833 = vmatprep.subr.mxu0 0.0
        %4834 = vmatpush1.msra.mxu0 0.0
        %4835 = vmatprep.subr.mxu0 0.0
        %4836 = vmatpush1.msra.mxu0 0.0
        %4837 = vmatprep.subr.mxu0 0.0
        %4838 = vmatpush1.msra.mxu0 0.0
        %4839 = vmatprep.subr.mxu0 0.0
        %4840 = vmatpush1.msra.mxu0 0.0
        %4841 = vmatprep.subr.mxu0 0.0
        %4842 = vmatpush1.msra.mxu0 0.0
        %4843 = vmatprep.subr.mxu0 0.0
        %4844 = vmatpush1.msra.mxu0 0.0
        %4845 = vmatprep.subr.mxu0 0.0
        %4846 = vmatpush1.msra.mxu0 0.0
        %4847 = vmatprep.subr.mxu0 0.0
        %4848 = vmatpush1.msra.mxu0 0.0
        %4849 = vmatprep.subr.mxu0 0.0
        %4850 = vmatpush1.msra.mxu0 0.0
        %4851 = vmatprep.subr.mxu0 0.0
        %4852 = vmatpush1.msra.mxu0 0.0
        %4853 = vmatprep.subr.mxu0 0.0
        %4854 = vmatpush1.msra.mxu0 0.0
        %4855 = vmatprep.subr.mxu0 0.0
        %4856 = vmatpush1.msra.mxu0 0.0
        %4857 = vmatprep.subr.mxu0 0.0
        %4858 = vmatpush1.msra.mxu0 0.0
        %4859 = vmatprep.subr.mxu0 0.0
        %4860 = vmatpush1.msra.mxu0 0.0
        %4861 = vmatprep.subr.mxu0 0.0
        %4862 = vmatpush1.msra.mxu0 0.0
        %4863 = vmatprep.subr.mxu0 0.0
        %4864 = vmatpush1.msra.mxu0 0.0
        %4865 = vmatprep.subr.mxu0 0.0
        %4866 = vmatpush1.msra.mxu0 0.0
        %4867 = vmatprep.mubr.f32.mxu0 0.0
        %4868 = vmatmul.mubr.f32.gmra.mrb[0].mxu0 %v4732
        %v4869 = vpop.f32.mrb[0].mxu0
        %v4870 = vadd.f32 0.0, %v4869
        %v4871 = vpop.f32.mrb[0].mxu0
        %4872 = vmatprep.mubr.f32.mxu0 0.0
        %4873 = vmatmul.mubr.f32.gmra.mrb[0].mxu0 %v4735
        %v4874 = vpop.f32.mrb[0].mxu0
        %v4875 = vadd.f32 0.0, %v4874
        %v4876 = vpop.f32.mrb[0].mxu0
        %4877 = vmatprep.mubr.f32.mxu0 0.0
        %4878 = vmatmul.mubr.f32.gmra.mrb[0].mxu0 %v4738
        %v4879 = vpop.f32.mrb[0].mxu0
        %v4880 = vadd.f32 0.0, %v4879
        %v4881 = vpop.f32.mrb[0].mxu0
        %4882 = vmatprep.mubr.f32.mxu0 0.0
        %4883 = vmatmul.mubr.f32.gmra.mrb[0].mxu0 %v4741
        %v4884 = vpop.f32.mrb[0].mxu0
        %v4885 = vadd.f32 0.0, %v4884
        %v4886 = vpop.f32.mrb[0].mxu0
        %4887 = vmatprep.mubr.f32.mxu0 0.0
        %4888 = vmatmul.mubr.f32.gmra.mrb[0].mxu0 %v4744
        %v4889 = vpop.f32.mrb[0].mxu0
        %v4890 = vadd.f32 0.0, %v4889
        %v4891 = vpop.f32.mrb[0].mxu0
        %4892 = vmatprep.mubr.f32.mxu0 0.0
        %4893 = vmatmul.mubr.f32.gmra.mrb[0].mxu0 %v4747
        %v4894 = vpop.f32.mrb[0].mxu0
        %v4895 = vadd.f32 0.0, %v4894
        %v4896 = vpop.f32.mrb[0].mxu0
        %4897 = vmatprep.mubr.f32.mxu0 0.0
        %4898 = vmatmul.mubr.f32.gmra.mrb[0].mxu0 %v4750
        %v4899 = vpop.f32.mrb[0].mxu0
        %v4900 = vadd.f32 0.0, %v4899
        %v4901 = vpop.f32.mrb[0].mxu0
        %4902 = vmatprep.mubr.f32.mxu0 0.0
        %4903 = vmatmul.mubr.f32.gmra.mrb[0].mxu0 %v4753
        %v4904 = vpop.f32.mrb[0].mxu0
        %v4905 = vadd.f32 0.0, %v4904
        %v4906 = vpop.f32.mrb[0].mxu0
        %4907 = vmatprep.mubr.f32.mxu0 0.0
        %4908 = vmatmul.mubr.f32.gmra.mrb[0].mxu0 %v4756
        %v4909 = vpop.f32.mrb[0].mxu0
        %v4910 = vadd.f32 0.0, %v4909
        %v4911 = vpop.f32.mrb[0].mxu0
        %4912 = vmatprep.mubr.f32.mxu0 0.0
        %4913 = vmatmul.mubr.f32.gmra.mrb[0].mxu0 %v4759
        %v4914 = vpop.f32.mrb[0].mxu0
        %v4915 = vadd.f32 0.0, %v4914
        %v4916 = vpop.f32.mrb[0].mxu0
        %4917 = vmatprep.mubr.f32.mxu0 0.0
        %4918 = vmatmul.mubr.f32.gmra.mrb[0].mxu0 %v4762
        %v4919 = vpop.f32.mrb[0].mxu0
        %v4920 = vadd.f32 0.0, %v4919
        %v4921 = vpop.f32.mrb[0].mxu0
        %4922 = vmatprep.mubr.f32.mxu0 0.0
        %4923 = vmatmul.mubr.f32.gmra.mrb[0].mxu0 %v4765
        %v4924 = vpop.f32.mrb[0].mxu0
        %v4925 = vadd.f32 0.0, %v4924
        %v4926 = vpop.f32.mrb[0].mxu0
        %4927 = vmatprep.mubr.f32.mxu0 0.0
        %4928 = vmatmul.mubr.f32.gmra.mrb[0].mxu0 %v4768
        %v4929 = vpop.f32.mrb[0].mxu0
        %v4930 = vadd.f32 0.0, %v4929
        %v4931 = vpop.f32.mrb[0].mxu0
        %4932 = vmatprep.mubr.f32.mxu0 0.0
        %4933 = vmatmul.mubr.f32.gmra.mrb[0].mxu0 %v4771
        %v4934 = vpop.f32.mrb[0].mxu0
        %v4935 = vadd.f32 0.0, %v4934
        %v4936 = vpop.f32.mrb[0].mxu0
        %4937 = vmatprep.mubr.f32.mxu0 0.0
        %4938 = vmatmul.mubr.f32.gmra.mrb[0].mxu0 %v4774
        %v4939 = vpop.f32.mrb[0].mxu0
        %v4940 = vadd.f32 0.0, %v4939
        %v4941 = vpop.f32.mrb[0].mxu0
        %4942 = vmatprep.mubr.f32.mxu0 0.0
        %4943 = vmatmul.mubr.f32.gmra.mrb[0].mxu0 %v4777
        %v4944 = vpop.f32.mrb[0].mxu0
        %v4945 = vadd.f32 0.0, %v4944
        %v4946 = vpop.f32.mrb[0].mxu0
        %4947 = vmatprep.mubr.f32.mxu0 0.0
        %4948 = vmatmul.mubr.f32.gmra.mrb[0].mxu0 %v4780
        %v4949 = vpop.f32.mrb[0].mxu0
        %v4950 = vadd.f32 0.0, %v4949
        %v4951 = vpop.f32.mrb[0].mxu0
        %4952 = vmatprep.mubr.f32.mxu0 0.0
        %4953 = vmatmul.mubr.f32.gmra.mrb[0].mxu0 %v4783
        %v4954 = vpop.f32.mrb[0].mxu0
        %v4955 = vadd.f32 0.0, %v4954
        %v4956 = vpop.f32.mrb[0].mxu0
        %4957 = vmatprep.mubr.f32.mxu0 0.0
        %4958 = vmatmul.mubr.f32.gmra.mrb[0].mxu0 %v4786
        %v4959 = vpop.f32.mrb[0].mxu0
        %v4960 = vadd.f32 0.0, %v4959
        %v4961 = vpop.f32.mrb[0].mxu0
        %4962 = vmatprep.mubr.f32.mxu0 0.0
        %4963 = vmatmul.mubr.f32.gmra.mrb[0].mxu0 %v4789
        %v4964 = vpop.f32.mrb[0].mxu0
        %v4965 = vadd.f32 0.0, %v4964
        %v4966 = vpop.f32.mrb[0].mxu0
        %4967 = vmatprep.mubr.f32.mxu0 0.0
        %4968 = vmatmul.mubr.f32.gmra.mrb[0].mxu0 %v4792
        %v4969 = vpop.f32.mrb[0].mxu0
        %v4970 = vadd.f32 0.0, %v4969
        %v4971 = vpop.f32.mrb[0].mxu0
        %4972 = vmatprep.mubr.f32.mxu0 0.0
        %4973 = vmatmul.mubr.f32.gmra.mrb[0].mxu0 %v4795
        %v4974 = vpop.f32.mrb[0].mxu0
        %v4975 = vadd.f32 0.0, %v4974
        %v4976 = vpop.f32.mrb[0].mxu0
        %4977 = vmatprep.mubr.f32.mxu0 0.0
        %4978 = vmatmul.mubr.f32.gmra.mrb[0].mxu0 %v4798
        %v4979 = vpop.f32.mrb[0].mxu0
        %v4980 = vadd.f32 0.0, %v4979
        %v4981 = vpop.f32.mrb[0].mxu0
        %4982 = vmatprep.mubr.f32.mxu0 0.0
        %4983 = vmatmul.mubr.f32.gmra.mrb[0].mxu0 %v4801
        %v4984 = vpop.f32.mrb[0].mxu0
        %v4985 = vadd.f32 0.0, %v4984
        %v4986 = vpop.f32.mrb[0].mxu0
        %4987 = vdwg.mxu0
        %v4988 = vadd.f32 %v4683, %v4870
        %v4989 = vadd.f32 %v4684, %v4875
        %v4990 = vadd.f32 %v4685, %v4880
        %v4991 = vadd.f32 %v4686, %v4885
        %v4992 = vadd.f32 %v4687, %v4890
        %v4993 = vadd.f32 %v4688, %v4895
        %v4994 = vadd.f32 %v4689, %v4900
        %v4995 = vadd.f32 %v4690, %v4905
        %v4996 = vadd.f32 %v4691, %v4910
        %v4997 = vadd.f32 %v4692, %v4915
        %v4998 = vadd.f32 %v4693, %v4920
        %v4999 = vadd.f32 %v4694, %v4925
        %v5000 = vadd.f32 %v4695, %v4930
        %v5001 = vadd.f32 %v4696, %v4935
        %v5002 = vadd.f32 %v4697, %v4940
        %v5003 = vadd.f32 %v4698, %v4945
        %v5004 = vadd.f32 %v4699, %v4950
        %v5005 = vadd.f32 %v4700, %v4955
        %v5006 = vadd.f32 %v4701, %v4960
        %v5007 = vadd.f32 %v4702, %v4965
        %v5008 = vadd.f32 %v4703, %v4970
        %v5009 = vadd.f32 %v4704, %v4975
        %v5010 = vadd.f32 %v4705, %v4980
        %v5011 = vadd.f32 %v4706, %v4985
        %v5013 = vlaneseq
        %v5014 = vshrl.u32 %v5013, 7
        %v5015 = vsub.s32 0, %v5014
        %v5016 = vrot.slane %v439, %v5015
        %v5018 = vadd.f32 %v4988, %v5016
        %v5019 = vadd.f32 %v4989, %v5016
        %v5020 = vadd.f32 %v4990, %v5016
        %v5021 = vadd.f32 %v4991, %v5016
        %v5022 = vadd.f32 %v4992, %v5016
        %v5023 = vadd.f32 %v4993, %v5016
        %v5024 = vadd.f32 %v4994, %v5016
        %v5025 = vadd.f32 %v4995, %v5016
        %v5026 = vadd.f32 %v4996, %v5016
        %v5027 = vadd.f32 %v4997, %v5016
        %v5028 = vadd.f32 %v4998, %v5016
        %v5029 = vadd.f32 %v4999, %v5016
        %v5030 = vadd.f32 %v5000, %v5016
        %v5031 = vadd.f32 %v5001, %v5016
        %v5032 = vadd.f32 %v5002, %v5016
        %v5033 = vadd.f32 %v5003, %v5016
        %v5034 = vadd.f32 %v5004, %v5016
        %v5035 = vadd.f32 %v5005, %v5016
        %v5036 = vadd.f32 %v5006, %v5016
        %v5037 = vadd.f32 %v5007, %v5016
        %v5038 = vadd.f32 %v5008, %v5016
        %v5039 = vadd.f32 %v5009, %v5016
        %v5040 = vadd.f32 %v5010, %v5016
        %v5041 = vadd.f32 %v5011, %v5016
        %v5042 = vmax.f32 %v5018, 0.0
        %v5043 = vmax.f32 %v5019, 0.0
        %v5044 = vmax.f32 %v5020, 0.0
        %v5045 = vmax.f32 %v5021, 0.0
        %v5046 = vmax.f32 %v5022, 0.0
        %v5047 = vmax.f32 %v5023, 0.0
        %v5048 = vmax.f32 %v5024, 0.0
        %v5049 = vmax.f32 %v5025, 0.0
        %v5050 = vmax.f32 %v5026, 0.0
        %v5051 = vmax.f32 %v5027, 0.0
        %v5052 = vmax.f32 %v5028, 0.0
        %v5053 = vmax.f32 %v5029, 0.0
        %v5054 = vmax.f32 %v5030, 0.0
        %v5055 = vmax.f32 %v5031, 0.0
        %v5056 = vmax.f32 %v5032, 0.0
        %v5057 = vmax.f32 %v5033, 0.0
        %v5058 = vmax.f32 %v5034, 0.0
        %v5059 = vmax.f32 %v5035, 0.0
        %v5060 = vmax.f32 %v5036, 0.0
        %v5061 = vmax.f32 %v5037, 0.0
        %v5062 = vmax.f32 %v5038, 0.0
        %v5063 = vmax.f32 %v5039, 0.0
        %v5064 = vmax.f32 %v5040, 0.0
        %v5065 = vmax.f32 %v5041, 0.0
        %v5067 = vlaneseq
        %v5068 = vshrl.u32 %v5067, 7
        %v5069 = vsub.s32 0, %v5068
        %v5070 = vrot.slane %v440, %v5069
        %v5073 = vsel %vm2261, %v5042, 0
        %v5076 = vsel %vm2261, %v5043, 0
        %v5079 = vsel %vm2261, %v5044, 0
        %v5082 = vsel %vm2261, %v5045, 0
        %v5085 = vsel %vm2261, %v5046, 0
        %v5088 = vsel %vm2261, %v5047, 0
        %v5091 = vsel %vm2261, %v5048, 0
        %v5094 = vsel %vm2261, %v5049, 0
        %v5097 = vsel %vm2261, %v5050, 0
        %v5100 = vsel %vm2261, %v5051, 0
        %v5103 = vsel %vm2261, %v5052, 0
        %v5106 = vsel %vm2261, %v5053, 0
        %v5109 = vsel %vm2261, %v5054, 0
        %v5112 = vsel %vm2261, %v5055, 0
        %v5115 = vsel %vm2261, %v5056, 0
        %v5118 = vsel %vm2261, %v5057, 0
        %v5121 = vsel %vm2261, %v5058, 0
        %v5124 = vsel %vm2261, %v5059, 0
        %v5127 = vsel %vm2261, %v5060, 0
        %v5130 = vsel %vm2261, %v5061, 0
        %v5133 = vsel %vm2261, %v5062, 0
        %v5136 = vsel %vm2261, %v5063, 0
        %v5139 = vsel %vm2261, %v5064, 0
        %v5142 = vsel %vm2261, %v5065, 0
        %5144 = vmatprep.subr.mxu0 0.0
        %5145 = vmatpush1.msra.mxu0 %v434
        %5146 = vmatprep.subr.mxu0 0.0
        %5147 = vmatpush1.msra.mxu0 %v435
        %5148 = vmatprep.subr.mxu0 0.0
        %5149 = vmatpush1.msra.mxu0 %v436
        %5150 = vmatprep.subr.mxu0 0.0
        %5151 = vmatpush1.msra.mxu0 %v437
        %5152 = vmatprep.subr.mxu0 0.0
        %5153 = vmatpush1.msra.mxu0 0.0
        %5154 = vmatprep.subr.mxu0 0.0
        %5155 = vmatpush1.msra.mxu0 0.0
        %5156 = vmatprep.subr.mxu0 0.0
        %5157 = vmatpush1.msra.mxu0 0.0
        %5158 = vmatprep.subr.mxu0 0.0
        %5159 = vmatpush1.msra.mxu0 0.0
        %5160 = vmatprep.subr.mxu0 0.0
        %5161 = vmatpush1.msra.mxu0 0.0
        %5162 = vmatprep.subr.mxu0 0.0
        %5163 = vmatpush1.msra.mxu0 0.0
        %5164 = vmatprep.subr.mxu0 0.0
        %5165 = vmatpush1.msra.mxu0 0.0
        %5166 = vmatprep.subr.mxu0 0.0
        %5167 = vmatpush1.msra.mxu0 0.0
        %5168 = vmatprep.subr.mxu0 0.0
        %5169 = vmatpush1.msra.mxu0 0.0
        %5170 = vmatprep.subr.mxu0 0.0
        %5171 = vmatpush1.msra.mxu0 0.0
        %5172 = vmatprep.subr.mxu0 0.0
        %5173 = vmatpush1.msra.mxu0 0.0
        %5174 = vmatprep.subr.mxu0 0.0
        %5175 = vmatpush1.msra.mxu0 0.0
        %5176 = vmatprep.subr.mxu0 0.0
        %5177 = vmatpush1.msra.mxu0 0.0
        %5178 = vmatprep.subr.mxu0 0.0
        %5179 = vmatpush1.msra.mxu0 0.0
        %5180 = vmatprep.subr.mxu0 0.0
        %5181 = vmatpush1.msra.mxu0 0.0
        %5182 = vmatprep.subr.mxu0 0.0
        %5183 = vmatpush1.msra.mxu0 0.0
        %5184 = vmatprep.subr.mxu0 0.0
        %5185 = vmatpush1.msra.mxu0 0.0
        %5186 = vmatprep.subr.mxu0 0.0
        %5187 = vmatpush1.msra.mxu0 0.0
        %5188 = vmatprep.subr.mxu0 0.0
        %5189 = vmatpush1.msra.mxu0 0.0
        %5190 = vmatprep.subr.mxu0 0.0
        %5191 = vmatpush1.msra.mxu0 0.0
        %5192 = vmatprep.subr.mxu0 0.0
        %5193 = vmatpush1.msra.mxu0 0.0
        %5194 = vmatprep.subr.mxu0 0.0
        %5195 = vmatpush1.msra.mxu0 0.0
        %5196 = vmatprep.subr.mxu0 0.0
        %5197 = vmatpush1.msra.mxu0 0.0
        %5198 = vmatprep.subr.mxu0 0.0
        %5199 = vmatpush1.msra.mxu0 0.0
        %5200 = vmatprep.subr.mxu0 0.0
        %5201 = vmatpush1.msra.mxu0 0.0
        %5202 = vmatprep.subr.mxu0 0.0
        %5203 = vmatpush1.msra.mxu0 0.0
        %5204 = vmatprep.subr.mxu0 0.0
        %5205 = vmatpush1.msra.mxu0 0.0
        %5206 = vmatprep.subr.mxu0 0.0
        %5207 = vmatpush1.msra.mxu0 0.0
        %5208 = vmatprep.mubr.f32.mxu0 0.0
        %5209 = vmatmul.mubr.f32.gmra.mrb[0].mxu0 %v5073
        %v5210 = vpop.f32.mrb[0].mxu0
        %v5211 = vadd.f32 %v5070, %v5210
        %v5212 = vpop.f32.mrb[0].mxu0
        %5213 = vmatprep.mubr.f32.mxu0 0.0
        %5214 = vmatmul.mubr.f32.gmra.mrb[0].mxu0 %v5076
        %v5215 = vpop.f32.mrb[0].mxu0
        %v5216 = vadd.f32 %v5070, %v5215
        %v5217 = vpop.f32.mrb[0].mxu0
        %5218 = vmatprep.mubr.f32.mxu0 0.0
        %5219 = vmatmul.mubr.f32.gmra.mrb[0].mxu0 %v5079
        %v5220 = vpop.f32.mrb[0].mxu0
        %v5221 = vadd.f32 %v5070, %v5220
        %v5222 = vpop.f32.mrb[0].mxu0
        %5223 = vmatprep.mubr.f32.mxu0 0.0
        %5224 = vmatmul.mubr.f32.gmra.mrb[0].mxu0 %v5082
        %v5225 = vpop.f32.mrb[0].mxu0
        %v5226 = vadd.f32 %v5070, %v5225
        %v5227 = vpop.f32.mrb[0].mxu0
        %5228 = vmatprep.mubr.f32.mxu0 0.0
        %5229 = vmatmul.mubr.f32.gmra.mrb[0].mxu0 %v5085
        %v5230 = vpop.f32.mrb[0].mxu0
        %v5231 = vadd.f32 %v5070, %v5230
        %v5232 = vpop.f32.mrb[0].mxu0
        %5233 = vmatprep.mubr.f32.mxu0 0.0
        %5234 = vmatmul.mubr.f32.gmra.mrb[0].mxu0 %v5088
        %v5235 = vpop.f32.mrb[0].mxu0
        %v5236 = vadd.f32 %v5070, %v5235
        %v5237 = vpop.f32.mrb[0].mxu0
        %5238 = vmatprep.mubr.f32.mxu0 0.0
        %5239 = vmatmul.mubr.f32.gmra.mrb[0].mxu0 %v5091
        %v5240 = vpop.f32.mrb[0].mxu0
        %v5241 = vadd.f32 %v5070, %v5240
        %v5242 = vpop.f32.mrb[0].mxu0
        %5243 = vmatprep.mubr.f32.mxu0 0.0
        %5244 = vmatmul.mubr.f32.gmra.mrb[0].mxu0 %v5094
        %v5245 = vpop.f32.mrb[0].mxu0
        %v5246 = vadd.f32 %v5070, %v5245
        %v5247 = vpop.f32.mrb[0].mxu0
        %5248 = vmatprep.mubr.f32.mxu0 0.0
        %5249 = vmatmul.mubr.f32.gmra.mrb[0].mxu0 %v5097
        %v5250 = vpop.f32.mrb[0].mxu0
        %v5251 = vadd.f32 %v5070, %v5250
        %v5252 = vpop.f32.mrb[0].mxu0
        %5253 = vmatprep.mubr.f32.mxu0 0.0
        %5254 = vmatmul.mubr.f32.gmra.mrb[0].mxu0 %v5100
        %v5255 = vpop.f32.mrb[0].mxu0
        %v5256 = vadd.f32 %v5070, %v5255
        %v5257 = vpop.f32.mrb[0].mxu0
        %5258 = vmatprep.mubr.f32.mxu0 0.0
        %5259 = vmatmul.mubr.f32.gmra.mrb[0].mxu0 %v5103
        %v5260 = vpop.f32.mrb[0].mxu0
        %v5261 = vadd.f32 %v5070, %v5260
        %v5262 = vpop.f32.mrb[0].mxu0
        %5263 = vmatprep.mubr.f32.mxu0 0.0
        %5264 = vmatmul.mubr.f32.gmra.mrb[0].mxu0 %v5106
        %v5265 = vpop.f32.mrb[0].mxu0
        %v5266 = vadd.f32 %v5070, %v5265
        %v5267 = vpop.f32.mrb[0].mxu0
        %5268 = vmatprep.mubr.f32.mxu0 0.0
        %5269 = vmatmul.mubr.f32.gmra.mrb[0].mxu0 %v5109
        %v5270 = vpop.f32.mrb[0].mxu0
        %v5271 = vadd.f32 %v5070, %v5270
        %v5272 = vpop.f32.mrb[0].mxu0
        %5273 = vmatprep.mubr.f32.mxu0 0.0
        %5274 = vmatmul.mubr.f32.gmra.mrb[0].mxu0 %v5112
        %v5275 = vpop.f32.mrb[0].mxu0
        %v5276 = vadd.f32 %v5070, %v5275
        %v5277 = vpop.f32.mrb[0].mxu0
        %5278 = vmatprep.mubr.f32.mxu0 0.0
        %5279 = vmatmul.mubr.f32.gmra.mrb[0].mxu0 %v5115
        %v5280 = vpop.f32.mrb[0].mxu0
        %v5281 = vadd.f32 %v5070, %v5280
        %v5282 = vpop.f32.mrb[0].mxu0
        %5283 = vmatprep.mubr.f32.mxu0 0.0
        %5284 = vmatmul.mubr.f32.gmra.mrb[0].mxu0 %v5118
        %v5285 = vpop.f32.mrb[0].mxu0
        %v5286 = vadd.f32 %v5070, %v5285
        %v5287 = vpop.f32.mrb[0].mxu0
        %5288 = vmatprep.mubr.f32.mxu0 0.0
        %5289 = vmatmul.mubr.f32.gmra.mrb[0].mxu0 %v5121
        %v5290 = vpop.f32.mrb[0].mxu0
        %v5291 = vadd.f32 %v5070, %v5290
        %v5292 = vpop.f32.mrb[0].mxu0
        %5293 = vmatprep.mubr.f32.mxu0 0.0
        %5294 = vmatmul.mubr.f32.gmra.mrb[0].mxu0 %v5124
        %v5295 = vpop.f32.mrb[0].mxu0
        %v5296 = vadd.f32 %v5070, %v5295
        %v5297 = vpop.f32.mrb[0].mxu0
        %5298 = vmatprep.mubr.f32.mxu0 0.0
        %5299 = vmatmul.mubr.f32.gmra.mrb[0].mxu0 %v5127
        %v5300 = vpop.f32.mrb[0].mxu0
        %v5301 = vadd.f32 %v5070, %v5300
        %v5302 = vpop.f32.mrb[0].mxu0
        %5303 = vmatprep.mubr.f32.mxu0 0.0
        %5304 = vmatmul.mubr.f32.gmra.mrb[0].mxu0 %v5130
        %v5305 = vpop.f32.mrb[0].mxu0
        %v5306 = vadd.f32 %v5070, %v5305
        %v5307 = vpop.f32.mrb[0].mxu0
        %5308 = vmatprep.mubr.f32.mxu0 0.0
        %5309 = vmatmul.mubr.f32.gmra.mrb[0].mxu0 %v5133
        %v5310 = vpop.f32.mrb[0].mxu0
        %v5311 = vadd.f32 %v5070, %v5310
        %v5312 = vpop.f32.mrb[0].mxu0
        %5313 = vmatprep.mubr.f32.mxu0 0.0
        %5314 = vmatmul.mubr.f32.gmra.mrb[0].mxu0 %v5136
        %v5315 = vpop.f32.mrb[0].mxu0
        %v5316 = vadd.f32 %v5070, %v5315
        %v5317 = vpop.f32.mrb[0].mxu0
        %5318 = vmatprep.mubr.f32.mxu0 0.0
        %5319 = vmatmul.mubr.f32.gmra.mrb[0].mxu0 %v5139
        %v5320 = vpop.f32.mrb[0].mxu0
        %v5321 = vadd.f32 %v5070, %v5320
        %v5322 = vpop.f32.mrb[0].mxu0
        %5323 = vmatprep.mubr.f32.mxu0 0.0
        %5324 = vmatmul.mubr.f32.gmra.mrb[0].mxu0 %v5142
        %v5325 = vpop.f32.mrb[0].mxu0
        %v5326 = vadd.f32 %v5070, %v5325
        %v5327 = vpop.f32.mrb[0].mxu0
        %5328 = vdwg.mxu0
        %5329 = vst [vmem:[%s345] sm:$0xff] %v5211
        %5330 = vst [vmem:[%s345 + $0x8] sm:$0xff] %v5216
        %5331 = vst [vmem:[%s345 + $0x10] sm:$0xff] %v5221
        %5332 = vst [vmem:[%s345 + $0x18] sm:$0xff] %v5226
        %5333 = vst [vmem:[%s345 + $0x20] sm:$0xff] %v5231
        %5334 = vst [vmem:[%s345 + $0x28] sm:$0xff] %v5236
        %5335 = vst [vmem:[%s345 + $0x30] sm:$0xff] %v5241
        %5336 = vst [vmem:[%s345 + $0x38] sm:$0xff] %v5246
        %5337 = vst [vmem:[%s345 + $0x40] sm:$0xff] %v5251
        %5338 = vst [vmem:[%s345 + $0x48] sm:$0xff] %v5256
        %5339 = vst [vmem:[%s345 + $0x50] sm:$0xff] %v5261
        %5340 = vst [vmem:[%s345 + $0x58] sm:$0xff] %v5266
        %5341 = vst [vmem:[%s345 + $0x60] sm:$0xff] %v5271
        %5342 = vst [vmem:[%s345 + $0x68] sm:$0xff] %v5276
        %5343 = vst [vmem:[%s345 + $0x70] sm:$0xff] %v5281
        %5344 = vst [vmem:[%s345 + $0x78] sm:$0xff] %v5286
        %5345 = vst [vmem:[%s345 + $0x80] sm:$0xff] %v5291
        %5346 = vst [vmem:[%s345 + $0x88] sm:$0xff] %v5296
        %5347 = vst [vmem:[%s345 + $0x90] sm:$0xff] %v5301
        %5348 = vst [vmem:[%s345 + $0x98] sm:$0xff] %v5306
        %5349 = vst [vmem:[%s345 + $0xa0] sm:$0xff] %v5311
        %5350 = vst [vmem:[%s345 + $0xa8] sm:$0xff] %v5316
        %5351 = vst [vmem:[%s345 + $0xb0] sm:$0xff] %v5321
        %5352 = vst [vmem:[%s345 + $0xb8] sm:$0xff] %v5326
        %p5353 = scmp.lt.s32.totalorder %s21, 3
        %s5354 = scalar_select %p5353, %s21, 3
        %s5355 = smul.addr %s5354, 24
        %s5356 = smul.addr %s5355, 8
        %s5357 = scalar_lea.vmem %s8, %s5356
        // Predicated region
        $region73: #{upconv_forward.1} parent=51 // pred_check
          %p5358 = pneg %p212
        $region74: #{upconv_forward.1} parent=51 // pred_check_branch
          %5360 = sbr.rel (%p5358) target = $region76
        $region75: #{upconv_forward.1} parent=51 // pred_region
          _
        $region76: #{upconv_forward.1} parent=51 // pred_fallthru
          _
      $region52: #{upconv_forward.1} parent=5 // pred_fallthru
        _
      %p5361 = scmp.le.s32.totalorder 2, %s16
      // Predicated region
      $region77: #{upconv_forward.1} parent=5 // pred_check
        %p5362 = pneg %p5361
      $region78: #{upconv_forward.1} parent=5 // pred_check_branch
        %5364 = sbr.rel (%p5362) target = $region80
      $region79: #{upconv_forward.1} parent=5 // pred_region
        %s5365 = ssub.s32 %s16, 2
        // Predicated region
        $region81: #{upconv_forward.1} parent=79 // pred_check
          %p5366 = pneg %p218
        $region82: #{upconv_forward.1} parent=79 // pred_check_branch
          %5368 = sbr.rel (%p5366) target = $region84
        $region83: #{upconv_forward.1} parent=79 // pred_region
          %p5369 = scmp.lt.s32.totalorder %s22, 3
          %s5370 = scalar_select %p5369, %s22, 3
          %s5371 = smul.addr %s5370, 24
          %s5372 = smul.addr %s5371, 8
          %s5373 = scalar_lea.vmem %s8, %s5372
        $region84: #{upconv_forward.1} parent=79 // pred_fallthru
          _
      $region80: #{upconv_forward.1} parent=5 // pred_fallthru
        _
    $region6: #{upconv_forward.1} parent=1 // loop_footer
      %s20 = sadd.s32 1, %s16
    $region7: #{upconv_forward.1} parent=1 // loop_footer_branch
      %15 = sbr.rel target = $region3
    $region8: #{upconv_forward.1} parent=1 // loop_exit
      _
    %5374 = vsyncpa [#allocation4], 1
    %s5375 = scalar_lea.sflag [#allocation4], 1
    %5376 = vsyncpa %s5375, 1
    %5377 = vsyncpa [#allocation6], 1

</llo_original>
